<compile_context>
chip_gen: v5e
topology: v5e:2x2
jax: 0.10.0
libtpu: 0.0.40
codegen_flags: <defaults>
</compile_context>

<pallas_src>
import functools

import jax
import jax.numpy as jnp
from jax.experimental import pallas as pl
from jax.experimental.pallas import tpu as pltpu


# ----------------------------------------------------------------------------
# Pallas kernel: fused conv3x3 + BN affine + LeakyReLU(0.2) + residual add
# ----------------------------------------------------------------------------
def _res_blocka_kernel(xp_ref, w_ref, scale_ref, shift_ref, o_ref, acc_ref,
                       *, H, W, cin, cout, slope):
    # xp_ref:    (1, H+2, W+2, cin)  f32   zero-padded NHWC input (one image)
    # w_ref:     (9, cin, cout)      bf16  conv taps, tap t = kh*3 + kw (weight-norm folded)
    # scale_ref: (1, cout)           f32   BN scale = gamma / sqrt(var + eps)
    # shift_ref: (1, cout)           f32   BN shift with the conv bias folded in
    # o_ref:     (1, H, W, cout)     f32
    # acc_ref:   (H*W, cout)         f32   VMEM accumulator scratch
    acc_ref[...] = jnp.zeros_like(acc_ref)

    # 3x3 conv == 9 accumulating matmuls over shifted windows of the padded block.
    for kh in range(3):
        for kw in range(3):
            patch = xp_ref[0, kh:kh + H, kw:kw + W, :].reshape(H * W, cin)
            acc_ref[...] += jnp.dot(patch.astype(jnp.bfloat16),
                                    w_ref[kh * 3 + kw],
                                    preferred_element_type=jnp.float32)

    y = acc_ref[...] * scale_ref[...] + shift_ref[...]     # BN (+ folded conv bias)
    y = jnp.where(y >= 0, y, slope * y)                    # LeakyReLU(0.2)
    res = xp_ref[0, 1:1 + H, 1:1 + W, :].reshape(H * W, cin)   # residual = x (f32, exact)
    o_ref[...] = (y + res).reshape(1, H, W, cout)


def res_blocka_forward(x_nchw, params, *, slope=0.2):
    """_Res_Blocka.forward: LeakyReLU(0.2)(BN(conv3x3(x))) + x.  x: (B, C, H, W) f32."""
    B, C, H, W = x_nchw.shape
    w9 = params['w9']                              # (9, cin, cout) bf16
    cin, cout = w9.shape[1], w9.shape[2]
    assert C == cin and cin == cout, "residual add requires in_ch == out_ch"

    # NCHW -> NHWC (channels on the 128-lane axis) + 'same' zero padding.
    x_nhwc = jnp.transpose(x_nchw, (0, 2, 3, 1))
    xp = jnp.pad(x_nhwc, ((0, 0), (1, 1), (1, 1), (0, 0)))          # (B, H+2, W+2, C)

    kernel = functools.partial(_res_blocka_kernel, H=H, W=W, cin=cin, cout=cout,
                               slope=float(slope))
    # TODO(synk): for large H*W, tile rows with a 1-row halo instead of whole-image blocks.
    out = pl.pallas_call(
        kernel,
        out_shape=jax.ShapeDtypeStruct((B, H, W, cout), jnp.float32),
        grid_spec=pltpu.PrefetchScalarGridSpec(
            num_scalar_prefetch=0,
            grid=(B,),
            in_specs=[
                pl.BlockSpec((1, H + 2, W + 2, cin), lambda b: (b, 0, 0, 0)),
                pl.BlockSpec((9, cin, cout), lambda b: (0, 0, 0)),
                pl.BlockSpec((1, cout), lambda b: (0, 0)),
                pl.BlockSpec((1, cout), lambda b: (0, 0)),
            ],
            out_specs=pl.BlockSpec((1, H, W, cout), lambda b: (b, 0, 0, 0)),
            scratch_shapes=[pltpu.VMEM((H * W, cout), jnp.float32)],
        ),
        compiler_params=pltpu.CompilerParams(dimension_semantics=("parallel",)),
    )(xp, w9, params['bn_scale'], params['bn_shift'])

    return jnp.transpose(out, (0, 3, 1, 2))                          # back to NCHW


# ----------------------------------------------------------------------------
# Deterministic parameter construction (weight-norm + BN + bias folded on host)
# ----------------------------------------------------------------------------
def init_params(key, in_ch, out_ch, eps=1e-5):
    ks = jax.random.split(key, 7)

    # weight_norm(Conv2d): effective weight w = g * v / ||v||  (per output channel)
    v = 0.05 * jax.random.normal(ks[0], (out_ch, in_ch, 3, 3), jnp.float32)
    norm = jnp.sqrt(jnp.sum(v * v, axis=(1, 2, 3), keepdims=True))
    g = norm[:, 0, 0, 0] * (1.0 + 0.1 * jax.random.normal(ks[1], (out_ch,), jnp.float32))
    w_oihw = (g.reshape(out_ch, 1, 1, 1) / norm) * v
    bias = 0.05 * jax.random.normal(ks[2], (out_ch,), jnp.float32)

    # BatchNorm2d running stats folded to a per-channel affine (inference mode).
    gamma = 1.0 + 0.1 * jax.random.normal(ks[3], (out_ch,), jnp.float32)
    beta = 0.1 * jax.random.normal(ks[4], (out_ch,), jnp.float32)
    mean = 0.1 * jax.random.normal(ks[5], (out_ch,), jnp.float32)
    var = 1.0 + 0.2 * jax.random.uniform(ks[6], (out_ch,), jnp.float32)

    scale = gamma / jnp.sqrt(var + eps)
    shift = (beta - mean * scale) + bias * scale       # conv bias folded into BN shift

    # Taps laid out (kh*3 + kw, cin, cout) to match the kernel's accumulation order.
    w9 = jnp.transpose(w_oihw, (2, 3, 1, 0)).reshape(9, in_ch, out_ch)

    return {
        'w9': w9.astype(jnp.bfloat16),
        'bn_scale': scale.reshape(1, out_ch),
        'bn_shift': shift.reshape(1, out_ch),
        'w_oihw_f32': w_oihw,                          # f32 copy for the reference check
    }


# ----------------------------------------------------------------------------
# Pure-JAX reference (f32) for a sanity check
# ----------------------------------------------------------------------------
def ref_forward(x_nchw, w_oihw, scale, shift, slope=0.2):
    y = jax.lax.conv_general_dilated(
        x_nchw, w_oihw, window_strides=(1, 1), padding='SAME',
        dimension_numbers=('NCHW', 'OIHW', 'NCHW'))
    y = y * scale.reshape(1, -1, 1, 1) + shift.reshape(1, -1, 1, 1)
    y = jnp.where(y >= 0, y, slope * y)
    return y + x_nchw


# ----------------------------------------------------------------------------
if __name__ == "__main__":
    # C = 128 keeps the channel (lane) dim dense on TPU; in_ch == out_ch as required
    # by the residual add in _Res_Blocka.forward.
    B, C, H, W = 2, 128, 16, 16

    key = jax.random.PRNGKey(0)
    pkey, xkey = jax.random.split(key)
    params = init_params(pkey, C, C)
    x = jax.random.normal(xkey, (B, C, H, W), jnp.float32)

    fwd = jax.jit(lambda t: res_blocka_forward(t, params))
    out = jax.block_until_ready(fwd(x))

    assert out.shape == (B, C, H, W), out.shape
    assert out.dtype == jnp.float32

    ref = ref_forward(x, params['w_oihw_f32'], params['bn_scale'], params['bn_shift'])
    err = float(jnp.max(jnp.abs(out - ref)))
    tol = 5e-2 + 5e-2 * float(jnp.max(jnp.abs(ref)))   # bf16-matmul tolerance vs f32 ref
    assert err < tol, f"max abs err {err} exceeds tol {tol}"

    print("KERNEL_OK")
</pallas_src>

<mosaic_0001>
module attributes {stable_mosaic.version = 11 : i64} {
  func.func @_res_blocka_kernel(%arg0: i32, %arg1: memref<1x18x18x128xf32, #tpu.memory_space<vmem>>, %arg2: memref<9x128x128xbf16, #tpu.memory_space<vmem>>, %arg3: memref<1x128xf32, #tpu.memory_space<vmem>>, %arg4: memref<1x128xf32, #tpu.memory_space<vmem>>, %arg5: memref<1x16x16x128xf32, #tpu.memory_space<vmem>>, %arg6: memref<256x128xf32, #tpu.memory_space<vmem>>) attributes {dimension_semantics = [#tpu.dimension_semantics<parallel>], iteration_bounds = array<i64: 2>, scalar_prefetch = 0 : i64, scratch_operands = 1 : i64, tpu.core_type = #tpu.core_type<tc>, window_params = [{transform_indices = @transform_0, window_bounds = array<i64: 1, 18, 18, 128>}, {pipeline_mode = #tpu.pipeline_mode<synchronous>, transform_indices = @transform_1, window_bounds = array<i64: 9, 128, 128>}, {pipeline_mode = #tpu.pipeline_mode<synchronous>, transform_indices = @transform_2, window_bounds = array<i64: 1, 128>}, {pipeline_mode = #tpu.pipeline_mode<synchronous>, transform_indices = @transform_3, window_bounds = array<i64: 1, 128>}, {transform_indices = @transform_4, window_bounds = array<i64: 1, 16, 16, 128>}]} {
    %cst = arith.constant 0.000000e+00 : f32
    %0 = vector.broadcast %cst : f32 to vector<256x128xf32>
    %c0 = arith.constant 0 : index
    %c0_0 = arith.constant 0 : index
    %1 = vector.load %arg6[%c0, %c0_0] : memref<256x128xf32, #tpu.memory_space<vmem>>, vector<256x128xf32>
    tpu.vector_store %arg6[%c0, %c0_0], %0 {strides = array<i32>} : memref<256x128xf32, #tpu.memory_space<vmem>>, vector<256x128xf32>,
    %c0_1 = arith.constant 0 : index
    %c0_2 = arith.constant 0 : index
    %c0_3 = arith.constant 0 : index
    %c0_4 = arith.constant 0 : index
    %2 = vector.load %arg1[%c0_1, %c0_2, %c0_3, %c0_4] : memref<1x18x18x128xf32, #tpu.memory_space<vmem>>, vector<1x16x16x128xf32>
    %3 = vector.shape_cast %2 : vector<1x16x16x128xf32> to vector<16x16x128xf32>
    %4 = vector.shape_cast %3 : vector<16x16x128xf32> to vector<256x128xf32>
    %c0_5 = arith.constant 0 : index
    %c0_6 = arith.constant 0 : index
    %5 = vector.load %arg6[%c0_5, %c0_6] : memref<256x128xf32, #tpu.memory_space<vmem>>, vector<256x128xf32>
    %6 = arith.truncf %4 : vector<256x128xf32> to vector<256x128xbf16>
    %c0_7 = arith.constant 0 : index
    %c0_8 = arith.constant 0 : index
    %c0_9 = arith.constant 0 : index
    %7 = vector.load %arg2[%c0_7, %c0_8, %c0_9] : memref<9x128x128xbf16, #tpu.memory_space<vmem>>, vector<1x128x128xbf16>
    %8 = vector.shape_cast %7 : vector<1x128x128xbf16> to vector<128x128xbf16>
    %cst_10 = arith.constant dense<0.000000e+00> : vector<256x128xf32>
    %9 = tpu.matmul %6, %8, %cst_10 {dimension_numbers = #tpu.dot_dimension_numbers<[1], [0], [0], [1], [0, 0, 1, 1], [], []>} : vector<256x128xbf16>, vector<128x128xbf16>, vector<256x128xf32> -> vector<256x128xf32>
    %10 = arith.addf %5, %9 : vector<256x128xf32>
    %c0_11 = arith.constant 0 : index
    %c0_12 = arith.constant 0 : index
    %11 = vector.load %arg6[%c0_11, %c0_12] : memref<256x128xf32, #tpu.memory_space<vmem>>, vector<256x128xf32>
    tpu.vector_store %arg6[%c0_11, %c0_12], %10 {strides = array<i32>} : memref<256x128xf32, #tpu.memory_space<vmem>>, vector<256x128xf32>,
    %c0_13 = arith.constant 0 : index
    %c0_14 = arith.constant 0 : index
    %c1 = arith.constant 1 : index
    %c0_15 = arith.constant 0 : index
    %12 = vector.load %arg1[%c0_13, %c0_14, %c1, %c0_15] : memref<1x18x18x128xf32, #tpu.memory_space<vmem>>, vector<1x16x16x128xf32>
    %13 = vector.shape_cast %12 : vector<1x16x16x128xf32> to vector<16x16x128xf32>
    %14 = vector.shape_cast %13 : vector<16x16x128xf32> to vector<256x128xf32>
    %c0_16 = arith.constant 0 : index
    %c0_17 = arith.constant 0 : index
    %15 = vector.load %arg6[%c0_16, %c0_17] : memref<256x128xf32, #tpu.memory_space<vmem>>, vector<256x128xf32>
    %16 = arith.truncf %14 : vector<256x128xf32> to vector<256x128xbf16>
    %c1_18 = arith.constant 1 : index
    %c0_19 = arith.constant 0 : index
    %c0_20 = arith.constant 0 : index
    %17 = vector.load %arg2[%c1_18, %c0_19, %c0_20] : memref<9x128x128xbf16, #tpu.memory_space<vmem>>, vector<1x128x128xbf16>
    %18 = vector.shape_cast %17 : vector<1x128x128xbf16> to vector<128x128xbf16>
    %cst_21 = arith.constant dense<0.000000e+00> : vector<256x128xf32>
    %19 = tpu.matmul %16, %18, %cst_21 {dimension_numbers = #tpu.dot_dimension_numbers<[1], [0], [0], [1], [0, 0, 1, 1], [], []>} : vector<256x128xbf16>, vector<128x128xbf16>, vector<256x128xf32> -> vector<256x128xf32>
    %20 = arith.addf %15, %19 : vector<256x128xf32>
    %c0_22 = arith.constant 0 : index
    %c0_23 = arith.constant 0 : index
    %21 = vector.load %arg6[%c0_22, %c0_23] : memref<256x128xf32, #tpu.memory_space<vmem>>, vector<256x128xf32>
    tpu.vector_store %arg6[%c0_22, %c0_23], %20 {strides = array<i32>} : memref<256x128xf32, #tpu.memory_space<vmem>>, vector<256x128xf32>,
    %c0_24 = arith.constant 0 : index
    %c0_25 = arith.constant 0 : index
    %c2 = arith.constant 2 : index
    %c0_26 = arith.constant 0 : index
    %22 = vector.load %arg1[%c0_24, %c0_25, %c2, %c0_26] : memref<1x18x18x128xf32, #tpu.memory_space<vmem>>, vector<1x16x16x128xf32>
    %23 = vector.shape_cast %22 : vector<1x16x16x128xf32> to vector<16x16x128xf32>
    %24 = vector.shape_cast %23 : vector<16x16x128xf32> to vector<256x128xf32>
    %c0_27 = arith.constant 0 : index
    %c0_28 = arith.constant 0 : index
    %25 = vector.load %arg6[%c0_27, %c0_28] : memref<256x128xf32, #tpu.memory_space<vmem>>, vector<256x128xf32>
    %26 = arith.truncf %24 : vector<256x128xf32> to vector<256x128xbf16>
    %c2_29 = arith.constant 2 : index
    %c0_30 = arith.constant 0 : index
    %c0_31 = arith.constant 0 : index
    %27 = vector.load %arg2[%c2_29, %c0_30, %c0_31] : memref<9x128x128xbf16, #tpu.memory_space<vmem>>, vector<1x128x128xbf16>
    %28 = vector.shape_cast %27 : vector<1x128x128xbf16> to vector<128x128xbf16>
    %cst_32 = arith.constant dense<0.000000e+00> : vector<256x128xf32>
    %29 = tpu.matmul %26, %28, %cst_32 {dimension_numbers = #tpu.dot_dimension_numbers<[1], [0], [0], [1], [0, 0, 1, 1], [], []>} : vector<256x128xbf16>, vector<128x128xbf16>, vector<256x128xf32> -> vector<256x128xf32>
    %30 = arith.addf %25, %29 : vector<256x128xf32>
    %c0_33 = arith.constant 0 : index
    %c0_34 = arith.constant 0 : index
    %31 = vector.load %arg6[%c0_33, %c0_34] : memref<256x128xf32, #tpu.memory_space<vmem>>, vector<256x128xf32>
    tpu.vector_store %arg6[%c0_33, %c0_34], %30 {strides = array<i32>} : memref<256x128xf32, #tpu.memory_space<vmem>>, vector<256x128xf32>,
    %c0_35 = arith.constant 0 : index
    %c1_36 = arith.constant 1 : index
    %c0_37 = arith.constant 0 : index
    %c0_38 = arith.constant 0 : index
    %32 = vector.load %arg1[%c0_35, %c1_36, %c0_37, %c0_38] : memref<1x18x18x128xf32, #tpu.memory_space<vmem>>, vector<1x16x16x128xf32>
    %33 = vector.shape_cast %32 : vector<1x16x16x128xf32> to vector<16x16x128xf32>
    %34 = vector.shape_cast %33 : vector<16x16x128xf32> to vector<256x128xf32>
    %c0_39 = arith.constant 0 : index
    %c0_40 = arith.constant 0 : index
    %35 = vector.load %arg6[%c0_39, %c0_40] : memref<256x128xf32, #tpu.memory_space<vmem>>, vector<256x128xf32>
    %36 = arith.truncf %34 : vector<256x128xf32> to vector<256x128xbf16>
    %c3 = arith.constant 3 : index
    %c0_41 = arith.constant 0 : index
    %c0_42 = arith.constant 0 : index
    %37 = vector.load %arg2[%c3, %c0_41, %c0_42] : memref<9x128x128xbf16, #tpu.memory_space<vmem>>, vector<1x128x128xbf16>
    %38 = vector.shape_cast %37 : vector<1x128x128xbf16> to vector<128x128xbf16>
    %cst_43 = arith.constant dense<0.000000e+00> : vector<256x128xf32>
    %39 = tpu.matmul %36, %38, %cst_43 {dimension_numbers = #tpu.dot_dimension_numbers<[1], [0], [0], [1], [0, 0, 1, 1], [], []>} : vector<256x128xbf16>, vector<128x128xbf16>, vector<256x128xf32> -> vector<256x128xf32>
    %40 = arith.addf %35, %39 : vector<256x128xf32>
    %c0_44 = arith.constant 0 : index
    %c0_45 = arith.constant 0 : index
    %41 = vector.load %arg6[%c0_44, %c0_45] : memref<256x128xf32, #tpu.memory_space<vmem>>, vector<256x128xf32>
    tpu.vector_store %arg6[%c0_44, %c0_45], %40 {strides = array<i32>} : memref<256x128xf32, #tpu.memory_space<vmem>>, vector<256x128xf32>,
    %c0_46 = arith.constant 0 : index
    %c1_47 = arith.constant 1 : index
    %c1_48 = arith.constant 1 : index
    %c0_49 = arith.constant 0 : index
    %42 = vector.load %arg1[%c0_46, %c1_47, %c1_48, %c0_49] : memref<1x18x18x128xf32, #tpu.memory_space<vmem>>, vector<1x16x16x128xf32>
    %43 = vector.shape_cast %42 : vector<1x16x16x128xf32> to vector<16x16x128xf32>
    %44 = vector.shape_cast %43 : vector<16x16x128xf32> to vector<256x128xf32>
    %c0_50 = arith.constant 0 : index
    %c0_51 = arith.constant 0 : index
    %45 = vector.load %arg6[%c0_50, %c0_51] : memref<256x128xf32, #tpu.memory_space<vmem>>, vector<256x128xf32>
    %46 = arith.truncf %44 : vector<256x128xf32> to vector<256x128xbf16>
    %c4 = arith.constant 4 : index
    %c0_52 = arith.constant 0 : index
    %c0_53 = arith.constant 0 : index
    %47 = vector.load %arg2[%c4, %c0_52, %c0_53] : memref<9x128x128xbf16, #tpu.memory_space<vmem>>, vector<1x128x128xbf16>
    %48 = vector.shape_cast %47 : vector<1x128x128xbf16> to vector<128x128xbf16>
    %cst_54 = arith.constant dense<0.000000e+00> : vector<256x128xf32>
    %49 = tpu.matmul %46, %48, %cst_54 {dimension_numbers = #tpu.dot_dimension_numbers<[1], [0], [0], [1], [0, 0, 1, 1], [], []>} : vector<256x128xbf16>, vector<128x128xbf16>, vector<256x128xf32> -> vector<256x128xf32>
    %50 = arith.addf %45, %49 : vector<256x128xf32>
    %c0_55 = arith.constant 0 : index
    %c0_56 = arith.constant 0 : index
    %51 = vector.load %arg6[%c0_55, %c0_56] : memref<256x128xf32, #tpu.memory_space<vmem>>, vector<256x128xf32>
    tpu.vector_store %arg6[%c0_55, %c0_56], %50 {strides = array<i32>} : memref<256x128xf32, #tpu.memory_space<vmem>>, vector<256x128xf32>,
    %c0_57 = arith.constant 0 : index
    %c1_58 = arith.constant 1 : index
    %c2_59 = arith.constant 2 : index
    %c0_60 = arith.constant 0 : index
    %52 = vector.load %arg1[%c0_57, %c1_58, %c2_59, %c0_60] : memref<1x18x18x128xf32, #tpu.memory_space<vmem>>, vector<1x16x16x128xf32>
    %53 = vector.shape_cast %52 : vector<1x16x16x128xf32> to vector<16x16x128xf32>
    %54 = vector.shape_cast %53 : vector<16x16x128xf32> to vector<256x128xf32>
    %c0_61 = arith.constant 0 : index
    %c0_62 = arith.constant 0 : index
    %55 = vector.load %arg6[%c0_61, %c0_62] : memref<256x128xf32, #tpu.memory_space<vmem>>, vector<256x128xf32>
    %56 = arith.truncf %54 : vector<256x128xf32> to vector<256x128xbf16>
    %c5 = arith.constant 5 : index
    %c0_63 = arith.constant 0 : index
    %c0_64 = arith.constant 0 : index
    %57 = vector.load %arg2[%c5, %c0_63, %c0_64] : memref<9x128x128xbf16, #tpu.memory_space<vmem>>, vector<1x128x128xbf16>
    %58 = vector.shape_cast %57 : vector<1x128x128xbf16> to vector<128x128xbf16>
    %cst_65 = arith.constant dense<0.000000e+00> : vector<256x128xf32>
    %59 = tpu.matmul %56, %58, %cst_65 {dimension_numbers = #tpu.dot_dimension_numbers<[1], [0], [0], [1], [0, 0, 1, 1], [], []>} : vector<256x128xbf16>, vector<128x128xbf16>, vector<256x128xf32> -> vector<256x128xf32>
    %60 = arith.addf %55, %59 : vector<256x128xf32>
    %c0_66 = arith.constant 0 : index
    %c0_67 = arith.constant 0 : index
    %61 = vector.load %arg6[%c0_66, %c0_67] : memref<256x128xf32, #tpu.memory_space<vmem>>, vector<256x128xf32>
    tpu.vector_store %arg6[%c0_66, %c0_67], %60 {strides = array<i32>} : memref<256x128xf32, #tpu.memory_space<vmem>>, vector<256x128xf32>,
    %c0_68 = arith.constant 0 : index
    %c2_69 = arith.constant 2 : index
    %c0_70 = arith.constant 0 : index
    %c0_71 = arith.constant 0 : index
    %62 = vector.load %arg1[%c0_68, %c2_69, %c0_70, %c0_71] : memref<1x18x18x128xf32, #tpu.memory_space<vmem>>, vector<1x16x16x128xf32>
    %63 = vector.shape_cast %62 : vector<1x16x16x128xf32> to vector<16x16x128xf32>
    %64 = vector.shape_cast %63 : vector<16x16x128xf32> to vector<256x128xf32>
    %c0_72 = arith.constant 0 : index
    %c0_73 = arith.constant 0 : index
    %65 = vector.load %arg6[%c0_72, %c0_73] : memref<256x128xf32, #tpu.memory_space<vmem>>, vector<256x128xf32>
    %66 = arith.truncf %64 : vector<256x128xf32> to vector<256x128xbf16>
    %c6 = arith.constant 6 : index
    %c0_74 = arith.constant 0 : index
    %c0_75 = arith.constant 0 : index
    %67 = vector.load %arg2[%c6, %c0_74, %c0_75] : memref<9x128x128xbf16, #tpu.memory_space<vmem>>, vector<1x128x128xbf16>
    %68 = vector.shape_cast %67 : vector<1x128x128xbf16> to vector<128x128xbf16>
    %cst_76 = arith.constant dense<0.000000e+00> : vector<256x128xf32>
    %69 = tpu.matmul %66, %68, %cst_76 {dimension_numbers = #tpu.dot_dimension_numbers<[1], [0], [0], [1], [0, 0, 1, 1], [], []>} : vector<256x128xbf16>, vector<128x128xbf16>, vector<256x128xf32> -> vector<256x128xf32>
    %70 = arith.addf %65, %69 : vector<256x128xf32>
    %c0_77 = arith.constant 0 : index
    %c0_78 = arith.constant 0 : index
    %71 = vector.load %arg6[%c0_77, %c0_78] : memref<256x128xf32, #tpu.memory_space<vmem>>, vector<256x128xf32>
    tpu.vector_store %arg6[%c0_77, %c0_78], %70 {strides = array<i32>} : memref<256x128xf32, #tpu.memory_space<vmem>>, vector<256x128xf32>,
    %c0_79 = arith.constant 0 : index
    %c2_80 = arith.constant 2 : index
    %c1_81 = arith.constant 1 : index
    %c0_82 = arith.constant 0 : index
    %72 = vector.load %arg1[%c0_79, %c2_80, %c1_81, %c0_82] : memref<1x18x18x128xf32, #tpu.memory_space<vmem>>, vector<1x16x16x128xf32>
    %73 = vector.shape_cast %72 : vector<1x16x16x128xf32> to vector<16x16x128xf32>
    %74 = vector.shape_cast %73 : vector<16x16x128xf32> to vector<256x128xf32>
    %c0_83 = arith.constant 0 : index
    %c0_84 = arith.constant 0 : index
    %75 = vector.load %arg6[%c0_83, %c0_84] : memref<256x128xf32, #tpu.memory_space<vmem>>, vector<256x128xf32>
    %76 = arith.truncf %74 : vector<256x128xf32> to vector<256x128xbf16>
    %c7 = arith.constant 7 : index
    %c0_85 = arith.constant 0 : index
    %c0_86 = arith.constant 0 : index
    %77 = vector.load %arg2[%c7, %c0_85, %c0_86] : memref<9x128x128xbf16, #tpu.memory_space<vmem>>, vector<1x128x128xbf16>
    %78 = vector.shape_cast %77 : vector<1x128x128xbf16> to vector<128x128xbf16>
    %cst_87 = arith.constant dense<0.000000e+00> : vector<256x128xf32>
    %79 = tpu.matmul %76, %78, %cst_87 {dimension_numbers = #tpu.dot_dimension_numbers<[1], [0], [0], [1], [0, 0, 1, 1], [], []>} : vector<256x128xbf16>, vector<128x128xbf16>, vector<256x128xf32> -> vector<256x128xf32>
    %80 = arith.addf %75, %79 : vector<256x128xf32>
    %c0_88 = arith.constant 0 : index
    %c0_89 = arith.constant 0 : index
    %81 = vector.load %arg6[%c0_88, %c0_89] : memref<256x128xf32, #tpu.memory_space<vmem>>, vector<256x128xf32>
    tpu.vector_store %arg6[%c0_88, %c0_89], %80 {strides = array<i32>} : memref<256x128xf32, #tpu.memory_space<vmem>>, vector<256x128xf32>,
    %c0_90 = arith.constant 0 : index
    %c2_91 = arith.constant 2 : index
    %c2_92 = arith.constant 2 : index
    %c0_93 = arith.constant 0 : index
    %82 = vector.load %arg1[%c0_90, %c2_91, %c2_92, %c0_93] : memref<1x18x18x128xf32, #tpu.memory_space<vmem>>, vector<1x16x16x128xf32>
    %83 = vector.shape_cast %82 : vector<1x16x16x128xf32> to vector<16x16x128xf32>
    %84 = vector.shape_cast %83 : vector<16x16x128xf32> to vector<256x128xf32>
    %c0_94 = arith.constant 0 : index
    %c0_95 = arith.constant 0 : index
    %85 = vector.load %arg6[%c0_94, %c0_95] : memref<256x128xf32, #tpu.memory_space<vmem>>, vector<256x128xf32>
    %86 = arith.truncf %84 : vector<256x128xf32> to vector<256x128xbf16>
    %c8 = arith.constant 8 : index
    %c0_96 = arith.constant 0 : index
    %c0_97 = arith.constant 0 : index
    %87 = vector.load %arg2[%c8, %c0_96, %c0_97] : memref<9x128x128xbf16, #tpu.memory_space<vmem>>, vector<1x128x128xbf16>
    %88 = vector.shape_cast %87 : vector<1x128x128xbf16> to vector<128x128xbf16>
    %cst_98 = arith.constant dense<0.000000e+00> : vector<256x128xf32>
    %89 = tpu.matmul %86, %88, %cst_98 {dimension_numbers = #tpu.dot_dimension_numbers<[1], [0], [0], [1], [0, 0, 1, 1], [], []>} : vector<256x128xbf16>, vector<128x128xbf16>, vector<256x128xf32> -> vector<256x128xf32>
    %90 = arith.addf %85, %89 : vector<256x128xf32>
    %c0_99 = arith.constant 0 : index
    %c0_100 = arith.constant 0 : index
    %91 = vector.load %arg6[%c0_99, %c0_100] : memref<256x128xf32, #tpu.memory_space<vmem>>, vector<256x128xf32>
    tpu.vector_store %arg6[%c0_99, %c0_100], %90 {strides = array<i32>} : memref<256x128xf32, #tpu.memory_space<vmem>>, vector<256x128xf32>,
    %c0_101 = arith.constant 0 : index
    %c0_102 = arith.constant 0 : index
    %92 = vector.load %arg6[%c0_101, %c0_102] : memref<256x128xf32, #tpu.memory_space<vmem>>, vector<256x128xf32>
    %c0_103 = arith.constant 0 : index
    %c0_104 = arith.constant 0 : index
    %93 = vector.load %arg3[%c0_103, %c0_104] : memref<1x128xf32, #tpu.memory_space<vmem>>, vector<1x128xf32>
    %94 = vector.broadcast %93 : vector<1x128xf32> to vector<256x128xf32>
    %95 = arith.mulf %92, %94 : vector<256x128xf32>
    %c0_105 = arith.constant 0 : index
    %c0_106 = arith.constant 0 : index
    %96 = vector.load %arg4[%c0_105, %c0_106] : memref<1x128xf32, #tpu.memory_space<vmem>>, vector<1x128xf32>
    %97 = vector.broadcast %96 : vector<1x128xf32> to vector<256x128xf32>
    %98 = arith.addf %95, %97 : vector<256x128xf32>
    %cst_107 = arith.constant 0.000000e+00 : f32
    %99 = vector.broadcast %cst_107 : f32 to vector<256x128xf32>
    %100 = arith.cmpf oge, %98, %99 : vector<256x128xf32>
    %cst_108 = arith.constant 2.000000e-01 : f32
    %101 = vector.broadcast %cst_108 : f32 to vector<256x128xf32>
    %102 = arith.mulf %101, %98 : vector<256x128xf32>
    %103 = arith.select %100, %98, %102 : vector<256x128xi1>, vector<256x128xf32>
    %c0_109 = arith.constant 0 : index
    %c1_110 = arith.constant 1 : index
    %c1_111 = arith.constant 1 : index
    %c0_112 = arith.constant 0 : index
    %104 = vector.load %arg1[%c0_109, %c1_110, %c1_111, %c0_112] : memref<1x18x18x128xf32, #tpu.memory_space<vmem>>, vector<1x16x16x128xf32>
    %105 = vector.shape_cast %104 : vector<1x16x16x128xf32> to vector<16x16x128xf32>
    %106 = vector.shape_cast %105 : vector<16x16x128xf32> to vector<256x128xf32>
    %107 = arith.addf %103, %106 : vector<256x128xf32>
    %108 = vector.shape_cast %107 : vector<256x128xf32> to vector<1x16x16x128xf32>
    %c0_113 = arith.constant 0 : index
    %c0_114 = arith.constant 0 : index
    %c0_115 = arith.constant 0 : index
    %c0_116 = arith.constant 0 : index
    %109 = vector.load %arg5[%c0_113, %c0_114, %c0_115, %c0_116] : memref<1x16x16x128xf32, #tpu.memory_space<vmem>>, vector<1x16x16x128xf32>
    tpu.vector_store %arg5[%c0_113, %c0_114, %c0_115, %c0_116], %108 {strides = array<i32>} : memref<1x16x16x128xf32, #tpu.memory_space<vmem>>, vector<1x16x16x128xf32>,
    return
  }
  func.func @transform_0(%arg0: i32) -> (i32, i32, i32, i32) {
    %c0_i32 = arith.constant 0 : i32
    %c0_i32_0 = arith.constant 0 : i32
    %c0_i32_1 = arith.constant 0 : i32
    %c0_i32_2 = arith.constant 0 : i32
    return %arg0, %c0_i32, %c0_i32_0, %c0_i32_1 : i32, i32, i32, i32
  }
  func.func @transform_1(%arg0: i32) -> (i32, i32, i32) {
    %c0_i32 = arith.constant 0 : i32
    %c0_i32_0 = arith.constant 0 : i32
    %c0_i32_1 = arith.constant 0 : i32
    %c0_i32_2 = arith.constant 0 : i32
    return %c0_i32, %c0_i32_0, %c0_i32_1 : i32, i32, i32
  }
  func.func @transform_2(%arg0: i32) -> (i32, i32) {
    %c0_i32 = arith.constant 0 : i32
    %c0_i32_0 = arith.constant 0 : i32
    %c0_i32_1 = arith.constant 0 : i32
    return %c0_i32, %c0_i32_0 : i32, i32
  }
  func.func @transform_3(%arg0: i32) -> (i32, i32) {
    %c0_i32 = arith.constant 0 : i32
    %c0_i32_0 = arith.constant 0 : i32
    %c0_i32_1 = arith.constant 0 : i32
    return %c0_i32, %c0_i32_0 : i32, i32
  }
  func.func @transform_4(%arg0: i32) -> (i32, i32, i32, i32) {
    %c0_i32 = arith.constant 0 : i32
    %c0_i32_0 = arith.constant 0 : i32
    %c0_i32_1 = arith.constant 0 : i32
    %c0_i32_2 = arith.constant 0 : i32
    return %arg0, %c0_i32, %c0_i32_0, %c0_i32_1 : i32, i32, i32, i32
  }
}

</mosaic_0001>

<llo_original>
// kernel: _lambda_.1
$region0: #{_lambda_.1}
  #allocation0 [shape = 'u32[]', space=smem, size = 0x4, offset = 0x4, fixed_abs, tag = 'smem constant byte address 0x4 - core index']
  #allocation1 [shape = 'u32[72,128]{1,0:T(1,128)}', space=vmem, size = 0x9000, scoped, tag = 'internal scratch']
  #allocation2 [shape = 'f32[256,128]{1,0:T(8,128)}', space=vmem, size = 0x20000, scoped, tag = 'scratch operand']
  %s0 = inlined_call_operand.vmem [shape: f32[2,18,18,128], index: 0, kind: input, shape index: {}]
  %s1 = inlined_call_operand.vmem [shape: bf16[9,128,128], index: 1, kind: input, shape index: {}]
  %s2 = inlined_call_operand.vmem [shape: f32[1,128], index: 2, kind: input, shape index: {}]
  %s3 = inlined_call_operand.vmem [shape: f32[1,128], index: 3, kind: input, shape index: {}]
  %s4 = inlined_call_operand.hbm [shape: f32[2,16,16,128], index: 4, kind: output, shape index: {}]
  %s5 = sld [smem:[#allocation0]]
  $region49: #{_lambda_.1} parent=0
    _
  %s7 = ssub.s32 1, %s5
  %s8 = scalar_select 0, %s7, %s5
  $region1: #{_lambda_.1} parent=0
    #allocation3 [shape = 'u8[262144]{0}', space=vmem, size = 0x40000, scoped, tag = 'output window, operand 0']
    #allocation4 [shape = 's32[2]{0}', space=sflag, size = 0x8, scoped, tag = 'scoped memory for _lambda_.1']
    %9 = vsyncpa [#allocation4], 0
    %s10 = scalar_lea.sflag [#allocation4], 1
    %11 = vsyncpa %s10, 0
    loop: start=0, step=1, limit=4
    $region2: #{_lambda_.1} parent=1 // loop_pre_header
      _
    $region3: #{_lambda_.1} parent=1 // loop_header
      %s13 = sphi 0, %s17
      %p14 = scmp.ge.s32.totalorder %s13, 4
      %s23 = sphi 0, %s25
      %s26 = sphi 0, %s23
      %s27 = sphi 0, %s26
      %s43 = sphi 0, %s27
      %s47 = sphi 0, %s47
      %s49 = sphi 0, %s47
      %s50 = sphi 0, %s49
      %s64 = sphi 0, %s50
      %s68 = sphi 0, %s68
      %s70 = sphi 0, %s68
      %s71 = sphi 0, %s70
      %s85 = sphi 0, %s71
      %s89 = sphi 0, %s89
      %s91 = sphi 0, %s89
      %s92 = sphi 0, %s91
      %s106 = sphi 0, %s92
      %s112 = sphi 0, %s114
      %s115 = sphi 0, %s112
      %s116 = sphi 0, %s115
      %s132 = sphi 0, %s116
    $region4: #{_lambda_.1} parent=1 // loop_header_branch
      %16 = sbr.rel (%p14) target = $region8
    $region5: #{_lambda_.1} parent=1 // loop_body
      %s18 = ssub.s32 %s13, 1
      %s19 = ssub.s32 %s13, 2
      %s20 = sadd.s32 %s13, 1
      %s21 = ssub.s32 %s13, %s20
      %p22 = scmp.eq.s32.totalorder %s21, 0
      %s24 = sadd.s32 %s23, 1
      %s25 = scalar_select %p22, %s23, %s24
      %p28 = pneg %p22
      %p29 = scmp.eq.s32.totalorder %s13, 1
      %p30 = por %p28, %p29
      %p31 = scmp.ne.s32.totalorder %s23, %s26
      %p32 = scmp.eq.s32.totalorder %s13, 0
      %p33 = por %p31, %p32
      %p34 = scmp.ne.s32.totalorder %s23, %s26
      %p35 = scmp.eq.s32.totalorder %s18, 1
      %p36 = por %p34, %p35
      %p37 = scmp.ne.s32.totalorder %s26, %s27
      %p38 = scmp.eq.s32.totalorder %s18, 0
      %p39 = por %p37, %p38
      %p40 = scmp.ne.s32.totalorder %s26, %s27
      %p41 = scmp.eq.s32.totalorder %s19, 1
      %p42 = por %p40, %p41
      %p44 = scmp.ne.s32.totalorder %s27, %s43
      %p45 = scmp.eq.s32.totalorder %s19, 0
      %p46 = por %p44, %p45
      %s48 = sadd.s32 %s47, 1
      %p51 = scmp.eq.s32.totalorder %s13, 1
      %p52 = scmp.ne.s32.totalorder %s47, %s49
      %p53 = scmp.eq.s32.totalorder %s13, 0
      %p54 = por %p52, %p53
      %p55 = scmp.ne.s32.totalorder %s47, %s49
      %p56 = scmp.eq.s32.totalorder %s18, 1
      %p57 = por %p55, %p56
      %p58 = scmp.ne.s32.totalorder %s49, %s50
      %p59 = scmp.eq.s32.totalorder %s18, 0
      %p60 = por %p58, %p59
      %p61 = scmp.ne.s32.totalorder %s49, %s50
      %p62 = scmp.eq.s32.totalorder %s19, 1
      %p63 = por %p61, %p62
      %p65 = scmp.ne.s32.totalorder %s50, %s64
      %p66 = scmp.eq.s32.totalorder %s19, 0
      %p67 = por %p65, %p66
      %s69 = sadd.s32 %s68, 1
      %p72 = scmp.eq.s32.totalorder %s13, 1
      %p73 = scmp.ne.s32.totalorder %s68, %s70
      %p74 = scmp.eq.s32.totalorder %s13, 0
      %p75 = por %p73, %p74
      %p76 = scmp.ne.s32.totalorder %s68, %s70
      %p77 = scmp.eq.s32.totalorder %s18, 1
      %p78 = por %p76, %p77
      %p79 = scmp.ne.s32.totalorder %s70, %s71
      %p80 = scmp.eq.s32.totalorder %s18, 0
      %p81 = por %p79, %p80
      %p82 = scmp.ne.s32.totalorder %s70, %s71
      %p83 = scmp.eq.s32.totalorder %s19, 1
      %p84 = por %p82, %p83
      %p86 = scmp.ne.s32.totalorder %s71, %s85
      %p87 = scmp.eq.s32.totalorder %s19, 0
      %p88 = por %p86, %p87
      %s90 = sadd.s32 %s89, 1
      %p93 = scmp.eq.s32.totalorder %s13, 1
      %p94 = scmp.ne.s32.totalorder %s89, %s91
      %p95 = scmp.eq.s32.totalorder %s13, 0
      %p96 = por %p94, %p95
      %p97 = scmp.ne.s32.totalorder %s89, %s91
      %p98 = scmp.eq.s32.totalorder %s18, 1
      %p99 = por %p97, %p98
      %p100 = scmp.ne.s32.totalorder %s91, %s92
      %p101 = scmp.eq.s32.totalorder %s18, 0
      %p102 = por %p100, %p101
      %p103 = scmp.ne.s32.totalorder %s91, %s92
      %p104 = scmp.eq.s32.totalorder %s19, 1
      %p105 = por %p103, %p104
      %p107 = scmp.ne.s32.totalorder %s92, %s106
      %p108 = scmp.eq.s32.totalorder %s19, 0
      %p109 = por %p107, %p108
      %s110 = ssub.s32 %s13, %s20
      %p111 = scmp.eq.s32.totalorder %s110, 0
      %s113 = sadd.s32 %s112, 1
      %s114 = scalar_select %p111, %s112, %s113
      %p117 = pneg %p111
      %p118 = scmp.eq.s32.totalorder %s13, 1
      %p119 = por %p117, %p118
      %p120 = scmp.ne.s32.totalorder %s112, %s115
      %p121 = scmp.eq.s32.totalorder %s13, 0
      %p122 = por %p120, %p121
      %p123 = scmp.ne.s32.totalorder %s112, %s115
      %p124 = scmp.eq.s32.totalorder %s18, 1
      %p125 = por %p123, %p124
      %p126 = scmp.ne.s32.totalorder %s115, %s116
      %p127 = scmp.eq.s32.totalorder %s18, 0
      %p128 = por %p126, %p127
      %p129 = scmp.ne.s32.totalorder %s115, %s116
      %p130 = scmp.eq.s32.totalorder %s19, 1
      %p131 = por %p129, %p130
      %p133 = scmp.ne.s32.totalorder %s116, %s132
      %p134 = scmp.eq.s32.totalorder %s19, 0
      %p135 = por %p133, %p134
      %p136 = scmp.le.s32.totalorder 1, %s13
      %p137 = scmp.lt.s32.totalorder %s13, 3
      %p138 = pnand %p136, %p137
      %p139 = pneg %p138
      // Predicated region
      $region9: #{_lambda_.1} parent=5 // pred_check
        _
      $region10: #{_lambda_.1} parent=5 // pred_check_branch
        %141 = sbr.rel (%p138) target = $region12
      $region11: #{_lambda_.1} parent=5 // pred_region
        %s142 = ssub.s32 %s13, 1
        // Predicated region
        $region13: #{_lambda_.1} parent=11 // pred_check
          %p143 = pneg %p60
        $region14: #{_lambda_.1} parent=11 // pred_check_branch
          %145 = sbr.rel (%p143) target = $region16
        $region15: #{_lambda_.1} parent=11 // pred_region
          _
        $region16: #{_lambda_.1} parent=11 // pred_fallthru
          _
        // Predicated region
        $region17: #{_lambda_.1} parent=11 // pred_check
          %p146 = pneg %p81
        $region18: #{_lambda_.1} parent=11 // pred_check_branch
          %148 = sbr.rel (%p146) target = $region20
        $region19: #{_lambda_.1} parent=11 // pred_region
          _
        $region20: #{_lambda_.1} parent=11 // pred_fallthru
          _
        // Predicated region
        $region21: #{_lambda_.1} parent=11 // pred_check
          %p149 = pneg %p102
        $region22: #{_lambda_.1} parent=11 // pred_check_branch
          %151 = sbr.rel (%p149) target = $region24
        $region23: #{_lambda_.1} parent=11 // pred_region
          _
        $region24: #{_lambda_.1} parent=11 // pred_fallthru
          _
      $region12: #{_lambda_.1} parent=5 // pred_fallthru
        _
      %p152 = scmp.lt.s32.totalorder %s13, 2
      // Predicated region
      $region25: #{_lambda_.1} parent=5 // pred_check
        %p153 = pneg %p152
      $region26: #{_lambda_.1} parent=5 // pred_check_branch
        %155 = sbr.rel (%p153) target = $region28
      $region27: #{_lambda_.1} parent=5 // pred_region
        // Predicated region
        $region29: #{_lambda_.1} parent=27 // pred_check
          %p156 = pneg %p33
        $region30: #{_lambda_.1} parent=27 // pred_check_branch
          %158 = sbr.rel (%p156) target = $region32
        $region31: #{_lambda_.1} parent=27 // pred_region
          %p159 = scmp.lt.s32.totalorder %s13, 1
          %s160 = scalar_select %p159, %s13, 1
          %s161 = smul.addr %s160, 54
          %s162 = smul.addr %s161, 8
          %s163 = scalar_lea.vmem %s0, %s162
        $region32: #{_lambda_.1} parent=27 // pred_fallthru
          _
      $region28: #{_lambda_.1} parent=5 // pred_fallthru
        _
      %p164 = scmp.le.s32.totalorder 1, %s13
      %p165 = scmp.lt.s32.totalorder %s13, 3
      %p166 = pnand %p164, %p165
      %p167 = pneg %p166
      // Predicated region
      $region33: #{_lambda_.1} parent=5 // pred_check
        _
      $region34: #{_lambda_.1} parent=5 // pred_check_branch
        %169 = sbr.rel (%p166) target = $region36
      $region35: #{_lambda_.1} parent=5 // pred_region
        %s170 = ssub.s32 %s13, 1
        %p171 = scmp.lt.s32.totalorder %s18, 1
        %s172 = scalar_select %p171, %s18, 1
        %s173 = smul.addr %s172, 54
        %s174 = smul.addr %s173, 8
        %s175 = scalar_lea.vmem %s0, %s174
        %p176 = pneg %p39
        %p177 = pneg %p36
        %p178 = pneg %p60
        %p179 = pneg %p57
        %p180 = pneg %p81
        %p181 = pneg %p78
        %p182 = pneg %p102
        %p183 = pneg %p99
        %p184 = pneg %p128
        %p185 = pneg %p125
        %s186 = sand.u32 %s115, 1
        %s187 = scalar_lea.sflag [#allocation4], %s186
        %s188 = sand.u32 %s115, 1
        %s189 = smul.addr %s188, 256
        %s190 = scalar_lea.vmem [#allocation3], %s189
        %p191 = scmp.lt.s32.totalorder %s18, 1
        %s192 = scalar_select %p191, %s18, 1
        %s193 = smul.addr %s192, 54
        %s194 = smul.addr %s193, 8
        %s195 = scalar_lea.vmem %s0, %s194
        %196 = vst [vmem:[#allocation2] sm:$0xff] 0.0
        %197 = vst [vmem:[#allocation2 + $0x8] sm:$0xff] 0.0
        %198 = vst [vmem:[#allocation2 + $0x10] sm:$0xff] 0.0
        %199 = vst [vmem:[#allocation2 + $0x18] sm:$0xff] 0.0
        %200 = vst [vmem:[#allocation2 + $0x20] sm:$0xff] 0.0
        %201 = vst [vmem:[#allocation2 + $0x28] sm:$0xff] 0.0
        %202 = vst [vmem:[#allocation2 + $0x30] sm:$0xff] 0.0
        %203 = vst [vmem:[#allocation2 + $0x38] sm:$0xff] 0.0
        %204 = vst [vmem:[#allocation2 + $0x40] sm:$0xff] 0.0
        %205 = vst [vmem:[#allocation2 + $0x48] sm:$0xff] 0.0
        %206 = vst [vmem:[#allocation2 + $0x50] sm:$0xff] 0.0
        %207 = vst [vmem:[#allocation2 + $0x58] sm:$0xff] 0.0
        %208 = vst [vmem:[#allocation2 + $0x60] sm:$0xff] 0.0
        %209 = vst [vmem:[#allocation2 + $0x68] sm:$0xff] 0.0
        %210 = vst [vmem:[#allocation2 + $0x70] sm:$0xff] 0.0
        %211 = vst [vmem:[#allocation2 + $0x78] sm:$0xff] 0.0
        %212 = vst [vmem:[#allocation2 + $0x80] sm:$0xff] 0.0
        %213 = vst [vmem:[#allocation2 + $0x88] sm:$0xff] 0.0
        %214 = vst [vmem:[#allocation2 + $0x90] sm:$0xff] 0.0
        %215 = vst [vmem:[#allocation2 + $0x98] sm:$0xff] 0.0
        %216 = vst [vmem:[#allocation2 + $0xa0] sm:$0xff] 0.0
        %217 = vst [vmem:[#allocation2 + $0xa8] sm:$0xff] 0.0
        %218 = vst [vmem:[#allocation2 + $0xb0] sm:$0xff] 0.0
        %219 = vst [vmem:[#allocation2 + $0xb8] sm:$0xff] 0.0
        %220 = vst [vmem:[#allocation2 + $0xc0] sm:$0xff] 0.0
        %221 = vst [vmem:[#allocation2 + $0xc8] sm:$0xff] 0.0
        %222 = vst [vmem:[#allocation2 + $0xd0] sm:$0xff] 0.0
        %223 = vst [vmem:[#allocation2 + $0xd8] sm:$0xff] 0.0
        %224 = vst [vmem:[#allocation2 + $0xe0] sm:$0xff] 0.0
        %225 = vst [vmem:[#allocation2 + $0xe8] sm:$0xff] 0.0
        %226 = vst [vmem:[#allocation2 + $0xf0] sm:$0xff] 0.0
        %227 = vst [vmem:[#allocation2 + $0xf8] sm:$0xff] 0.0
        %v228 = vld [vmem:[%s195] sm:$0xff]
        %v229 = vld [vmem:[%s195 + $0x8] sm:$0xff]
        %v230 = vld [vmem:[%s195 + $0x18] sm:$0xff]
        %v231 = vld [vmem:[%s195 + $0x20] sm:$0xff]
        %v232 = vld [vmem:[%s195 + $0x30] sm:$0xff]
        %v233 = vld [vmem:[%s195 + $0x38] sm:$0xff]
        %v234 = vld [vmem:[%s195 + $0x48] sm:$0xff]
        %v235 = vld [vmem:[%s195 + $0x50] sm:$0xff]
        %v236 = vld [vmem:[%s195 + $0x60] sm:$0xff]
        %v237 = vld [vmem:[%s195 + $0x68] sm:$0xff]
        %v238 = vld [vmem:[%s195 + $0x78] sm:$0xff]
        %v239 = vld [vmem:[%s195 + $0x80] sm:$0xff]
        %v240 = vld [vmem:[%s195 + $0x90] sm:$0xff]
        %v241 = vld [vmem:[%s195 + $0x98] sm:$0xff]
        %v242 = vld [vmem:[%s195 + $0xa8] sm:$0xff]
        %v243 = vld [vmem:[%s195 + $0xb0] sm:$0xff]
        %v244 = vld [vmem:[%s195 + $0xc0] sm:$0xff]
        %v245 = vld [vmem:[%s195 + $0xc8] sm:$0xff]
        %v246 = vld [vmem:[%s195 + $0xd8] sm:$0xff]
        %v247 = vld [vmem:[%s195 + $0xe0] sm:$0xff]
        %v248 = vld [vmem:[%s195 + $0xf0] sm:$0xff]
        %v249 = vld [vmem:[%s195 + $0xf8] sm:$0xff]
        %v250 = vld [vmem:[%s195 + $0x108] sm:$0xff]
        %v251 = vld [vmem:[%s195 + $0x110] sm:$0xff]
        %v252 = vld [vmem:[%s195 + $0x120] sm:$0xff]
        %v253 = vld [vmem:[%s195 + $0x128] sm:$0xff]
        %v254 = vld [vmem:[%s195 + $0x138] sm:$0xff]
        %v255 = vld [vmem:[%s195 + $0x140] sm:$0xff]
        %v256 = vld [vmem:[%s195 + $0x150] sm:$0xff]
        %v257 = vld [vmem:[%s195 + $0x158] sm:$0xff]
        %v258 = vld [vmem:[%s195 + $0x168] sm:$0xff]
        %v259 = vld [vmem:[%s195 + $0x170] sm:$0xff]
        %v260 = vld [vmem:[#allocation2] sm:$0xff]
        %v261 = vld [vmem:[#allocation2 + $0x8] sm:$0xff]
        %v262 = vld [vmem:[#allocation2 + $0x10] sm:$0xff]
        %v263 = vld [vmem:[#allocation2 + $0x18] sm:$0xff]
        %v264 = vld [vmem:[#allocation2 + $0x20] sm:$0xff]
        %v265 = vld [vmem:[#allocation2 + $0x28] sm:$0xff]
        %v266 = vld [vmem:[#allocation2 + $0x30] sm:$0xff]
        %v267 = vld [vmem:[#allocation2 + $0x38] sm:$0xff]
        %v268 = vld [vmem:[#allocation2 + $0x40] sm:$0xff]
        %v269 = vld [vmem:[#allocation2 + $0x48] sm:$0xff]
        %v270 = vld [vmem:[#allocation2 + $0x50] sm:$0xff]
        %v271 = vld [vmem:[#allocation2 + $0x58] sm:$0xff]
        %v272 = vld [vmem:[#allocation2 + $0x60] sm:$0xff]
        %v273 = vld [vmem:[#allocation2 + $0x68] sm:$0xff]
        %v274 = vld [vmem:[#allocation2 + $0x70] sm:$0xff]
        %v275 = vld [vmem:[#allocation2 + $0x78] sm:$0xff]
        %v276 = vld [vmem:[#allocation2 + $0x80] sm:$0xff]
        %v277 = vld [vmem:[#allocation2 + $0x88] sm:$0xff]
        %v278 = vld [vmem:[#allocation2 + $0x90] sm:$0xff]
        %v279 = vld [vmem:[#allocation2 + $0x98] sm:$0xff]
        %v280 = vld [vmem:[#allocation2 + $0xa0] sm:$0xff]
        %v281 = vld [vmem:[#allocation2 + $0xa8] sm:$0xff]
        %v282 = vld [vmem:[#allocation2 + $0xb0] sm:$0xff]
        %v283 = vld [vmem:[#allocation2 + $0xb8] sm:$0xff]
        %v284 = vld [vmem:[#allocation2 + $0xc0] sm:$0xff]
        %v285 = vld [vmem:[#allocation2 + $0xc8] sm:$0xff]
        %v286 = vld [vmem:[#allocation2 + $0xd0] sm:$0xff]
        %v287 = vld [vmem:[#allocation2 + $0xd8] sm:$0xff]
        %v288 = vld [vmem:[#allocation2 + $0xe0] sm:$0xff]
        %v289 = vld [vmem:[#allocation2 + $0xe8] sm:$0xff]
        %v290 = vld [vmem:[#allocation2 + $0xf0] sm:$0xff]
        %v291 = vld [vmem:[#allocation2 + $0xf8] sm:$0xff]
        %v292 = vpack.c.bf16 %v229, %v228
        %v293 = vpack.c.bf16 %v231, %v230
        %v294 = vpack.c.bf16 %v233, %v232
        %v295 = vpack.c.bf16 %v235, %v234
        %v296 = vpack.c.bf16 %v237, %v236
        %v297 = vpack.c.bf16 %v239, %v238
        %v298 = vpack.c.bf16 %v241, %v240
        %v299 = vpack.c.bf16 %v243, %v242
        %v300 = vpack.c.bf16 %v245, %v244
        %v301 = vpack.c.bf16 %v247, %v246
        %v302 = vpack.c.bf16 %v249, %v248
        %v303 = vpack.c.bf16 %v251, %v250
        %v304 = vpack.c.bf16 %v253, %v252
        %v305 = vpack.c.bf16 %v255, %v254
        %v306 = vpack.c.bf16 %v257, %v256
        %v307 = vpack.c.bf16 %v259, %v258
        %v308 = vld [vmem:[%s1] sm:$0xf]
        %v309 = vld [vmem:[%s1 + $0x4] sm:$0xf]
        %v310 = vld [vmem:[%s1 + $0x8] sm:$0xf]
        %v311 = vld [vmem:[%s1 + $0xc] sm:$0xf]
        %v312 = vld [vmem:[%s1 + $0x10] sm:$0xf]
        %v313 = vld [vmem:[%s1 + $0x14] sm:$0xf]
        %v314 = vld [vmem:[%s1 + $0x18] sm:$0xf]
        %v315 = vld [vmem:[%s1 + $0x1c] sm:$0xf]
        %v316 = vld [vmem:[%s1 + $0x20] sm:$0xf]
        %v317 = vld [vmem:[%s1 + $0x24] sm:$0xf]
        %v318 = vld [vmem:[%s1 + $0x28] sm:$0xf]
        %v319 = vld [vmem:[%s1 + $0x2c] sm:$0xf]
        %v320 = vld [vmem:[%s1 + $0x30] sm:$0xf]
        %v321 = vld [vmem:[%s1 + $0x34] sm:$0xf]
        %v322 = vld [vmem:[%s1 + $0x38] sm:$0xf]
        %v323 = vld [vmem:[%s1 + $0x3c] sm:$0xf]
        %v340 = vunpack.c.l.b16 %v308
        %v341 = vunpack.c.l.b16 %v309
        %v342 = vunpack.c.l.b16 %v310
        %v343 = vunpack.c.l.b16 %v311
        %v344 = vunpack.c.l.b16 %v312
        %v345 = vunpack.c.l.b16 %v313
        %v346 = vunpack.c.l.b16 %v314
        %v347 = vunpack.c.l.b16 %v315
        %v348 = vunpack.c.l.b16 %v316
        %v349 = vunpack.c.l.b16 %v317
        %v350 = vunpack.c.l.b16 %v318
        %v351 = vunpack.c.l.b16 %v319
        %v352 = vunpack.c.l.b16 %v320
        %v353 = vunpack.c.l.b16 %v321
        %v354 = vunpack.c.l.b16 %v322
        %v355 = vunpack.c.l.b16 %v323
        %v356 = vpack.c.b16 %v341, %v340
        %v357 = vpack.c.b16 %v343, %v342
        %v358 = vpack.c.b16 %v345, %v344
        %v359 = vpack.c.b16 %v347, %v346
        %v360 = vpack.c.b16 %v349, %v348
        %v361 = vpack.c.b16 %v351, %v350
        %v362 = vpack.c.b16 %v353, %v352
        %v363 = vpack.c.b16 %v355, %v354
        %372 = vmatpush.bf16.msra.mxu0 %v363
        %373 = vmatpush.bf16.msra.mxu0 %v362
        %374 = vmatpush.bf16.msra.mxu0 %v361
        %375 = vmatpush.bf16.msra.mxu0 %v360
        %376 = vmatpush.bf16.msra.mxu0 %v359
        %377 = vmatpush.bf16.msra.mxu0 %v358
        %378 = vmatpush.bf16.msra.mxu0 %v357
        %379 = vmatpush.bf16.msra.mxu0 %v356
        %380 = vmatmul.bf16.gmra.mxu0 %v292
        %v381 = vpop.f32.mrf.mxu0
        %v382 = vadd.f32 0.0, %v381
        %v383 = vpop.f32.mrf.mxu0
        %v384 = vadd.f32 0.0, %v383
        %385 = vmatmul.bf16.gmra.mxu0 %v293
        %v386 = vpop.f32.mrf.mxu0
        %v387 = vadd.f32 0.0, %v386
        %v388 = vpop.f32.mrf.mxu0
        %v389 = vadd.f32 0.0, %v388
        %390 = vmatmul.bf16.gmra.mxu0 %v294
        %v391 = vpop.f32.mrf.mxu0
        %v392 = vadd.f32 0.0, %v391
        %v393 = vpop.f32.mrf.mxu0
        %v394 = vadd.f32 0.0, %v393
        %395 = vmatmul.bf16.gmra.mxu0 %v295
        %v396 = vpop.f32.mrf.mxu0
        %v397 = vadd.f32 0.0, %v396
        %v398 = vpop.f32.mrf.mxu0
        %v399 = vadd.f32 0.0, %v398
        %400 = vmatmul.bf16.gmra.mxu0 %v296
        %v401 = vpop.f32.mrf.mxu0
        %v402 = vadd.f32 0.0, %v401
        %v403 = vpop.f32.mrf.mxu0
        %v404 = vadd.f32 0.0, %v403
        %405 = vmatmul.bf16.gmra.mxu0 %v297
        %v406 = vpop.f32.mrf.mxu0
        %v407 = vadd.f32 0.0, %v406
        %v408 = vpop.f32.mrf.mxu0
        %v409 = vadd.f32 0.0, %v408
        %410 = vmatmul.bf16.gmra.mxu0 %v298
        %v411 = vpop.f32.mrf.mxu0
        %v412 = vadd.f32 0.0, %v411
        %v413 = vpop.f32.mrf.mxu0
        %v414 = vadd.f32 0.0, %v413
        %415 = vmatmul.bf16.gmra.mxu0 %v299
        %v416 = vpop.f32.mrf.mxu0
        %v417 = vadd.f32 0.0, %v416
        %v418 = vpop.f32.mrf.mxu0
        %v419 = vadd.f32 0.0, %v418
        %420 = vmatmul.bf16.gmra.mxu0 %v300
        %v421 = vpop.f32.mrf.mxu0
        %v422 = vadd.f32 0.0, %v421
        %v423 = vpop.f32.mrf.mxu0
        %v424 = vadd.f32 0.0, %v423
        %425 = vmatmul.bf16.gmra.mxu0 %v301
        %v426 = vpop.f32.mrf.mxu0
        %v427 = vadd.f32 0.0, %v426
        %v428 = vpop.f32.mrf.mxu0
        %v429 = vadd.f32 0.0, %v428
        %430 = vmatmul.bf16.gmra.mxu0 %v302
        %v431 = vpop.f32.mrf.mxu0
        %v432 = vadd.f32 0.0, %v431
        %v433 = vpop.f32.mrf.mxu0
        %v434 = vadd.f32 0.0, %v433
        %435 = vmatmul.bf16.gmra.mxu0 %v303
        %v436 = vpop.f32.mrf.mxu0
        %v437 = vadd.f32 0.0, %v436
        %v438 = vpop.f32.mrf.mxu0
        %v439 = vadd.f32 0.0, %v438
        %440 = vmatmul.bf16.gmra.mxu0 %v304
        %v441 = vpop.f32.mrf.mxu0
        %v442 = vadd.f32 0.0, %v441
        %v443 = vpop.f32.mrf.mxu0
        %v444 = vadd.f32 0.0, %v443
        %445 = vmatmul.bf16.gmra.mxu0 %v305
        %v446 = vpop.f32.mrf.mxu0
        %v447 = vadd.f32 0.0, %v446
        %v448 = vpop.f32.mrf.mxu0
        %v449 = vadd.f32 0.0, %v448
        %450 = vmatmul.bf16.gmra.mxu0 %v306
        %v451 = vpop.f32.mrf.mxu0
        %v452 = vadd.f32 0.0, %v451
        %v453 = vpop.f32.mrf.mxu0
        %v454 = vadd.f32 0.0, %v453
        %455 = vmatmul.bf16.gmra.mxu0 %v307
        %v456 = vpop.f32.mrf.mxu0
        %v457 = vadd.f32 0.0, %v456
        %v458 = vpop.f32.mrf.mxu0
        %v459 = vadd.f32 0.0, %v458
        %460 = vdwg.mxu0
        %v461 = vadd.f32 %v260, %v382
        %v462 = vadd.f32 %v261, %v384
        %v463 = vadd.f32 %v262, %v387
        %v464 = vadd.f32 %v263, %v389
        %v465 = vadd.f32 %v264, %v392
        %v466 = vadd.f32 %v265, %v394
        %v467 = vadd.f32 %v266, %v397
        %v468 = vadd.f32 %v267, %v399
        %v469 = vadd.f32 %v268, %v402
        %v470 = vadd.f32 %v269, %v404
        %v471 = vadd.f32 %v270, %v407
        %v472 = vadd.f32 %v271, %v409
        %v473 = vadd.f32 %v272, %v412
        %v474 = vadd.f32 %v273, %v414
        %v475 = vadd.f32 %v274, %v417
        %v476 = vadd.f32 %v275, %v419
        %v477 = vadd.f32 %v276, %v422
        %v478 = vadd.f32 %v277, %v424
        %v479 = vadd.f32 %v278, %v427
        %v480 = vadd.f32 %v279, %v429
        %v481 = vadd.f32 %v280, %v432
        %v482 = vadd.f32 %v281, %v434
        %v483 = vadd.f32 %v282, %v437
        %v484 = vadd.f32 %v283, %v439
        %v485 = vadd.f32 %v284, %v442
        %v486 = vadd.f32 %v285, %v444
        %v487 = vadd.f32 %v286, %v447
        %v488 = vadd.f32 %v287, %v449
        %v489 = vadd.f32 %v288, %v452
        %v490 = vadd.f32 %v289, %v454
        %v491 = vadd.f32 %v290, %v457
        %v492 = vadd.f32 %v291, %v459
        %493 = vst [vmem:[#allocation2] sm:$0xff] %v461
        %494 = vst [vmem:[#allocation2 + $0x8] sm:$0xff] %v462
        %495 = vst [vmem:[#allocation2 + $0x10] sm:$0xff] %v463
        %496 = vst [vmem:[#allocation2 + $0x18] sm:$0xff] %v464
        %497 = vst [vmem:[#allocation2 + $0x20] sm:$0xff] %v465
        %498 = vst [vmem:[#allocation2 + $0x28] sm:$0xff] %v466
        %499 = vst [vmem:[#allocation2 + $0x30] sm:$0xff] %v467
        %500 = vst [vmem:[#allocation2 + $0x38] sm:$0xff] %v468
        %501 = vst [vmem:[#allocation2 + $0x40] sm:$0xff] %v469
        %502 = vst [vmem:[#allocation2 + $0x48] sm:$0xff] %v470
        %503 = vst [vmem:[#allocation2 + $0x50] sm:$0xff] %v471
        %504 = vst [vmem:[#allocation2 + $0x58] sm:$0xff] %v472
        %505 = vst [vmem:[#allocation2 + $0x60] sm:$0xff] %v473
        %506 = vst [vmem:[#allocation2 + $0x68] sm:$0xff] %v474
        %507 = vst [vmem:[#allocation2 + $0x70] sm:$0xff] %v475
        %508 = vst [vmem:[#allocation2 + $0x78] sm:$0xff] %v476
        %509 = vst [vmem:[#allocation2 + $0x80] sm:$0xff] %v477
        %510 = vst [vmem:[#allocation2 + $0x88] sm:$0xff] %v478
        %511 = vst [vmem:[#allocation2 + $0x90] sm:$0xff] %v479
        %512 = vst [vmem:[#allocation2 + $0x98] sm:$0xff] %v480
        %513 = vst [vmem:[#allocation2 + $0xa0] sm:$0xff] %v481
        %514 = vst [vmem:[#allocation2 + $0xa8] sm:$0xff] %v482
        %515 = vst [vmem:[#allocation2 + $0xb0] sm:$0xff] %v483
        %516 = vst [vmem:[#allocation2 + $0xb8] sm:$0xff] %v484
        %517 = vst [vmem:[#allocation2 + $0xc0] sm:$0xff] %v485
        %518 = vst [vmem:[#allocation2 + $0xc8] sm:$0xff] %v486
        %519 = vst [vmem:[#allocation2 + $0xd0] sm:$0xff] %v487
        %520 = vst [vmem:[#allocation2 + $0xd8] sm:$0xff] %v488
        %521 = vst [vmem:[#allocation2 + $0xe0] sm:$0xff] %v489
        %522 = vst [vmem:[#allocation2 + $0xe8] sm:$0xff] %v490
        %523 = vst [vmem:[#allocation2 + $0xf0] sm:$0xff] %v491
        %524 = vst [vmem:[#allocation2 + $0xf8] sm:$0xff] %v492
        %v525 = vld [vmem:[%s195 + $0x1] sm:$0xff]
        %v526 = vld [vmem:[%s195 + $0x9] sm:$0xff]
        %v527 = vld [vmem:[%s195 + $0x19] sm:$0xff]
        %v528 = vld [vmem:[%s195 + $0x21] sm:$0xff]
        %v529 = vld [vmem:[%s195 + $0x31] sm:$0xff]
        %v530 = vld [vmem:[%s195 + $0x39] sm:$0xff]
        %v531 = vld [vmem:[%s195 + $0x49] sm:$0xff]
        %v532 = vld [vmem:[%s195 + $0x51] sm:$0xff]
        %v533 = vld [vmem:[%s195 + $0x61] sm:$0xff]
        %v534 = vld [vmem:[%s195 + $0x69] sm:$0xff]
        %v535 = vld [vmem:[%s195 + $0x79] sm:$0xff]
        %v536 = vld [vmem:[%s195 + $0x81] sm:$0xff]
        %v537 = vld [vmem:[%s195 + $0x91] sm:$0xff]
        %v538 = vld [vmem:[%s195 + $0x99] sm:$0xff]
        %v539 = vld [vmem:[%s195 + $0xa9] sm:$0xff]
        %v540 = vld [vmem:[%s195 + $0xb1] sm:$0xff]
        %v541 = vld [vmem:[%s195 + $0xc1] sm:$0xff]
        %v542 = vld [vmem:[%s195 + $0xc9] sm:$0xff]
        %v543 = vld [vmem:[%s195 + $0xd9] sm:$0xff]
        %v544 = vld [vmem:[%s195 + $0xe1] sm:$0xff]
        %v545 = vld [vmem:[%s195 + $0xf1] sm:$0xff]
        %v546 = vld [vmem:[%s195 + $0xf9] sm:$0xff]
        %v547 = vld [vmem:[%s195 + $0x109] sm:$0xff]
        %v548 = vld [vmem:[%s195 + $0x111] sm:$0xff]
        %v549 = vld [vmem:[%s195 + $0x121] sm:$0xff]
        %v550 = vld [vmem:[%s195 + $0x129] sm:$0xff]
        %v551 = vld [vmem:[%s195 + $0x139] sm:$0xff]
        %v552 = vld [vmem:[%s195 + $0x141] sm:$0xff]
        %v553 = vld [vmem:[%s195 + $0x151] sm:$0xff]
        %v554 = vld [vmem:[%s195 + $0x159] sm:$0xff]
        %v555 = vld [vmem:[%s195 + $0x169] sm:$0xff]
        %v556 = vld [vmem:[%s195 + $0x171] sm:$0xff]
        %v557 = vld [vmem:[#allocation2] sm:$0xff]
        %v558 = vld [vmem:[#allocation2 + $0x8] sm:$0xff]
        %v559 = vld [vmem:[#allocation2 + $0x10] sm:$0xff]
        %v560 = vld [vmem:[#allocation2 + $0x18] sm:$0xff]
        %v561 = vld [vmem:[#allocation2 + $0x20] sm:$0xff]
        %v562 = vld [vmem:[#allocation2 + $0x28] sm:$0xff]
        %v563 = vld [vmem:[#allocation2 + $0x30] sm:$0xff]
        %v564 = vld [vmem:[#allocation2 + $0x38] sm:$0xff]
        %v565 = vld [vmem:[#allocation2 + $0x40] sm:$0xff]
        %v566 = vld [vmem:[#allocation2 + $0x48] sm:$0xff]
        %v567 = vld [vmem:[#allocation2 + $0x50] sm:$0xff]
        %v568 = vld [vmem:[#allocation2 + $0x58] sm:$0xff]
        %v569 = vld [vmem:[#allocation2 + $0x60] sm:$0xff]
        %v570 = vld [vmem:[#allocation2 + $0x68] sm:$0xff]
        %v571 = vld [vmem:[#allocation2 + $0x70] sm:$0xff]
        %v572 = vld [vmem:[#allocation2 + $0x78] sm:$0xff]
        %v573 = vld [vmem:[#allocation2 + $0x80] sm:$0xff]
        %v574 = vld [vmem:[#allocation2 + $0x88] sm:$0xff]
        %v575 = vld [vmem:[#allocation2 + $0x90] sm:$0xff]
        %v576 = vld [vmem:[#allocation2 + $0x98] sm:$0xff]
        %v577 = vld [vmem:[#allocation2 + $0xa0] sm:$0xff]
        %v578 = vld [vmem:[#allocation2 + $0xa8] sm:$0xff]
        %v579 = vld [vmem:[#allocation2 + $0xb0] sm:$0xff]
        %v580 = vld [vmem:[#allocation2 + $0xb8] sm:$0xff]
        %v581 = vld [vmem:[#allocation2 + $0xc0] sm:$0xff]
        %v582 = vld [vmem:[#allocation2 + $0xc8] sm:$0xff]
        %v583 = vld [vmem:[#allocation2 + $0xd0] sm:$0xff]
        %v584 = vld [vmem:[#allocation2 + $0xd8] sm:$0xff]
        %v585 = vld [vmem:[#allocation2 + $0xe0] sm:$0xff]
        %v586 = vld [vmem:[#allocation2 + $0xe8] sm:$0xff]
        %v587 = vld [vmem:[#allocation2 + $0xf0] sm:$0xff]
        %v588 = vld [vmem:[#allocation2 + $0xf8] sm:$0xff]
        %v589 = vpack.c.bf16 %v526, %v525
        %v590 = vpack.c.bf16 %v528, %v527
        %v591 = vpack.c.bf16 %v530, %v529
        %v592 = vpack.c.bf16 %v532, %v531
        %v593 = vpack.c.bf16 %v534, %v533
        %v594 = vpack.c.bf16 %v536, %v535
        %v595 = vpack.c.bf16 %v538, %v537
        %v596 = vpack.c.bf16 %v540, %v539
        %v597 = vpack.c.bf16 %v542, %v541
        %v598 = vpack.c.bf16 %v544, %v543
        %v599 = vpack.c.bf16 %v546, %v545
        %v600 = vpack.c.bf16 %v548, %v547
        %v601 = vpack.c.bf16 %v550, %v549
        %v602 = vpack.c.bf16 %v552, %v551
        %v603 = vpack.c.bf16 %v554, %v553
        %v604 = vpack.c.bf16 %v556, %v555
        %s605 = scalar_lea.vmem %s1, 64
        %v606 = vld [vmem:[%s605] sm:$0xf]
        %v607 = vld [vmem:[%s605 + $0x4] sm:$0xf]
        %v608 = vld [vmem:[%s605 + $0x8] sm:$0xf]
        %v609 = vld [vmem:[%s605 + $0xc] sm:$0xf]
        %v610 = vld [vmem:[%s605 + $0x10] sm:$0xf]
        %v611 = vld [vmem:[%s605 + $0x14] sm:$0xf]
        %v612 = vld [vmem:[%s605 + $0x18] sm:$0xf]
        %v613 = vld [vmem:[%s605 + $0x1c] sm:$0xf]
        %v614 = vld [vmem:[%s605 + $0x20] sm:$0xf]
        %v615 = vld [vmem:[%s605 + $0x24] sm:$0xf]
        %v616 = vld [vmem:[%s605 + $0x28] sm:$0xf]
        %v617 = vld [vmem:[%s605 + $0x2c] sm:$0xf]
        %v618 = vld [vmem:[%s605 + $0x30] sm:$0xf]
        %v619 = vld [vmem:[%s605 + $0x34] sm:$0xf]
        %v620 = vld [vmem:[%s605 + $0x38] sm:$0xf]
        %v621 = vld [vmem:[%s605 + $0x3c] sm:$0xf]
        %v638 = vunpack.c.l.b16 %v606
        %v639 = vunpack.c.l.b16 %v607
        %v640 = vunpack.c.l.b16 %v608
        %v641 = vunpack.c.l.b16 %v609
        %v642 = vunpack.c.l.b16 %v610
        %v643 = vunpack.c.l.b16 %v611
        %v644 = vunpack.c.l.b16 %v612
        %v645 = vunpack.c.l.b16 %v613
        %v646 = vunpack.c.l.b16 %v614
        %v647 = vunpack.c.l.b16 %v615
        %v648 = vunpack.c.l.b16 %v616
        %v649 = vunpack.c.l.b16 %v617
        %v650 = vunpack.c.l.b16 %v618
        %v651 = vunpack.c.l.b16 %v619
        %v652 = vunpack.c.l.b16 %v620
        %v653 = vunpack.c.l.b16 %v621
        %v654 = vpack.c.b16 %v639, %v638
        %v655 = vpack.c.b16 %v641, %v640
        %v656 = vpack.c.b16 %v643, %v642
        %v657 = vpack.c.b16 %v645, %v644
        %v658 = vpack.c.b16 %v647, %v646
        %v659 = vpack.c.b16 %v649, %v648
        %v660 = vpack.c.b16 %v651, %v650
        %v661 = vpack.c.b16 %v653, %v652
        %670 = vmatpush.bf16.msra.mxu0 %v661
        %671 = vmatpush.bf16.msra.mxu0 %v660
        %672 = vmatpush.bf16.msra.mxu0 %v659
        %673 = vmatpush.bf16.msra.mxu0 %v658
        %674 = vmatpush.bf16.msra.mxu0 %v657
        %675 = vmatpush.bf16.msra.mxu0 %v656
        %676 = vmatpush.bf16.msra.mxu0 %v655
        %677 = vmatpush.bf16.msra.mxu0 %v654
        %678 = vmatmul.bf16.gmra.mxu0 %v589
        %v679 = vpop.f32.mrf.mxu0
        %v680 = vadd.f32 0.0, %v679
        %v681 = vpop.f32.mrf.mxu0
        %v682 = vadd.f32 0.0, %v681
        %683 = vmatmul.bf16.gmra.mxu0 %v590
        %v684 = vpop.f32.mrf.mxu0
        %v685 = vadd.f32 0.0, %v684
        %v686 = vpop.f32.mrf.mxu0
        %v687 = vadd.f32 0.0, %v686
        %688 = vmatmul.bf16.gmra.mxu0 %v591
        %v689 = vpop.f32.mrf.mxu0
        %v690 = vadd.f32 0.0, %v689
        %v691 = vpop.f32.mrf.mxu0
        %v692 = vadd.f32 0.0, %v691
        %693 = vmatmul.bf16.gmra.mxu0 %v592
        %v694 = vpop.f32.mrf.mxu0
        %v695 = vadd.f32 0.0, %v694
        %v696 = vpop.f32.mrf.mxu0
        %v697 = vadd.f32 0.0, %v696
        %698 = vmatmul.bf16.gmra.mxu0 %v593
        %v699 = vpop.f32.mrf.mxu0
        %v700 = vadd.f32 0.0, %v699
        %v701 = vpop.f32.mrf.mxu0
        %v702 = vadd.f32 0.0, %v701
        %703 = vmatmul.bf16.gmra.mxu0 %v594
        %v704 = vpop.f32.mrf.mxu0
        %v705 = vadd.f32 0.0, %v704
        %v706 = vpop.f32.mrf.mxu0
        %v707 = vadd.f32 0.0, %v706
        %708 = vmatmul.bf16.gmra.mxu0 %v595
        %v709 = vpop.f32.mrf.mxu0
        %v710 = vadd.f32 0.0, %v709
        %v711 = vpop.f32.mrf.mxu0
        %v712 = vadd.f32 0.0, %v711
        %713 = vmatmul.bf16.gmra.mxu0 %v596
        %v714 = vpop.f32.mrf.mxu0
        %v715 = vadd.f32 0.0, %v714
        %v716 = vpop.f32.mrf.mxu0
        %v717 = vadd.f32 0.0, %v716
        %718 = vmatmul.bf16.gmra.mxu0 %v597
        %v719 = vpop.f32.mrf.mxu0
        %v720 = vadd.f32 0.0, %v719
        %v721 = vpop.f32.mrf.mxu0
        %v722 = vadd.f32 0.0, %v721
        %723 = vmatmul.bf16.gmra.mxu0 %v598
        %v724 = vpop.f32.mrf.mxu0
        %v725 = vadd.f32 0.0, %v724
        %v726 = vpop.f32.mrf.mxu0
        %v727 = vadd.f32 0.0, %v726
        %728 = vmatmul.bf16.gmra.mxu0 %v599
        %v729 = vpop.f32.mrf.mxu0
        %v730 = vadd.f32 0.0, %v729
        %v731 = vpop.f32.mrf.mxu0
        %v732 = vadd.f32 0.0, %v731
        %733 = vmatmul.bf16.gmra.mxu0 %v600
        %v734 = vpop.f32.mrf.mxu0
        %v735 = vadd.f32 0.0, %v734
        %v736 = vpop.f32.mrf.mxu0
        %v737 = vadd.f32 0.0, %v736
        %738 = vmatmul.bf16.gmra.mxu0 %v601
        %v739 = vpop.f32.mrf.mxu0
        %v740 = vadd.f32 0.0, %v739
        %v741 = vpop.f32.mrf.mxu0
        %v742 = vadd.f32 0.0, %v741
        %743 = vmatmul.bf16.gmra.mxu0 %v602
        %v744 = vpop.f32.mrf.mxu0
        %v745 = vadd.f32 0.0, %v744
        %v746 = vpop.f32.mrf.mxu0
        %v747 = vadd.f32 0.0, %v746
        %748 = vmatmul.bf16.gmra.mxu0 %v603
        %v749 = vpop.f32.mrf.mxu0
        %v750 = vadd.f32 0.0, %v749
        %v751 = vpop.f32.mrf.mxu0
        %v752 = vadd.f32 0.0, %v751
        %753 = vmatmul.bf16.gmra.mxu0 %v604
        %v754 = vpop.f32.mrf.mxu0
        %v755 = vadd.f32 0.0, %v754
        %v756 = vpop.f32.mrf.mxu0
        %v757 = vadd.f32 0.0, %v756
        %758 = vdwg.mxu0
        %v759 = vadd.f32 %v557, %v680
        %v760 = vadd.f32 %v558, %v682
        %v761 = vadd.f32 %v559, %v685
        %v762 = vadd.f32 %v560, %v687
        %v763 = vadd.f32 %v561, %v690
        %v764 = vadd.f32 %v562, %v692
        %v765 = vadd.f32 %v563, %v695
        %v766 = vadd.f32 %v564, %v697
        %v767 = vadd.f32 %v565, %v700
        %v768 = vadd.f32 %v566, %v702
        %v769 = vadd.f32 %v567, %v705
        %v770 = vadd.f32 %v568, %v707
        %v771 = vadd.f32 %v569, %v710
        %v772 = vadd.f32 %v570, %v712
        %v773 = vadd.f32 %v571, %v715
        %v774 = vadd.f32 %v572, %v717
        %v775 = vadd.f32 %v573, %v720
        %v776 = vadd.f32 %v574, %v722
        %v777 = vadd.f32 %v575, %v725
        %v778 = vadd.f32 %v576, %v727
        %v779 = vadd.f32 %v577, %v730
        %v780 = vadd.f32 %v578, %v732
        %v781 = vadd.f32 %v579, %v735
        %v782 = vadd.f32 %v580, %v737
        %v783 = vadd.f32 %v581, %v740
        %v784 = vadd.f32 %v582, %v742
        %v785 = vadd.f32 %v583, %v745
        %v786 = vadd.f32 %v584, %v747
        %v787 = vadd.f32 %v585, %v750
        %v788 = vadd.f32 %v586, %v752
        %v789 = vadd.f32 %v587, %v755
        %v790 = vadd.f32 %v588, %v757
        %791 = vst [vmem:[#allocation2] sm:$0xff] %v759
        %792 = vst [vmem:[#allocation2 + $0x8] sm:$0xff] %v760
        %793 = vst [vmem:[#allocation2 + $0x10] sm:$0xff] %v761
        %794 = vst [vmem:[#allocation2 + $0x18] sm:$0xff] %v762
        %795 = vst [vmem:[#allocation2 + $0x20] sm:$0xff] %v763
        %796 = vst [vmem:[#allocation2 + $0x28] sm:$0xff] %v764
        %797 = vst [vmem:[#allocation2 + $0x30] sm:$0xff] %v765
        %798 = vst [vmem:[#allocation2 + $0x38] sm:$0xff] %v766
        %799 = vst [vmem:[#allocation2 + $0x40] sm:$0xff] %v767
        %800 = vst [vmem:[#allocation2 + $0x48] sm:$0xff] %v768
        %801 = vst [vmem:[#allocation2 + $0x50] sm:$0xff] %v769
        %802 = vst [vmem:[#allocation2 + $0x58] sm:$0xff] %v770
        %803 = vst [vmem:[#allocation2 + $0x60] sm:$0xff] %v771
        %804 = vst [vmem:[#allocation2 + $0x68] sm:$0xff] %v772
        %805 = vst [vmem:[#allocation2 + $0x70] sm:$0xff] %v773
        %806 = vst [vmem:[#allocation2 + $0x78] sm:$0xff] %v774
        %807 = vst [vmem:[#allocation2 + $0x80] sm:$0xff] %v775
        %808 = vst [vmem:[#allocation2 + $0x88] sm:$0xff] %v776
        %809 = vst [vmem:[#allocation2 + $0x90] sm:$0xff] %v777
        %810 = vst [vmem:[#allocation2 + $0x98] sm:$0xff] %v778
        %811 = vst [vmem:[#allocation2 + $0xa0] sm:$0xff] %v779
        %812 = vst [vmem:[#allocation2 + $0xa8] sm:$0xff] %v780
        %813 = vst [vmem:[#allocation2 + $0xb0] sm:$0xff] %v781
        %814 = vst [vmem:[#allocation2 + $0xb8] sm:$0xff] %v782
        %815 = vst [vmem:[#allocation2 + $0xc0] sm:$0xff] %v783
        %816 = vst [vmem:[#allocation2 + $0xc8] sm:$0xff] %v784
        %817 = vst [vmem:[#allocation2 + $0xd0] sm:$0xff] %v785
        %818 = vst [vmem:[#allocation2 + $0xd8] sm:$0xff] %v786
        %819 = vst [vmem:[#allocation2 + $0xe0] sm:$0xff] %v787
        %820 = vst [vmem:[#allocation2 + $0xe8] sm:$0xff] %v788
        %821 = vst [vmem:[#allocation2 + $0xf0] sm:$0xff] %v789
        %822 = vst [vmem:[#allocation2 + $0xf8] sm:$0xff] %v790
        %v823 = vld [vmem:[%s195 + $0x2] sm:$0xff]
        %v824 = vld [vmem:[%s195 + $0xa] sm:$0xff]
        %v825 = vld [vmem:[%s195 + $0x1a] sm:$0xff]
        %v826 = vld [vmem:[%s195 + $0x22] sm:$0xff]
        %v827 = vld [vmem:[%s195 + $0x32] sm:$0xff]
        %v828 = vld [vmem:[%s195 + $0x3a] sm:$0xff]
        %v829 = vld [vmem:[%s195 + $0x4a] sm:$0xff]
        %v830 = vld [vmem:[%s195 + $0x52] sm:$0xff]
        %v831 = vld [vmem:[%s195 + $0x62] sm:$0xff]
        %v832 = vld [vmem:[%s195 + $0x6a] sm:$0xff]
        %v833 = vld [vmem:[%s195 + $0x7a] sm:$0xff]
        %v834 = vld [vmem:[%s195 + $0x82] sm:$0xff]
        %v835 = vld [vmem:[%s195 + $0x92] sm:$0xff]
        %v836 = vld [vmem:[%s195 + $0x9a] sm:$0xff]
        %v837 = vld [vmem:[%s195 + $0xaa] sm:$0xff]
        %v838 = vld [vmem:[%s195 + $0xb2] sm:$0xff]
        %v839 = vld [vmem:[%s195 + $0xc2] sm:$0xff]
        %v840 = vld [vmem:[%s195 + $0xca] sm:$0xff]
        %v841 = vld [vmem:[%s195 + $0xda] sm:$0xff]
        %v842 = vld [vmem:[%s195 + $0xe2] sm:$0xff]
        %v843 = vld [vmem:[%s195 + $0xf2] sm:$0xff]
        %v844 = vld [vmem:[%s195 + $0xfa] sm:$0xff]
        %v845 = vld [vmem:[%s195 + $0x10a] sm:$0xff]
        %v846 = vld [vmem:[%s195 + $0x112] sm:$0xff]
        %v847 = vld [vmem:[%s195 + $0x122] sm:$0xff]
        %v848 = vld [vmem:[%s195 + $0x12a] sm:$0xff]
        %v849 = vld [vmem:[%s195 + $0x13a] sm:$0xff]
        %v850 = vld [vmem:[%s195 + $0x142] sm:$0xff]
        %v851 = vld [vmem:[%s195 + $0x152] sm:$0xff]
        %v852 = vld [vmem:[%s195 + $0x15a] sm:$0xff]
        %v853 = vld [vmem:[%s195 + $0x16a] sm:$0xff]
        %v854 = vld [vmem:[%s195 + $0x172] sm:$0xff]
        %v855 = vld [vmem:[#allocation2] sm:$0xff]
        %v856 = vld [vmem:[#allocation2 + $0x8] sm:$0xff]
        %v857 = vld [vmem:[#allocation2 + $0x10] sm:$0xff]
        %v858 = vld [vmem:[#allocation2 + $0x18] sm:$0xff]
        %v859 = vld [vmem:[#allocation2 + $0x20] sm:$0xff]
        %v860 = vld [vmem:[#allocation2 + $0x28] sm:$0xff]
        %v861 = vld [vmem:[#allocation2 + $0x30] sm:$0xff]
        %v862 = vld [vmem:[#allocation2 + $0x38] sm:$0xff]
        %v863 = vld [vmem:[#allocation2 + $0x40] sm:$0xff]
        %v864 = vld [vmem:[#allocation2 + $0x48] sm:$0xff]
        %v865 = vld [vmem:[#allocation2 + $0x50] sm:$0xff]
        %v866 = vld [vmem:[#allocation2 + $0x58] sm:$0xff]
        %v867 = vld [vmem:[#allocation2 + $0x60] sm:$0xff]
        %v868 = vld [vmem:[#allocation2 + $0x68] sm:$0xff]
        %v869 = vld [vmem:[#allocation2 + $0x70] sm:$0xff]
        %v870 = vld [vmem:[#allocation2 + $0x78] sm:$0xff]
        %v871 = vld [vmem:[#allocation2 + $0x80] sm:$0xff]
        %v872 = vld [vmem:[#allocation2 + $0x88] sm:$0xff]
        %v873 = vld [vmem:[#allocation2 + $0x90] sm:$0xff]
        %v874 = vld [vmem:[#allocation2 + $0x98] sm:$0xff]
        %v875 = vld [vmem:[#allocation2 + $0xa0] sm:$0xff]
        %v876 = vld [vmem:[#allocation2 + $0xa8] sm:$0xff]
        %v877 = vld [vmem:[#allocation2 + $0xb0] sm:$0xff]
        %v878 = vld [vmem:[#allocation2 + $0xb8] sm:$0xff]
        %v879 = vld [vmem:[#allocation2 + $0xc0] sm:$0xff]
        %v880 = vld [vmem:[#allocation2 + $0xc8] sm:$0xff]
        %v881 = vld [vmem:[#allocation2 + $0xd0] sm:$0xff]
        %v882 = vld [vmem:[#allocation2 + $0xd8] sm:$0xff]
        %v883 = vld [vmem:[#allocation2 + $0xe0] sm:$0xff]
        %v884 = vld [vmem:[#allocation2 + $0xe8] sm:$0xff]
        %v885 = vld [vmem:[#allocation2 + $0xf0] sm:$0xff]
        %v886 = vld [vmem:[#allocation2 + $0xf8] sm:$0xff]
        %v887 = vpack.c.bf16 %v824, %v823
        %v888 = vpack.c.bf16 %v826, %v825
        %v889 = vpack.c.bf16 %v828, %v827
        %v890 = vpack.c.bf16 %v830, %v829
        %v891 = vpack.c.bf16 %v832, %v831
        %v892 = vpack.c.bf16 %v834, %v833
        %v893 = vpack.c.bf16 %v836, %v835
        %v894 = vpack.c.bf16 %v838, %v837
        %v895 = vpack.c.bf16 %v840, %v839
        %v896 = vpack.c.bf16 %v842, %v841
        %v897 = vpack.c.bf16 %v844, %v843
        %v898 = vpack.c.bf16 %v846, %v845
        %v899 = vpack.c.bf16 %v848, %v847
        %v900 = vpack.c.bf16 %v850, %v849
        %v901 = vpack.c.bf16 %v852, %v851
        %v902 = vpack.c.bf16 %v854, %v853
        %s903 = scalar_lea.vmem %s1, 128
        %v904 = vld [vmem:[%s903] sm:$0xf]
        %v905 = vld [vmem:[%s903 + $0x4] sm:$0xf]
        %v906 = vld [vmem:[%s903 + $0x8] sm:$0xf]
        %v907 = vld [vmem:[%s903 + $0xc] sm:$0xf]
        %v908 = vld [vmem:[%s903 + $0x10] sm:$0xf]
        %v909 = vld [vmem:[%s903 + $0x14] sm:$0xf]
        %v910 = vld [vmem:[%s903 + $0x18] sm:$0xf]
        %v911 = vld [vmem:[%s903 + $0x1c] sm:$0xf]
        %v912 = vld [vmem:[%s903 + $0x20] sm:$0xf]
        %v913 = vld [vmem:[%s903 + $0x24] sm:$0xf]
        %v914 = vld [vmem:[%s903 + $0x28] sm:$0xf]
        %v915 = vld [vmem:[%s903 + $0x2c] sm:$0xf]
        %v916 = vld [vmem:[%s903 + $0x30] sm:$0xf]
        %v917 = vld [vmem:[%s903 + $0x34] sm:$0xf]
        %v918 = vld [vmem:[%s903 + $0x38] sm:$0xf]
        %v919 = vld [vmem:[%s903 + $0x3c] sm:$0xf]
        %v936 = vunpack.c.l.b16 %v904
        %v937 = vunpack.c.l.b16 %v905
        %v938 = vunpack.c.l.b16 %v906
        %v939 = vunpack.c.l.b16 %v907
        %v940 = vunpack.c.l.b16 %v908
        %v941 = vunpack.c.l.b16 %v909
        %v942 = vunpack.c.l.b16 %v910
        %v943 = vunpack.c.l.b16 %v911
        %v944 = vunpack.c.l.b16 %v912
        %v945 = vunpack.c.l.b16 %v913
        %v946 = vunpack.c.l.b16 %v914
        %v947 = vunpack.c.l.b16 %v915
        %v948 = vunpack.c.l.b16 %v916
        %v949 = vunpack.c.l.b16 %v917
        %v950 = vunpack.c.l.b16 %v918
        %v951 = vunpack.c.l.b16 %v919
        %v952 = vpack.c.b16 %v937, %v936
        %v953 = vpack.c.b16 %v939, %v938
        %v954 = vpack.c.b16 %v941, %v940
        %v955 = vpack.c.b16 %v943, %v942
        %v956 = vpack.c.b16 %v945, %v944
        %v957 = vpack.c.b16 %v947, %v946
        %v958 = vpack.c.b16 %v949, %v948
        %v959 = vpack.c.b16 %v951, %v950
        %968 = vmatpush.bf16.msra.mxu0 %v959
        %969 = vmatpush.bf16.msra.mxu0 %v958
        %970 = vmatpush.bf16.msra.mxu0 %v957
        %971 = vmatpush.bf16.msra.mxu0 %v956
        %972 = vmatpush.bf16.msra.mxu0 %v955
        %973 = vmatpush.bf16.msra.mxu0 %v954
        %974 = vmatpush.bf16.msra.mxu0 %v953
        %975 = vmatpush.bf16.msra.mxu0 %v952
        %976 = vmatmul.bf16.gmra.mxu0 %v887
        %v977 = vpop.f32.mrf.mxu0
        %v978 = vadd.f32 0.0, %v977
        %v979 = vpop.f32.mrf.mxu0
        %v980 = vadd.f32 0.0, %v979
        %981 = vmatmul.bf16.gmra.mxu0 %v888
        %v982 = vpop.f32.mrf.mxu0
        %v983 = vadd.f32 0.0, %v982
        %v984 = vpop.f32.mrf.mxu0
        %v985 = vadd.f32 0.0, %v984
        %986 = vmatmul.bf16.gmra.mxu0 %v889
        %v987 = vpop.f32.mrf.mxu0
        %v988 = vadd.f32 0.0, %v987
        %v989 = vpop.f32.mrf.mxu0
        %v990 = vadd.f32 0.0, %v989
        %991 = vmatmul.bf16.gmra.mxu0 %v890
        %v992 = vpop.f32.mrf.mxu0
        %v993 = vadd.f32 0.0, %v992
        %v994 = vpop.f32.mrf.mxu0
        %v995 = vadd.f32 0.0, %v994
        %996 = vmatmul.bf16.gmra.mxu0 %v891
        %v997 = vpop.f32.mrf.mxu0
        %v998 = vadd.f32 0.0, %v997
        %v999 = vpop.f32.mrf.mxu0
        %v1000 = vadd.f32 0.0, %v999
        %1001 = vmatmul.bf16.gmra.mxu0 %v892
        %v1002 = vpop.f32.mrf.mxu0
        %v1003 = vadd.f32 0.0, %v1002
        %v1004 = vpop.f32.mrf.mxu0
        %v1005 = vadd.f32 0.0, %v1004
        %1006 = vmatmul.bf16.gmra.mxu0 %v893
        %v1007 = vpop.f32.mrf.mxu0
        %v1008 = vadd.f32 0.0, %v1007
        %v1009 = vpop.f32.mrf.mxu0
        %v1010 = vadd.f32 0.0, %v1009
        %1011 = vmatmul.bf16.gmra.mxu0 %v894
        %v1012 = vpop.f32.mrf.mxu0
        %v1013 = vadd.f32 0.0, %v1012
        %v1014 = vpop.f32.mrf.mxu0
        %v1015 = vadd.f32 0.0, %v1014
        %1016 = vmatmul.bf16.gmra.mxu0 %v895
        %v1017 = vpop.f32.mrf.mxu0
        %v1018 = vadd.f32 0.0, %v1017
        %v1019 = vpop.f32.mrf.mxu0
        %v1020 = vadd.f32 0.0, %v1019
        %1021 = vmatmul.bf16.gmra.mxu0 %v896
        %v1022 = vpop.f32.mrf.mxu0
        %v1023 = vadd.f32 0.0, %v1022
        %v1024 = vpop.f32.mrf.mxu0
        %v1025 = vadd.f32 0.0, %v1024
        %1026 = vmatmul.bf16.gmra.mxu0 %v897
        %v1027 = vpop.f32.mrf.mxu0
        %v1028 = vadd.f32 0.0, %v1027
        %v1029 = vpop.f32.mrf.mxu0
        %v1030 = vadd.f32 0.0, %v1029
        %1031 = vmatmul.bf16.gmra.mxu0 %v898
        %v1032 = vpop.f32.mrf.mxu0
        %v1033 = vadd.f32 0.0, %v1032
        %v1034 = vpop.f32.mrf.mxu0
        %v1035 = vadd.f32 0.0, %v1034
        %1036 = vmatmul.bf16.gmra.mxu0 %v899
        %v1037 = vpop.f32.mrf.mxu0
        %v1038 = vadd.f32 0.0, %v1037
        %v1039 = vpop.f32.mrf.mxu0
        %v1040 = vadd.f32 0.0, %v1039
        %1041 = vmatmul.bf16.gmra.mxu0 %v900
        %v1042 = vpop.f32.mrf.mxu0
        %v1043 = vadd.f32 0.0, %v1042
        %v1044 = vpop.f32.mrf.mxu0
        %v1045 = vadd.f32 0.0, %v1044
        %1046 = vmatmul.bf16.gmra.mxu0 %v901
        %v1047 = vpop.f32.mrf.mxu0
        %v1048 = vadd.f32 0.0, %v1047
        %v1049 = vpop.f32.mrf.mxu0
        %v1050 = vadd.f32 0.0, %v1049
        %1051 = vmatmul.bf16.gmra.mxu0 %v902
        %v1052 = vpop.f32.mrf.mxu0
        %v1053 = vadd.f32 0.0, %v1052
        %v1054 = vpop.f32.mrf.mxu0
        %v1055 = vadd.f32 0.0, %v1054
        %1056 = vdwg.mxu0
        %v1057 = vadd.f32 %v855, %v978
        %v1058 = vadd.f32 %v856, %v980
        %v1059 = vadd.f32 %v857, %v983
        %v1060 = vadd.f32 %v858, %v985
        %v1061 = vadd.f32 %v859, %v988
        %v1062 = vadd.f32 %v860, %v990
        %v1063 = vadd.f32 %v861, %v993
        %v1064 = vadd.f32 %v862, %v995
        %v1065 = vadd.f32 %v863, %v998
        %v1066 = vadd.f32 %v864, %v1000
        %v1067 = vadd.f32 %v865, %v1003
        %v1068 = vadd.f32 %v866, %v1005
        %v1069 = vadd.f32 %v867, %v1008
        %v1070 = vadd.f32 %v868, %v1010
        %v1071 = vadd.f32 %v869, %v1013
        %v1072 = vadd.f32 %v870, %v1015
        %v1073 = vadd.f32 %v871, %v1018
        %v1074 = vadd.f32 %v872, %v1020
        %v1075 = vadd.f32 %v873, %v1023
        %v1076 = vadd.f32 %v874, %v1025
        %v1077 = vadd.f32 %v875, %v1028
        %v1078 = vadd.f32 %v876, %v1030
        %v1079 = vadd.f32 %v877, %v1033
        %v1080 = vadd.f32 %v878, %v1035
        %v1081 = vadd.f32 %v879, %v1038
        %v1082 = vadd.f32 %v880, %v1040
        %v1083 = vadd.f32 %v881, %v1043
        %v1084 = vadd.f32 %v882, %v1045
        %v1085 = vadd.f32 %v883, %v1048
        %v1086 = vadd.f32 %v884, %v1050
        %v1087 = vadd.f32 %v885, %v1053
        %v1088 = vadd.f32 %v886, %v1055
        %1089 = vst [vmem:[#allocation2] sm:$0xff] %v1057
        %1090 = vst [vmem:[#allocation2 + $0x8] sm:$0xff] %v1058
        %1091 = vst [vmem:[#allocation2 + $0x10] sm:$0xff] %v1059
        %1092 = vst [vmem:[#allocation2 + $0x18] sm:$0xff] %v1060
        %1093 = vst [vmem:[#allocation2 + $0x20] sm:$0xff] %v1061
        %1094 = vst [vmem:[#allocation2 + $0x28] sm:$0xff] %v1062
        %1095 = vst [vmem:[#allocation2 + $0x30] sm:$0xff] %v1063
        %1096 = vst [vmem:[#allocation2 + $0x38] sm:$0xff] %v1064
        %1097 = vst [vmem:[#allocation2 + $0x40] sm:$0xff] %v1065
        %1098 = vst [vmem:[#allocation2 + $0x48] sm:$0xff] %v1066
        %1099 = vst [vmem:[#allocation2 + $0x50] sm:$0xff] %v1067
        %1100 = vst [vmem:[#allocation2 + $0x58] sm:$0xff] %v1068
        %1101 = vst [vmem:[#allocation2 + $0x60] sm:$0xff] %v1069
        %1102 = vst [vmem:[#allocation2 + $0x68] sm:$0xff] %v1070
        %1103 = vst [vmem:[#allocation2 + $0x70] sm:$0xff] %v1071
        %1104 = vst [vmem:[#allocation2 + $0x78] sm:$0xff] %v1072
        %1105 = vst [vmem:[#allocation2 + $0x80] sm:$0xff] %v1073
        %1106 = vst [vmem:[#allocation2 + $0x88] sm:$0xff] %v1074
        %1107 = vst [vmem:[#allocation2 + $0x90] sm:$0xff] %v1075
        %1108 = vst [vmem:[#allocation2 + $0x98] sm:$0xff] %v1076
        %1109 = vst [vmem:[#allocation2 + $0xa0] sm:$0xff] %v1077
        %1110 = vst [vmem:[#allocation2 + $0xa8] sm:$0xff] %v1078
        %1111 = vst [vmem:[#allocation2 + $0xb0] sm:$0xff] %v1079
        %1112 = vst [vmem:[#allocation2 + $0xb8] sm:$0xff] %v1080
        %1113 = vst [vmem:[#allocation2 + $0xc0] sm:$0xff] %v1081
        %1114 = vst [vmem:[#allocation2 + $0xc8] sm:$0xff] %v1082
        %1115 = vst [vmem:[#allocation2 + $0xd0] sm:$0xff] %v1083
        %1116 = vst [vmem:[#allocation2 + $0xd8] sm:$0xff] %v1084
        %1117 = vst [vmem:[#allocation2 + $0xe0] sm:$0xff] %v1085
        %1118 = vst [vmem:[#allocation2 + $0xe8] sm:$0xff] %v1086
        %1119 = vst [vmem:[#allocation2 + $0xf0] sm:$0xff] %v1087
        %1120 = vst [vmem:[#allocation2 + $0xf8] sm:$0xff] %v1088
        %s1121 = scalar_lea.vmem %s195, 24
        %v1122 = vld [vmem:[%s1121] sm:$0xff]
        %v1123 = vld [vmem:[%s1121 + $0x8] sm:$0xff]
        %v1124 = vld [vmem:[%s1121 + $0x18] sm:$0xff]
        %v1125 = vld [vmem:[%s1121 + $0x20] sm:$0xff]
        %v1126 = vld [vmem:[%s1121 + $0x30] sm:$0xff]
        %v1127 = vld [vmem:[%s1121 + $0x38] sm:$0xff]
        %v1128 = vld [vmem:[%s1121 + $0x48] sm:$0xff]
        %v1129 = vld [vmem:[%s1121 + $0x50] sm:$0xff]
        %v1130 = vld [vmem:[%s1121 + $0x60] sm:$0xff]
        %v1131 = vld [vmem:[%s1121 + $0x68] sm:$0xff]
        %v1132 = vld [vmem:[%s1121 + $0x78] sm:$0xff]
        %v1133 = vld [vmem:[%s1121 + $0x80] sm:$0xff]
        %v1134 = vld [vmem:[%s1121 + $0x90] sm:$0xff]
        %v1135 = vld [vmem:[%s1121 + $0x98] sm:$0xff]
        %v1136 = vld [vmem:[%s1121 + $0xa8] sm:$0xff]
        %v1137 = vld [vmem:[%s1121 + $0xb0] sm:$0xff]
        %v1138 = vld [vmem:[%s1121 + $0xc0] sm:$0xff]
        %v1139 = vld [vmem:[%s1121 + $0xc8] sm:$0xff]
        %v1140 = vld [vmem:[%s1121 + $0xd8] sm:$0xff]
        %v1141 = vld [vmem:[%s1121 + $0xe0] sm:$0xff]
        %v1142 = vld [vmem:[%s1121 + $0xf0] sm:$0xff]
        %v1143 = vld [vmem:[%s1121 + $0xf8] sm:$0xff]
        %v1144 = vld [vmem:[%s1121 + $0x108] sm:$0xff]
        %v1145 = vld [vmem:[%s1121 + $0x110] sm:$0xff]
        %v1146 = vld [vmem:[%s1121 + $0x120] sm:$0xff]
        %v1147 = vld [vmem:[%s1121 + $0x128] sm:$0xff]
        %v1148 = vld [vmem:[%s1121 + $0x138] sm:$0xff]
        %v1149 = vld [vmem:[%s1121 + $0x140] sm:$0xff]
        %v1150 = vld [vmem:[%s1121 + $0x150] sm:$0xff]
        %v1151 = vld [vmem:[%s1121 + $0x158] sm:$0xff]
        %v1152 = vld [vmem:[%s1121 + $0x168] sm:$0xff]
        %v1153 = vld [vmem:[%s1121 + $0x170] sm:$0xff]
        %v1154 = vld [vmem:[#allocation2] sm:$0xff]
        %v1155 = vld [vmem:[#allocation2 + $0x8] sm:$0xff]
        %v1156 = vld [vmem:[#allocation2 + $0x10] sm:$0xff]
        %v1157 = vld [vmem:[#allocation2 + $0x18] sm:$0xff]
        %v1158 = vld [vmem:[#allocation2 + $0x20] sm:$0xff]
        %v1159 = vld [vmem:[#allocation2 + $0x28] sm:$0xff]
        %v1160 = vld [vmem:[#allocation2 + $0x30] sm:$0xff]
        %v1161 = vld [vmem:[#allocation2 + $0x38] sm:$0xff]
        %v1162 = vld [vmem:[#allocation2 + $0x40] sm:$0xff]
        %v1163 = vld [vmem:[#allocation2 + $0x48] sm:$0xff]
        %v1164 = vld [vmem:[#allocation2 + $0x50] sm:$0xff]
        %v1165 = vld [vmem:[#allocation2 + $0x58] sm:$0xff]
        %v1166 = vld [vmem:[#allocation2 + $0x60] sm:$0xff]
        %v1167 = vld [vmem:[#allocation2 + $0x68] sm:$0xff]
        %v1168 = vld [vmem:[#allocation2 + $0x70] sm:$0xff]
        %v1169 = vld [vmem:[#allocation2 + $0x78] sm:$0xff]
        %v1170 = vld [vmem:[#allocation2 + $0x80] sm:$0xff]
        %v1171 = vld [vmem:[#allocation2 + $0x88] sm:$0xff]
        %v1172 = vld [vmem:[#allocation2 + $0x90] sm:$0xff]
        %v1173 = vld [vmem:[#allocation2 + $0x98] sm:$0xff]
        %v1174 = vld [vmem:[#allocation2 + $0xa0] sm:$0xff]
        %v1175 = vld [vmem:[#allocation2 + $0xa8] sm:$0xff]
        %v1176 = vld [vmem:[#allocation2 + $0xb0] sm:$0xff]
        %v1177 = vld [vmem:[#allocation2 + $0xb8] sm:$0xff]
        %v1178 = vld [vmem:[#allocation2 + $0xc0] sm:$0xff]
        %v1179 = vld [vmem:[#allocation2 + $0xc8] sm:$0xff]
        %v1180 = vld [vmem:[#allocation2 + $0xd0] sm:$0xff]
        %v1181 = vld [vmem:[#allocation2 + $0xd8] sm:$0xff]
        %v1182 = vld [vmem:[#allocation2 + $0xe0] sm:$0xff]
        %v1183 = vld [vmem:[#allocation2 + $0xe8] sm:$0xff]
        %v1184 = vld [vmem:[#allocation2 + $0xf0] sm:$0xff]
        %v1185 = vld [vmem:[#allocation2 + $0xf8] sm:$0xff]
        %v1186 = vpack.c.bf16 %v1123, %v1122
        %v1187 = vpack.c.bf16 %v1125, %v1124
        %v1188 = vpack.c.bf16 %v1127, %v1126
        %v1189 = vpack.c.bf16 %v1129, %v1128
        %v1190 = vpack.c.bf16 %v1131, %v1130
        %v1191 = vpack.c.bf16 %v1133, %v1132
        %v1192 = vpack.c.bf16 %v1135, %v1134
        %v1193 = vpack.c.bf16 %v1137, %v1136
        %v1194 = vpack.c.bf16 %v1139, %v1138
        %v1195 = vpack.c.bf16 %v1141, %v1140
        %v1196 = vpack.c.bf16 %v1143, %v1142
        %v1197 = vpack.c.bf16 %v1145, %v1144
        %v1198 = vpack.c.bf16 %v1147, %v1146
        %v1199 = vpack.c.bf16 %v1149, %v1148
        %v1200 = vpack.c.bf16 %v1151, %v1150
        %v1201 = vpack.c.bf16 %v1153, %v1152
        %s1202 = scalar_lea.vmem %s1, 192
        %v1203 = vld [vmem:[%s1202] sm:$0xf]
        %v1204 = vld [vmem:[%s1202 + $0x4] sm:$0xf]
        %v1205 = vld [vmem:[%s1202 + $0x8] sm:$0xf]
        %v1206 = vld [vmem:[%s1202 + $0xc] sm:$0xf]
        %v1207 = vld [vmem:[%s1202 + $0x10] sm:$0xf]
        %v1208 = vld [vmem:[%s1202 + $0x14] sm:$0xf]
        %v1209 = vld [vmem:[%s1202 + $0x18] sm:$0xf]
        %v1210 = vld [vmem:[%s1202 + $0x1c] sm:$0xf]
        %v1211 = vld [vmem:[%s1202 + $0x20] sm:$0xf]
        %v1212 = vld [vmem:[%s1202 + $0x24] sm:$0xf]
        %v1213 = vld [vmem:[%s1202 + $0x28] sm:$0xf]
        %v1214 = vld [vmem:[%s1202 + $0x2c] sm:$0xf]
        %v1215 = vld [vmem:[%s1202 + $0x30] sm:$0xf]
        %v1216 = vld [vmem:[%s1202 + $0x34] sm:$0xf]
        %v1217 = vld [vmem:[%s1202 + $0x38] sm:$0xf]
        %v1218 = vld [vmem:[%s1202 + $0x3c] sm:$0xf]
        %v1235 = vunpack.c.l.b16 %v1203
        %v1236 = vunpack.c.l.b16 %v1204
        %v1237 = vunpack.c.l.b16 %v1205
        %v1238 = vunpack.c.l.b16 %v1206
        %v1239 = vunpack.c.l.b16 %v1207
        %v1240 = vunpack.c.l.b16 %v1208
        %v1241 = vunpack.c.l.b16 %v1209
        %v1242 = vunpack.c.l.b16 %v1210
        %v1243 = vunpack.c.l.b16 %v1211
        %v1244 = vunpack.c.l.b16 %v1212
        %v1245 = vunpack.c.l.b16 %v1213
        %v1246 = vunpack.c.l.b16 %v1214
        %v1247 = vunpack.c.l.b16 %v1215
        %v1248 = vunpack.c.l.b16 %v1216
        %v1249 = vunpack.c.l.b16 %v1217
        %v1250 = vunpack.c.l.b16 %v1218
        %v1251 = vpack.c.b16 %v1236, %v1235
        %v1252 = vpack.c.b16 %v1238, %v1237
        %v1253 = vpack.c.b16 %v1240, %v1239
        %v1254 = vpack.c.b16 %v1242, %v1241
        %v1255 = vpack.c.b16 %v1244, %v1243
        %v1256 = vpack.c.b16 %v1246, %v1245
        %v1257 = vpack.c.b16 %v1248, %v1247
        %v1258 = vpack.c.b16 %v1250, %v1249
        %1267 = vmatpush.bf16.msra.mxu0 %v1258
        %1268 = vmatpush.bf16.msra.mxu0 %v1257
        %1269 = vmatpush.bf16.msra.mxu0 %v1256
        %1270 = vmatpush.bf16.msra.mxu0 %v1255
        %1271 = vmatpush.bf16.msra.mxu0 %v1254
        %1272 = vmatpush.bf16.msra.mxu0 %v1253
        %1273 = vmatpush.bf16.msra.mxu0 %v1252
        %1274 = vmatpush.bf16.msra.mxu0 %v1251
        %1275 = vmatmul.bf16.gmra.mxu0 %v1186
        %v1276 = vpop.f32.mrf.mxu0
        %v1277 = vadd.f32 0.0, %v1276
        %v1278 = vpop.f32.mrf.mxu0
        %v1279 = vadd.f32 0.0, %v1278
        %1280 = vmatmul.bf16.gmra.mxu0 %v1187
        %v1281 = vpop.f32.mrf.mxu0
        %v1282 = vadd.f32 0.0, %v1281
        %v1283 = vpop.f32.mrf.mxu0
        %v1284 = vadd.f32 0.0, %v1283
        %1285 = vmatmul.bf16.gmra.mxu0 %v1188
        %v1286 = vpop.f32.mrf.mxu0
        %v1287 = vadd.f32 0.0, %v1286
        %v1288 = vpop.f32.mrf.mxu0
        %v1289 = vadd.f32 0.0, %v1288
        %1290 = vmatmul.bf16.gmra.mxu0 %v1189
        %v1291 = vpop.f32.mrf.mxu0
        %v1292 = vadd.f32 0.0, %v1291
        %v1293 = vpop.f32.mrf.mxu0
        %v1294 = vadd.f32 0.0, %v1293
        %1295 = vmatmul.bf16.gmra.mxu0 %v1190
        %v1296 = vpop.f32.mrf.mxu0
        %v1297 = vadd.f32 0.0, %v1296
        %v1298 = vpop.f32.mrf.mxu0
        %v1299 = vadd.f32 0.0, %v1298
        %1300 = vmatmul.bf16.gmra.mxu0 %v1191
        %v1301 = vpop.f32.mrf.mxu0
        %v1302 = vadd.f32 0.0, %v1301
        %v1303 = vpop.f32.mrf.mxu0
        %v1304 = vadd.f32 0.0, %v1303
        %1305 = vmatmul.bf16.gmra.mxu0 %v1192
        %v1306 = vpop.f32.mrf.mxu0
        %v1307 = vadd.f32 0.0, %v1306
        %v1308 = vpop.f32.mrf.mxu0
        %v1309 = vadd.f32 0.0, %v1308
        %1310 = vmatmul.bf16.gmra.mxu0 %v1193
        %v1311 = vpop.f32.mrf.mxu0
        %v1312 = vadd.f32 0.0, %v1311
        %v1313 = vpop.f32.mrf.mxu0
        %v1314 = vadd.f32 0.0, %v1313
        %1315 = vmatmul.bf16.gmra.mxu0 %v1194
        %v1316 = vpop.f32.mrf.mxu0
        %v1317 = vadd.f32 0.0, %v1316
        %v1318 = vpop.f32.mrf.mxu0
        %v1319 = vadd.f32 0.0, %v1318
        %1320 = vmatmul.bf16.gmra.mxu0 %v1195
        %v1321 = vpop.f32.mrf.mxu0
        %v1322 = vadd.f32 0.0, %v1321
        %v1323 = vpop.f32.mrf.mxu0
        %v1324 = vadd.f32 0.0, %v1323
        %1325 = vmatmul.bf16.gmra.mxu0 %v1196
        %v1326 = vpop.f32.mrf.mxu0
        %v1327 = vadd.f32 0.0, %v1326
        %v1328 = vpop.f32.mrf.mxu0
        %v1329 = vadd.f32 0.0, %v1328
        %1330 = vmatmul.bf16.gmra.mxu0 %v1197
        %v1331 = vpop.f32.mrf.mxu0
        %v1332 = vadd.f32 0.0, %v1331
        %v1333 = vpop.f32.mrf.mxu0
        %v1334 = vadd.f32 0.0, %v1333
        %1335 = vmatmul.bf16.gmra.mxu0 %v1198
        %v1336 = vpop.f32.mrf.mxu0
        %v1337 = vadd.f32 0.0, %v1336
        %v1338 = vpop.f32.mrf.mxu0
        %v1339 = vadd.f32 0.0, %v1338
        %1340 = vmatmul.bf16.gmra.mxu0 %v1199
        %v1341 = vpop.f32.mrf.mxu0
        %v1342 = vadd.f32 0.0, %v1341
        %v1343 = vpop.f32.mrf.mxu0
        %v1344 = vadd.f32 0.0, %v1343
        %1345 = vmatmul.bf16.gmra.mxu0 %v1200
        %v1346 = vpop.f32.mrf.mxu0
        %v1347 = vadd.f32 0.0, %v1346
        %v1348 = vpop.f32.mrf.mxu0
        %v1349 = vadd.f32 0.0, %v1348
        %1350 = vmatmul.bf16.gmra.mxu0 %v1201
        %v1351 = vpop.f32.mrf.mxu0
        %v1352 = vadd.f32 0.0, %v1351
        %v1353 = vpop.f32.mrf.mxu0
        %v1354 = vadd.f32 0.0, %v1353
        %1355 = vdwg.mxu0
        %v1356 = vadd.f32 %v1154, %v1277
        %v1357 = vadd.f32 %v1155, %v1279
        %v1358 = vadd.f32 %v1156, %v1282
        %v1359 = vadd.f32 %v1157, %v1284
        %v1360 = vadd.f32 %v1158, %v1287
        %v1361 = vadd.f32 %v1159, %v1289
        %v1362 = vadd.f32 %v1160, %v1292
        %v1363 = vadd.f32 %v1161, %v1294
        %v1364 = vadd.f32 %v1162, %v1297
        %v1365 = vadd.f32 %v1163, %v1299
        %v1366 = vadd.f32 %v1164, %v1302
        %v1367 = vadd.f32 %v1165, %v1304
        %v1368 = vadd.f32 %v1166, %v1307
        %v1369 = vadd.f32 %v1167, %v1309
        %v1370 = vadd.f32 %v1168, %v1312
        %v1371 = vadd.f32 %v1169, %v1314
        %v1372 = vadd.f32 %v1170, %v1317
        %v1373 = vadd.f32 %v1171, %v1319
        %v1374 = vadd.f32 %v1172, %v1322
        %v1375 = vadd.f32 %v1173, %v1324
        %v1376 = vadd.f32 %v1174, %v1327
        %v1377 = vadd.f32 %v1175, %v1329
        %v1378 = vadd.f32 %v1176, %v1332
        %v1379 = vadd.f32 %v1177, %v1334
        %v1380 = vadd.f32 %v1178, %v1337
        %v1381 = vadd.f32 %v1179, %v1339
        %v1382 = vadd.f32 %v1180, %v1342
        %v1383 = vadd.f32 %v1181, %v1344
        %v1384 = vadd.f32 %v1182, %v1347
        %v1385 = vadd.f32 %v1183, %v1349
        %v1386 = vadd.f32 %v1184, %v1352
        %v1387 = vadd.f32 %v1185, %v1354
        %1388 = vst [vmem:[#allocation2] sm:$0xff] %v1356
        %1389 = vst [vmem:[#allocation2 + $0x8] sm:$0xff] %v1357
        %1390 = vst [vmem:[#allocation2 + $0x10] sm:$0xff] %v1358
        %1391 = vst [vmem:[#allocation2 + $0x18] sm:$0xff] %v1359
        %1392 = vst [vmem:[#allocation2 + $0x20] sm:$0xff] %v1360
        %1393 = vst [vmem:[#allocation2 + $0x28] sm:$0xff] %v1361
        %1394 = vst [vmem:[#allocation2 + $0x30] sm:$0xff] %v1362
        %1395 = vst [vmem:[#allocation2 + $0x38] sm:$0xff] %v1363
        %1396 = vst [vmem:[#allocation2 + $0x40] sm:$0xff] %v1364
        %1397 = vst [vmem:[#allocation2 + $0x48] sm:$0xff] %v1365
        %1398 = vst [vmem:[#allocation2 + $0x50] sm:$0xff] %v1366
        %1399 = vst [vmem:[#allocation2 + $0x58] sm:$0xff] %v1367
        %1400 = vst [vmem:[#allocation2 + $0x60] sm:$0xff] %v1368
        %1401 = vst [vmem:[#allocation2 + $0x68] sm:$0xff] %v1369
        %1402 = vst [vmem:[#allocation2 + $0x70] sm:$0xff] %v1370
        %1403 = vst [vmem:[#allocation2 + $0x78] sm:$0xff] %v1371
        %1404 = vst [vmem:[#allocation2 + $0x80] sm:$0xff] %v1372
        %1405 = vst [vmem:[#allocation2 + $0x88] sm:$0xff] %v1373
        %1406 = vst [vmem:[#allocation2 + $0x90] sm:$0xff] %v1374
        %1407 = vst [vmem:[#allocation2 + $0x98] sm:$0xff] %v1375
        %1408 = vst [vmem:[#allocation2 + $0xa0] sm:$0xff] %v1376
        %1409 = vst [vmem:[#allocation2 + $0xa8] sm:$0xff] %v1377
        %1410 = vst [vmem:[#allocation2 + $0xb0] sm:$0xff] %v1378
        %1411 = vst [vmem:[#allocation2 + $0xb8] sm:$0xff] %v1379
        %1412 = vst [vmem:[#allocation2 + $0xc0] sm:$0xff] %v1380
        %1413 = vst [vmem:[#allocation2 + $0xc8] sm:$0xff] %v1381
        %1414 = vst [vmem:[#allocation2 + $0xd0] sm:$0xff] %v1382
        %1415 = vst [vmem:[#allocation2 + $0xd8] sm:$0xff] %v1383
        %1416 = vst [vmem:[#allocation2 + $0xe0] sm:$0xff] %v1384
        %1417 = vst [vmem:[#allocation2 + $0xe8] sm:$0xff] %v1385
        %1418 = vst [vmem:[#allocation2 + $0xf0] sm:$0xff] %v1386
        %1419 = vst [vmem:[#allocation2 + $0xf8] sm:$0xff] %v1387
        %v1420 = vld [vmem:[%s1121 + $0x1] sm:$0xff]
        %v1421 = vld [vmem:[%s1121 + $0x9] sm:$0xff]
        %v1422 = vld [vmem:[%s1121 + $0x19] sm:$0xff]
        %v1423 = vld [vmem:[%s1121 + $0x21] sm:$0xff]
        %v1424 = vld [vmem:[%s1121 + $0x31] sm:$0xff]
        %v1425 = vld [vmem:[%s1121 + $0x39] sm:$0xff]
        %v1426 = vld [vmem:[%s1121 + $0x49] sm:$0xff]
        %v1427 = vld [vmem:[%s1121 + $0x51] sm:$0xff]
        %v1428 = vld [vmem:[%s1121 + $0x61] sm:$0xff]
        %v1429 = vld [vmem:[%s1121 + $0x69] sm:$0xff]
        %v1430 = vld [vmem:[%s1121 + $0x79] sm:$0xff]
        %v1431 = vld [vmem:[%s1121 + $0x81] sm:$0xff]
        %v1432 = vld [vmem:[%s1121 + $0x91] sm:$0xff]
        %v1433 = vld [vmem:[%s1121 + $0x99] sm:$0xff]
        %v1434 = vld [vmem:[%s1121 + $0xa9] sm:$0xff]
        %v1435 = vld [vmem:[%s1121 + $0xb1] sm:$0xff]
        %v1436 = vld [vmem:[%s1121 + $0xc1] sm:$0xff]
        %v1437 = vld [vmem:[%s1121 + $0xc9] sm:$0xff]
        %v1438 = vld [vmem:[%s1121 + $0xd9] sm:$0xff]
        %v1439 = vld [vmem:[%s1121 + $0xe1] sm:$0xff]
        %v1440 = vld [vmem:[%s1121 + $0xf1] sm:$0xff]
        %v1441 = vld [vmem:[%s1121 + $0xf9] sm:$0xff]
        %v1442 = vld [vmem:[%s1121 + $0x109] sm:$0xff]
        %v1443 = vld [vmem:[%s1121 + $0x111] sm:$0xff]
        %v1444 = vld [vmem:[%s1121 + $0x121] sm:$0xff]
        %v1445 = vld [vmem:[%s1121 + $0x129] sm:$0xff]
        %v1446 = vld [vmem:[%s1121 + $0x139] sm:$0xff]
        %v1447 = vld [vmem:[%s1121 + $0x141] sm:$0xff]
        %v1448 = vld [vmem:[%s1121 + $0x151] sm:$0xff]
        %v1449 = vld [vmem:[%s1121 + $0x159] sm:$0xff]
        %v1450 = vld [vmem:[%s1121 + $0x169] sm:$0xff]
        %v1451 = vld [vmem:[%s1121 + $0x171] sm:$0xff]
        %v1452 = vld [vmem:[#allocation2] sm:$0xff]
        %v1453 = vld [vmem:[#allocation2 + $0x8] sm:$0xff]
        %v1454 = vld [vmem:[#allocation2 + $0x10] sm:$0xff]
        %v1455 = vld [vmem:[#allocation2 + $0x18] sm:$0xff]
        %v1456 = vld [vmem:[#allocation2 + $0x20] sm:$0xff]
        %v1457 = vld [vmem:[#allocation2 + $0x28] sm:$0xff]
        %v1458 = vld [vmem:[#allocation2 + $0x30] sm:$0xff]
        %v1459 = vld [vmem:[#allocation2 + $0x38] sm:$0xff]
        %v1460 = vld [vmem:[#allocation2 + $0x40] sm:$0xff]
        %v1461 = vld [vmem:[#allocation2 + $0x48] sm:$0xff]
        %v1462 = vld [vmem:[#allocation2 + $0x50] sm:$0xff]
        %v1463 = vld [vmem:[#allocation2 + $0x58] sm:$0xff]
        %v1464 = vld [vmem:[#allocation2 + $0x60] sm:$0xff]
        %v1465 = vld [vmem:[#allocation2 + $0x68] sm:$0xff]
        %v1466 = vld [vmem:[#allocation2 + $0x70] sm:$0xff]
        %v1467 = vld [vmem:[#allocation2 + $0x78] sm:$0xff]
        %v1468 = vld [vmem:[#allocation2 + $0x80] sm:$0xff]
        %v1469 = vld [vmem:[#allocation2 + $0x88] sm:$0xff]
        %v1470 = vld [vmem:[#allocation2 + $0x90] sm:$0xff]
        %v1471 = vld [vmem:[#allocation2 + $0x98] sm:$0xff]
        %v1472 = vld [vmem:[#allocation2 + $0xa0] sm:$0xff]
        %v1473 = vld [vmem:[#allocation2 + $0xa8] sm:$0xff]
        %v1474 = vld [vmem:[#allocation2 + $0xb0] sm:$0xff]
        %v1475 = vld [vmem:[#allocation2 + $0xb8] sm:$0xff]
        %v1476 = vld [vmem:[#allocation2 + $0xc0] sm:$0xff]
        %v1477 = vld [vmem:[#allocation2 + $0xc8] sm:$0xff]
        %v1478 = vld [vmem:[#allocation2 + $0xd0] sm:$0xff]
        %v1479 = vld [vmem:[#allocation2 + $0xd8] sm:$0xff]
        %v1480 = vld [vmem:[#allocation2 + $0xe0] sm:$0xff]
        %v1481 = vld [vmem:[#allocation2 + $0xe8] sm:$0xff]
        %v1482 = vld [vmem:[#allocation2 + $0xf0] sm:$0xff]
        %v1483 = vld [vmem:[#allocation2 + $0xf8] sm:$0xff]
        %v1484 = vpack.c.bf16 %v1421, %v1420
        %v1485 = vpack.c.bf16 %v1423, %v1422
        %v1486 = vpack.c.bf16 %v1425, %v1424
        %v1487 = vpack.c.bf16 %v1427, %v1426
        %v1488 = vpack.c.bf16 %v1429, %v1428
        %v1489 = vpack.c.bf16 %v1431, %v1430
        %v1490 = vpack.c.bf16 %v1433, %v1432
        %v1491 = vpack.c.bf16 %v1435, %v1434
        %v1492 = vpack.c.bf16 %v1437, %v1436
        %v1493 = vpack.c.bf16 %v1439, %v1438
        %v1494 = vpack.c.bf16 %v1441, %v1440
        %v1495 = vpack.c.bf16 %v1443, %v1442
        %v1496 = vpack.c.bf16 %v1445, %v1444
        %v1497 = vpack.c.bf16 %v1447, %v1446
        %v1498 = vpack.c.bf16 %v1449, %v1448
        %v1499 = vpack.c.bf16 %v1451, %v1450
        %s1500 = scalar_lea.vmem %s1, 256
        %v1501 = vld [vmem:[%s1500] sm:$0xf]
        %v1502 = vld [vmem:[%s1500 + $0x4] sm:$0xf]
        %v1503 = vld [vmem:[%s1500 + $0x8] sm:$0xf]
        %v1504 = vld [vmem:[%s1500 + $0xc] sm:$0xf]
        %v1505 = vld [vmem:[%s1500 + $0x10] sm:$0xf]
        %v1506 = vld [vmem:[%s1500 + $0x14] sm:$0xf]
        %v1507 = vld [vmem:[%s1500 + $0x18] sm:$0xf]
        %v1508 = vld [vmem:[%s1500 + $0x1c] sm:$0xf]
        %v1509 = vld [vmem:[%s1500 + $0x20] sm:$0xf]
        %v1510 = vld [vmem:[%s1500 + $0x24] sm:$0xf]
        %v1511 = vld [vmem:[%s1500 + $0x28] sm:$0xf]
        %v1512 = vld [vmem:[%s1500 + $0x2c] sm:$0xf]
        %v1513 = vld [vmem:[%s1500 + $0x30] sm:$0xf]
        %v1514 = vld [vmem:[%s1500 + $0x34] sm:$0xf]
        %v1515 = vld [vmem:[%s1500 + $0x38] sm:$0xf]
        %v1516 = vld [vmem:[%s1500 + $0x3c] sm:$0xf]
        %v1533 = vunpack.c.l.b16 %v1501
        %v1534 = vunpack.c.l.b16 %v1502
        %v1535 = vunpack.c.l.b16 %v1503
        %v1536 = vunpack.c.l.b16 %v1504
        %v1537 = vunpack.c.l.b16 %v1505
        %v1538 = vunpack.c.l.b16 %v1506
        %v1539 = vunpack.c.l.b16 %v1507
        %v1540 = vunpack.c.l.b16 %v1508
        %v1541 = vunpack.c.l.b16 %v1509
        %v1542 = vunpack.c.l.b16 %v1510
        %v1543 = vunpack.c.l.b16 %v1511
        %v1544 = vunpack.c.l.b16 %v1512
        %v1545 = vunpack.c.l.b16 %v1513
        %v1546 = vunpack.c.l.b16 %v1514
        %v1547 = vunpack.c.l.b16 %v1515
        %v1548 = vunpack.c.l.b16 %v1516
        %v1549 = vpack.c.b16 %v1534, %v1533
        %v1550 = vpack.c.b16 %v1536, %v1535
        %v1551 = vpack.c.b16 %v1538, %v1537
        %v1552 = vpack.c.b16 %v1540, %v1539
        %v1553 = vpack.c.b16 %v1542, %v1541
        %v1554 = vpack.c.b16 %v1544, %v1543
        %v1555 = vpack.c.b16 %v1546, %v1545
        %v1556 = vpack.c.b16 %v1548, %v1547
        %1565 = vmatpush.bf16.msra.mxu0 %v1556
        %1566 = vmatpush.bf16.msra.mxu0 %v1555
        %1567 = vmatpush.bf16.msra.mxu0 %v1554
        %1568 = vmatpush.bf16.msra.mxu0 %v1553
        %1569 = vmatpush.bf16.msra.mxu0 %v1552
        %1570 = vmatpush.bf16.msra.mxu0 %v1551
        %1571 = vmatpush.bf16.msra.mxu0 %v1550
        %1572 = vmatpush.bf16.msra.mxu0 %v1549
        %1573 = vmatmul.bf16.gmra.mxu0 %v1484
        %v1574 = vpop.f32.mrf.mxu0
        %v1575 = vadd.f32 0.0, %v1574
        %v1576 = vpop.f32.mrf.mxu0
        %v1577 = vadd.f32 0.0, %v1576
        %1578 = vmatmul.bf16.gmra.mxu0 %v1485
        %v1579 = vpop.f32.mrf.mxu0
        %v1580 = vadd.f32 0.0, %v1579
        %v1581 = vpop.f32.mrf.mxu0
        %v1582 = vadd.f32 0.0, %v1581
        %1583 = vmatmul.bf16.gmra.mxu0 %v1486
        %v1584 = vpop.f32.mrf.mxu0
        %v1585 = vadd.f32 0.0, %v1584
        %v1586 = vpop.f32.mrf.mxu0
        %v1587 = vadd.f32 0.0, %v1586
        %1588 = vmatmul.bf16.gmra.mxu0 %v1487
        %v1589 = vpop.f32.mrf.mxu0
        %v1590 = vadd.f32 0.0, %v1589
        %v1591 = vpop.f32.mrf.mxu0
        %v1592 = vadd.f32 0.0, %v1591
        %1593 = vmatmul.bf16.gmra.mxu0 %v1488
        %v1594 = vpop.f32.mrf.mxu0
        %v1595 = vadd.f32 0.0, %v1594
        %v1596 = vpop.f32.mrf.mxu0
        %v1597 = vadd.f32 0.0, %v1596
        %1598 = vmatmul.bf16.gmra.mxu0 %v1489
        %v1599 = vpop.f32.mrf.mxu0
        %v1600 = vadd.f32 0.0, %v1599
        %v1601 = vpop.f32.mrf.mxu0
        %v1602 = vadd.f32 0.0, %v1601
        %1603 = vmatmul.bf16.gmra.mxu0 %v1490
        %v1604 = vpop.f32.mrf.mxu0
        %v1605 = vadd.f32 0.0, %v1604
        %v1606 = vpop.f32.mrf.mxu0
        %v1607 = vadd.f32 0.0, %v1606
        %1608 = vmatmul.bf16.gmra.mxu0 %v1491
        %v1609 = vpop.f32.mrf.mxu0
        %v1610 = vadd.f32 0.0, %v1609
        %v1611 = vpop.f32.mrf.mxu0
        %v1612 = vadd.f32 0.0, %v1611
        %1613 = vmatmul.bf16.gmra.mxu0 %v1492
        %v1614 = vpop.f32.mrf.mxu0
        %v1615 = vadd.f32 0.0, %v1614
        %v1616 = vpop.f32.mrf.mxu0
        %v1617 = vadd.f32 0.0, %v1616
        %1618 = vmatmul.bf16.gmra.mxu0 %v1493
        %v1619 = vpop.f32.mrf.mxu0
        %v1620 = vadd.f32 0.0, %v1619
        %v1621 = vpop.f32.mrf.mxu0
        %v1622 = vadd.f32 0.0, %v1621
        %1623 = vmatmul.bf16.gmra.mxu0 %v1494
        %v1624 = vpop.f32.mrf.mxu0
        %v1625 = vadd.f32 0.0, %v1624
        %v1626 = vpop.f32.mrf.mxu0
        %v1627 = vadd.f32 0.0, %v1626
        %1628 = vmatmul.bf16.gmra.mxu0 %v1495
        %v1629 = vpop.f32.mrf.mxu0
        %v1630 = vadd.f32 0.0, %v1629
        %v1631 = vpop.f32.mrf.mxu0
        %v1632 = vadd.f32 0.0, %v1631
        %1633 = vmatmul.bf16.gmra.mxu0 %v1496
        %v1634 = vpop.f32.mrf.mxu0
        %v1635 = vadd.f32 0.0, %v1634
        %v1636 = vpop.f32.mrf.mxu0
        %v1637 = vadd.f32 0.0, %v1636
        %1638 = vmatmul.bf16.gmra.mxu0 %v1497
        %v1639 = vpop.f32.mrf.mxu0
        %v1640 = vadd.f32 0.0, %v1639
        %v1641 = vpop.f32.mrf.mxu0
        %v1642 = vadd.f32 0.0, %v1641
        %1643 = vmatmul.bf16.gmra.mxu0 %v1498
        %v1644 = vpop.f32.mrf.mxu0
        %v1645 = vadd.f32 0.0, %v1644
        %v1646 = vpop.f32.mrf.mxu0
        %v1647 = vadd.f32 0.0, %v1646
        %1648 = vmatmul.bf16.gmra.mxu0 %v1499
        %v1649 = vpop.f32.mrf.mxu0
        %v1650 = vadd.f32 0.0, %v1649
        %v1651 = vpop.f32.mrf.mxu0
        %v1652 = vadd.f32 0.0, %v1651
        %1653 = vdwg.mxu0
        %v1654 = vadd.f32 %v1452, %v1575
        %v1655 = vadd.f32 %v1453, %v1577
        %v1656 = vadd.f32 %v1454, %v1580
        %v1657 = vadd.f32 %v1455, %v1582
        %v1658 = vadd.f32 %v1456, %v1585
        %v1659 = vadd.f32 %v1457, %v1587
        %v1660 = vadd.f32 %v1458, %v1590
        %v1661 = vadd.f32 %v1459, %v1592
        %v1662 = vadd.f32 %v1460, %v1595
        %v1663 = vadd.f32 %v1461, %v1597
        %v1664 = vadd.f32 %v1462, %v1600
        %v1665 = vadd.f32 %v1463, %v1602
        %v1666 = vadd.f32 %v1464, %v1605
        %v1667 = vadd.f32 %v1465, %v1607
        %v1668 = vadd.f32 %v1466, %v1610
        %v1669 = vadd.f32 %v1467, %v1612
        %v1670 = vadd.f32 %v1468, %v1615
        %v1671 = vadd.f32 %v1469, %v1617
        %v1672 = vadd.f32 %v1470, %v1620
        %v1673 = vadd.f32 %v1471, %v1622
        %v1674 = vadd.f32 %v1472, %v1625
        %v1675 = vadd.f32 %v1473, %v1627
        %v1676 = vadd.f32 %v1474, %v1630
        %v1677 = vadd.f32 %v1475, %v1632
        %v1678 = vadd.f32 %v1476, %v1635
        %v1679 = vadd.f32 %v1477, %v1637
        %v1680 = vadd.f32 %v1478, %v1640
        %v1681 = vadd.f32 %v1479, %v1642
        %v1682 = vadd.f32 %v1480, %v1645
        %v1683 = vadd.f32 %v1481, %v1647
        %v1684 = vadd.f32 %v1482, %v1650
        %v1685 = vadd.f32 %v1483, %v1652
        %1686 = vst [vmem:[#allocation2] sm:$0xff] %v1654
        %1687 = vst [vmem:[#allocation2 + $0x8] sm:$0xff] %v1655
        %1688 = vst [vmem:[#allocation2 + $0x10] sm:$0xff] %v1656
        %1689 = vst [vmem:[#allocation2 + $0x18] sm:$0xff] %v1657
        %1690 = vst [vmem:[#allocation2 + $0x20] sm:$0xff] %v1658
        %1691 = vst [vmem:[#allocation2 + $0x28] sm:$0xff] %v1659
        %1692 = vst [vmem:[#allocation2 + $0x30] sm:$0xff] %v1660
        %1693 = vst [vmem:[#allocation2 + $0x38] sm:$0xff] %v1661
        %1694 = vst [vmem:[#allocation2 + $0x40] sm:$0xff] %v1662
        %1695 = vst [vmem:[#allocation2 + $0x48] sm:$0xff] %v1663
        %1696 = vst [vmem:[#allocation2 + $0x50] sm:$0xff] %v1664
        %1697 = vst [vmem:[#allocation2 + $0x58] sm:$0xff] %v1665
        %1698 = vst [vmem:[#allocation2 + $0x60] sm:$0xff] %v1666
        %1699 = vst [vmem:[#allocation2 + $0x68] sm:$0xff] %v1667
        %1700 = vst [vmem:[#allocation2 + $0x70] sm:$0xff] %v1668
        %1701 = vst [vmem:[#allocation2 + $0x78] sm:$0xff] %v1669
        %1702 = vst [vmem:[#allocation2 + $0x80] sm:$0xff] %v1670
        %1703 = vst [vmem:[#allocation2 + $0x88] sm:$0xff] %v1671
        %1704 = vst [vmem:[#allocation2 + $0x90] sm:$0xff] %v1672
        %1705 = vst [vmem:[#allocation2 + $0x98] sm:$0xff] %v1673
        %1706 = vst [vmem:[#allocation2 + $0xa0] sm:$0xff] %v1674
        %1707 = vst [vmem:[#allocation2 + $0xa8] sm:$0xff] %v1675
        %1708 = vst [vmem:[#allocation2 + $0xb0] sm:$0xff] %v1676
        %1709 = vst [vmem:[#allocation2 + $0xb8] sm:$0xff] %v1677
        %1710 = vst [vmem:[#allocation2 + $0xc0] sm:$0xff] %v1678
        %1711 = vst [vmem:[#allocation2 + $0xc8] sm:$0xff] %v1679
        %1712 = vst [vmem:[#allocation2 + $0xd0] sm:$0xff] %v1680
        %1713 = vst [vmem:[#allocation2 + $0xd8] sm:$0xff] %v1681
        %1714 = vst [vmem:[#allocation2 + $0xe0] sm:$0xff] %v1682
        %1715 = vst [vmem:[#allocation2 + $0xe8] sm:$0xff] %v1683
        %1716 = vst [vmem:[#allocation2 + $0xf0] sm:$0xff] %v1684
        %1717 = vst [vmem:[#allocation2 + $0xf8] sm:$0xff] %v1685
        %v1718 = vld [vmem:[%s1121 + $0x2] sm:$0xff]
        %v1719 = vld [vmem:[%s1121 + $0xa] sm:$0xff]
        %v1720 = vld [vmem:[%s1121 + $0x1a] sm:$0xff]
        %v1721 = vld [vmem:[%s1121 + $0x22] sm:$0xff]
        %v1722 = vld [vmem:[%s1121 + $0x32] sm:$0xff]
        %v1723 = vld [vmem:[%s1121 + $0x3a] sm:$0xff]
        %v1724 = vld [vmem:[%s1121 + $0x4a] sm:$0xff]
        %v1725 = vld [vmem:[%s1121 + $0x52] sm:$0xff]
        %v1726 = vld [vmem:[%s1121 + $0x62] sm:$0xff]
        %v1727 = vld [vmem:[%s1121 + $0x6a] sm:$0xff]
        %v1728 = vld [vmem:[%s1121 + $0x7a] sm:$0xff]
        %v1729 = vld [vmem:[%s1121 + $0x82] sm:$0xff]
        %v1730 = vld [vmem:[%s1121 + $0x92] sm:$0xff]
        %v1731 = vld [vmem:[%s1121 + $0x9a] sm:$0xff]
        %v1732 = vld [vmem:[%s1121 + $0xaa] sm:$0xff]
        %v1733 = vld [vmem:[%s1121 + $0xb2] sm:$0xff]
        %v1734 = vld [vmem:[%s1121 + $0xc2] sm:$0xff]
        %v1735 = vld [vmem:[%s1121 + $0xca] sm:$0xff]
        %v1736 = vld [vmem:[%s1121 + $0xda] sm:$0xff]
        %v1737 = vld [vmem:[%s1121 + $0xe2] sm:$0xff]
        %v1738 = vld [vmem:[%s1121 + $0xf2] sm:$0xff]
        %v1739 = vld [vmem:[%s1121 + $0xfa] sm:$0xff]
        %v1740 = vld [vmem:[%s1121 + $0x10a] sm:$0xff]
        %v1741 = vld [vmem:[%s1121 + $0x112] sm:$0xff]
        %v1742 = vld [vmem:[%s1121 + $0x122] sm:$0xff]
        %v1743 = vld [vmem:[%s1121 + $0x12a] sm:$0xff]
        %v1744 = vld [vmem:[%s1121 + $0x13a] sm:$0xff]
        %v1745 = vld [vmem:[%s1121 + $0x142] sm:$0xff]
        %v1746 = vld [vmem:[%s1121 + $0x152] sm:$0xff]
        %v1747 = vld [vmem:[%s1121 + $0x15a] sm:$0xff]
        %v1748 = vld [vmem:[%s1121 + $0x16a] sm:$0xff]
        %v1749 = vld [vmem:[%s1121 + $0x172] sm:$0xff]
        %v1750 = vld [vmem:[#allocation2] sm:$0xff]
        %v1751 = vld [vmem:[#allocation2 + $0x8] sm:$0xff]
        %v1752 = vld [vmem:[#allocation2 + $0x10] sm:$0xff]
        %v1753 = vld [vmem:[#allocation2 + $0x18] sm:$0xff]
        %v1754 = vld [vmem:[#allocation2 + $0x20] sm:$0xff]
        %v1755 = vld [vmem:[#allocation2 + $0x28] sm:$0xff]
        %v1756 = vld [vmem:[#allocation2 + $0x30] sm:$0xff]
        %v1757 = vld [vmem:[#allocation2 + $0x38] sm:$0xff]
        %v1758 = vld [vmem:[#allocation2 + $0x40] sm:$0xff]
        %v1759 = vld [vmem:[#allocation2 + $0x48] sm:$0xff]
        %v1760 = vld [vmem:[#allocation2 + $0x50] sm:$0xff]
        %v1761 = vld [vmem:[#allocation2 + $0x58] sm:$0xff]
        %v1762 = vld [vmem:[#allocation2 + $0x60] sm:$0xff]
        %v1763 = vld [vmem:[#allocation2 + $0x68] sm:$0xff]
        %v1764 = vld [vmem:[#allocation2 + $0x70] sm:$0xff]
        %v1765 = vld [vmem:[#allocation2 + $0x78] sm:$0xff]
        %v1766 = vld [vmem:[#allocation2 + $0x80] sm:$0xff]
        %v1767 = vld [vmem:[#allocation2 + $0x88] sm:$0xff]
        %v1768 = vld [vmem:[#allocation2 + $0x90] sm:$0xff]
        %v1769 = vld [vmem:[#allocation2 + $0x98] sm:$0xff]
        %v1770 = vld [vmem:[#allocation2 + $0xa0] sm:$0xff]
        %v1771 = vld [vmem:[#allocation2 + $0xa8] sm:$0xff]
        %v1772 = vld [vmem:[#allocation2 + $0xb0] sm:$0xff]
        %v1773 = vld [vmem:[#allocation2 + $0xb8] sm:$0xff]
        %v1774 = vld [vmem:[#allocation2 + $0xc0] sm:$0xff]
        %v1775 = vld [vmem:[#allocation2 + $0xc8] sm:$0xff]
        %v1776 = vld [vmem:[#allocation2 + $0xd0] sm:$0xff]
        %v1777 = vld [vmem:[#allocation2 + $0xd8] sm:$0xff]
        %v1778 = vld [vmem:[#allocation2 + $0xe0] sm:$0xff]
        %v1779 = vld [vmem:[#allocation2 + $0xe8] sm:$0xff]
        %v1780 = vld [vmem:[#allocation2 + $0xf0] sm:$0xff]
        %v1781 = vld [vmem:[#allocation2 + $0xf8] sm:$0xff]
        %v1782 = vpack.c.bf16 %v1719, %v1718
        %v1783 = vpack.c.bf16 %v1721, %v1720
        %v1784 = vpack.c.bf16 %v1723, %v1722
        %v1785 = vpack.c.bf16 %v1725, %v1724
        %v1786 = vpack.c.bf16 %v1727, %v1726
        %v1787 = vpack.c.bf16 %v1729, %v1728
        %v1788 = vpack.c.bf16 %v1731, %v1730
        %v1789 = vpack.c.bf16 %v1733, %v1732
        %v1790 = vpack.c.bf16 %v1735, %v1734
        %v1791 = vpack.c.bf16 %v1737, %v1736
        %v1792 = vpack.c.bf16 %v1739, %v1738
        %v1793 = vpack.c.bf16 %v1741, %v1740
        %v1794 = vpack.c.bf16 %v1743, %v1742
        %v1795 = vpack.c.bf16 %v1745, %v1744
        %v1796 = vpack.c.bf16 %v1747, %v1746
        %v1797 = vpack.c.bf16 %v1749, %v1748
        %s1798 = scalar_lea.vmem %s1, 320
        %v1799 = vld [vmem:[%s1798] sm:$0xf]
        %v1800 = vld [vmem:[%s1798 + $0x4] sm:$0xf]
        %v1801 = vld [vmem:[%s1798 + $0x8] sm:$0xf]
        %v1802 = vld [vmem:[%s1798 + $0xc] sm:$0xf]
        %v1803 = vld [vmem:[%s1798 + $0x10] sm:$0xf]
        %v1804 = vld [vmem:[%s1798 + $0x14] sm:$0xf]
        %v1805 = vld [vmem:[%s1798 + $0x18] sm:$0xf]
        %v1806 = vld [vmem:[%s1798 + $0x1c] sm:$0xf]
        %v1807 = vld [vmem:[%s1798 + $0x20] sm:$0xf]
        %v1808 = vld [vmem:[%s1798 + $0x24] sm:$0xf]
        %v1809 = vld [vmem:[%s1798 + $0x28] sm:$0xf]
        %v1810 = vld [vmem:[%s1798 + $0x2c] sm:$0xf]
        %v1811 = vld [vmem:[%s1798 + $0x30] sm:$0xf]
        %v1812 = vld [vmem:[%s1798 + $0x34] sm:$0xf]
        %v1813 = vld [vmem:[%s1798 + $0x38] sm:$0xf]
        %v1814 = vld [vmem:[%s1798 + $0x3c] sm:$0xf]
        %v1831 = vunpack.c.l.b16 %v1799
        %v1832 = vunpack.c.l.b16 %v1800
        %v1833 = vunpack.c.l.b16 %v1801
        %v1834 = vunpack.c.l.b16 %v1802
        %v1835 = vunpack.c.l.b16 %v1803
        %v1836 = vunpack.c.l.b16 %v1804
        %v1837 = vunpack.c.l.b16 %v1805
        %v1838 = vunpack.c.l.b16 %v1806
        %v1839 = vunpack.c.l.b16 %v1807
        %v1840 = vunpack.c.l.b16 %v1808
        %v1841 = vunpack.c.l.b16 %v1809
        %v1842 = vunpack.c.l.b16 %v1810
        %v1843 = vunpack.c.l.b16 %v1811
        %v1844 = vunpack.c.l.b16 %v1812
        %v1845 = vunpack.c.l.b16 %v1813
        %v1846 = vunpack.c.l.b16 %v1814
        %v1847 = vpack.c.b16 %v1832, %v1831
        %v1848 = vpack.c.b16 %v1834, %v1833
        %v1849 = vpack.c.b16 %v1836, %v1835
        %v1850 = vpack.c.b16 %v1838, %v1837
        %v1851 = vpack.c.b16 %v1840, %v1839
        %v1852 = vpack.c.b16 %v1842, %v1841
        %v1853 = vpack.c.b16 %v1844, %v1843
        %v1854 = vpack.c.b16 %v1846, %v1845
        %1863 = vmatpush.bf16.msra.mxu0 %v1854
        %1864 = vmatpush.bf16.msra.mxu0 %v1853
        %1865 = vmatpush.bf16.msra.mxu0 %v1852
        %1866 = vmatpush.bf16.msra.mxu0 %v1851
        %1867 = vmatpush.bf16.msra.mxu0 %v1850
        %1868 = vmatpush.bf16.msra.mxu0 %v1849
        %1869 = vmatpush.bf16.msra.mxu0 %v1848
        %1870 = vmatpush.bf16.msra.mxu0 %v1847
        %1871 = vmatmul.bf16.gmra.mxu0 %v1782
        %v1872 = vpop.f32.mrf.mxu0
        %v1873 = vadd.f32 0.0, %v1872
        %v1874 = vpop.f32.mrf.mxu0
        %v1875 = vadd.f32 0.0, %v1874
        %1876 = vmatmul.bf16.gmra.mxu0 %v1783
        %v1877 = vpop.f32.mrf.mxu0
        %v1878 = vadd.f32 0.0, %v1877
        %v1879 = vpop.f32.mrf.mxu0
        %v1880 = vadd.f32 0.0, %v1879
        %1881 = vmatmul.bf16.gmra.mxu0 %v1784
        %v1882 = vpop.f32.mrf.mxu0
        %v1883 = vadd.f32 0.0, %v1882
        %v1884 = vpop.f32.mrf.mxu0
        %v1885 = vadd.f32 0.0, %v1884
        %1886 = vmatmul.bf16.gmra.mxu0 %v1785
        %v1887 = vpop.f32.mrf.mxu0
        %v1888 = vadd.f32 0.0, %v1887
        %v1889 = vpop.f32.mrf.mxu0
        %v1890 = vadd.f32 0.0, %v1889
        %1891 = vmatmul.bf16.gmra.mxu0 %v1786
        %v1892 = vpop.f32.mrf.mxu0
        %v1893 = vadd.f32 0.0, %v1892
        %v1894 = vpop.f32.mrf.mxu0
        %v1895 = vadd.f32 0.0, %v1894
        %1896 = vmatmul.bf16.gmra.mxu0 %v1787
        %v1897 = vpop.f32.mrf.mxu0
        %v1898 = vadd.f32 0.0, %v1897
        %v1899 = vpop.f32.mrf.mxu0
        %v1900 = vadd.f32 0.0, %v1899
        %1901 = vmatmul.bf16.gmra.mxu0 %v1788
        %v1902 = vpop.f32.mrf.mxu0
        %v1903 = vadd.f32 0.0, %v1902
        %v1904 = vpop.f32.mrf.mxu0
        %v1905 = vadd.f32 0.0, %v1904
        %1906 = vmatmul.bf16.gmra.mxu0 %v1789
        %v1907 = vpop.f32.mrf.mxu0
        %v1908 = vadd.f32 0.0, %v1907
        %v1909 = vpop.f32.mrf.mxu0
        %v1910 = vadd.f32 0.0, %v1909
        %1911 = vmatmul.bf16.gmra.mxu0 %v1790
        %v1912 = vpop.f32.mrf.mxu0
        %v1913 = vadd.f32 0.0, %v1912
        %v1914 = vpop.f32.mrf.mxu0
        %v1915 = vadd.f32 0.0, %v1914
        %1916 = vmatmul.bf16.gmra.mxu0 %v1791
        %v1917 = vpop.f32.mrf.mxu0
        %v1918 = vadd.f32 0.0, %v1917
        %v1919 = vpop.f32.mrf.mxu0
        %v1920 = vadd.f32 0.0, %v1919
        %1921 = vmatmul.bf16.gmra.mxu0 %v1792
        %v1922 = vpop.f32.mrf.mxu0
        %v1923 = vadd.f32 0.0, %v1922
        %v1924 = vpop.f32.mrf.mxu0
        %v1925 = vadd.f32 0.0, %v1924
        %1926 = vmatmul.bf16.gmra.mxu0 %v1793
        %v1927 = vpop.f32.mrf.mxu0
        %v1928 = vadd.f32 0.0, %v1927
        %v1929 = vpop.f32.mrf.mxu0
        %v1930 = vadd.f32 0.0, %v1929
        %1931 = vmatmul.bf16.gmra.mxu0 %v1794
        %v1932 = vpop.f32.mrf.mxu0
        %v1933 = vadd.f32 0.0, %v1932
        %v1934 = vpop.f32.mrf.mxu0
        %v1935 = vadd.f32 0.0, %v1934
        %1936 = vmatmul.bf16.gmra.mxu0 %v1795
        %v1937 = vpop.f32.mrf.mxu0
        %v1938 = vadd.f32 0.0, %v1937
        %v1939 = vpop.f32.mrf.mxu0
        %v1940 = vadd.f32 0.0, %v1939
        %1941 = vmatmul.bf16.gmra.mxu0 %v1796
        %v1942 = vpop.f32.mrf.mxu0
        %v1943 = vadd.f32 0.0, %v1942
        %v1944 = vpop.f32.mrf.mxu0
        %v1945 = vadd.f32 0.0, %v1944
        %1946 = vmatmul.bf16.gmra.mxu0 %v1797
        %v1947 = vpop.f32.mrf.mxu0
        %v1948 = vadd.f32 0.0, %v1947
        %v1949 = vpop.f32.mrf.mxu0
        %v1950 = vadd.f32 0.0, %v1949
        %1951 = vdwg.mxu0
        %v1952 = vadd.f32 %v1750, %v1873
        %v1953 = vadd.f32 %v1751, %v1875
        %v1954 = vadd.f32 %v1752, %v1878
        %v1955 = vadd.f32 %v1753, %v1880
        %v1956 = vadd.f32 %v1754, %v1883
        %v1957 = vadd.f32 %v1755, %v1885
        %v1958 = vadd.f32 %v1756, %v1888
        %v1959 = vadd.f32 %v1757, %v1890
        %v1960 = vadd.f32 %v1758, %v1893
        %v1961 = vadd.f32 %v1759, %v1895
        %v1962 = vadd.f32 %v1760, %v1898
        %v1963 = vadd.f32 %v1761, %v1900
        %v1964 = vadd.f32 %v1762, %v1903
        %v1965 = vadd.f32 %v1763, %v1905
        %v1966 = vadd.f32 %v1764, %v1908
        %v1967 = vadd.f32 %v1765, %v1910
        %v1968 = vadd.f32 %v1766, %v1913
        %v1969 = vadd.f32 %v1767, %v1915
        %v1970 = vadd.f32 %v1768, %v1918
        %v1971 = vadd.f32 %v1769, %v1920
        %v1972 = vadd.f32 %v1770, %v1923
        %v1973 = vadd.f32 %v1771, %v1925
        %v1974 = vadd.f32 %v1772, %v1928
        %v1975 = vadd.f32 %v1773, %v1930
        %v1976 = vadd.f32 %v1774, %v1933
        %v1977 = vadd.f32 %v1775, %v1935
        %v1978 = vadd.f32 %v1776, %v1938
        %v1979 = vadd.f32 %v1777, %v1940
        %v1980 = vadd.f32 %v1778, %v1943
        %v1981 = vadd.f32 %v1779, %v1945
        %v1982 = vadd.f32 %v1780, %v1948
        %v1983 = vadd.f32 %v1781, %v1950
        %1984 = vst [vmem:[#allocation2] sm:$0xff] %v1952
        %1985 = vst [vmem:[#allocation2 + $0x8] sm:$0xff] %v1953
        %1986 = vst [vmem:[#allocation2 + $0x10] sm:$0xff] %v1954
        %1987 = vst [vmem:[#allocation2 + $0x18] sm:$0xff] %v1955
        %1988 = vst [vmem:[#allocation2 + $0x20] sm:$0xff] %v1956
        %1989 = vst [vmem:[#allocation2 + $0x28] sm:$0xff] %v1957
        %1990 = vst [vmem:[#allocation2 + $0x30] sm:$0xff] %v1958
        %1991 = vst [vmem:[#allocation2 + $0x38] sm:$0xff] %v1959
        %1992 = vst [vmem:[#allocation2 + $0x40] sm:$0xff] %v1960
        %1993 = vst [vmem:[#allocation2 + $0x48] sm:$0xff] %v1961
        %1994 = vst [vmem:[#allocation2 + $0x50] sm:$0xff] %v1962
        %1995 = vst [vmem:[#allocation2 + $0x58] sm:$0xff] %v1963
        %1996 = vst [vmem:[#allocation2 + $0x60] sm:$0xff] %v1964
        %1997 = vst [vmem:[#allocation2 + $0x68] sm:$0xff] %v1965
        %1998 = vst [vmem:[#allocation2 + $0x70] sm:$0xff] %v1966
        %1999 = vst [vmem:[#allocation2 + $0x78] sm:$0xff] %v1967
        %2000 = vst [vmem:[#allocation2 + $0x80] sm:$0xff] %v1968
        %2001 = vst [vmem:[#allocation2 + $0x88] sm:$0xff] %v1969
        %2002 = vst [vmem:[#allocation2 + $0x90] sm:$0xff] %v1970
        %2003 = vst [vmem:[#allocation2 + $0x98] sm:$0xff] %v1971
        %2004 = vst [vmem:[#allocation2 + $0xa0] sm:$0xff] %v1972
        %2005 = vst [vmem:[#allocation2 + $0xa8] sm:$0xff] %v1973
        %2006 = vst [vmem:[#allocation2 + $0xb0] sm:$0xff] %v1974
        %2007 = vst [vmem:[#allocation2 + $0xb8] sm:$0xff] %v1975
        %2008 = vst [vmem:[#allocation2 + $0xc0] sm:$0xff] %v1976
        %2009 = vst [vmem:[#allocation2 + $0xc8] sm:$0xff] %v1977
        %2010 = vst [vmem:[#allocation2 + $0xd0] sm:$0xff] %v1978
        %2011 = vst [vmem:[#allocation2 + $0xd8] sm:$0xff] %v1979
        %2012 = vst [vmem:[#allocation2 + $0xe0] sm:$0xff] %v1980
        %2013 = vst [vmem:[#allocation2 + $0xe8] sm:$0xff] %v1981
        %2014 = vst [vmem:[#allocation2 + $0xf0] sm:$0xff] %v1982
        %2015 = vst [vmem:[#allocation2 + $0xf8] sm:$0xff] %v1983
        %s2016 = scalar_lea.vmem %s195, 48
        %v2017 = vld [vmem:[%s2016] sm:$0xff]
        %v2018 = vld [vmem:[%s2016 + $0x8] sm:$0xff]
        %v2019 = vld [vmem:[%s2016 + $0x18] sm:$0xff]
        %v2020 = vld [vmem:[%s2016 + $0x20] sm:$0xff]
        %v2021 = vld [vmem:[%s2016 + $0x30] sm:$0xff]
        %v2022 = vld [vmem:[%s2016 + $0x38] sm:$0xff]
        %v2023 = vld [vmem:[%s2016 + $0x48] sm:$0xff]
        %v2024 = vld [vmem:[%s2016 + $0x50] sm:$0xff]
        %v2025 = vld [vmem:[%s2016 + $0x60] sm:$0xff]
        %v2026 = vld [vmem:[%s2016 + $0x68] sm:$0xff]
        %v2027 = vld [vmem:[%s2016 + $0x78] sm:$0xff]
        %v2028 = vld [vmem:[%s2016 + $0x80] sm:$0xff]
        %v2029 = vld [vmem:[%s2016 + $0x90] sm:$0xff]
        %v2030 = vld [vmem:[%s2016 + $0x98] sm:$0xff]
        %v2031 = vld [vmem:[%s2016 + $0xa8] sm:$0xff]
        %v2032 = vld [vmem:[%s2016 + $0xb0] sm:$0xff]
        %v2033 = vld [vmem:[%s2016 + $0xc0] sm:$0xff]
        %v2034 = vld [vmem:[%s2016 + $0xc8] sm:$0xff]
        %v2035 = vld [vmem:[%s2016 + $0xd8] sm:$0xff]
        %v2036 = vld [vmem:[%s2016 + $0xe0] sm:$0xff]
        %v2037 = vld [vmem:[%s2016 + $0xf0] sm:$0xff]
        %v2038 = vld [vmem:[%s2016 + $0xf8] sm:$0xff]
        %v2039 = vld [vmem:[%s2016 + $0x108] sm:$0xff]
        %v2040 = vld [vmem:[%s2016 + $0x110] sm:$0xff]
        %v2041 = vld [vmem:[%s2016 + $0x120] sm:$0xff]
        %v2042 = vld [vmem:[%s2016 + $0x128] sm:$0xff]
        %v2043 = vld [vmem:[%s2016 + $0x138] sm:$0xff]
        %v2044 = vld [vmem:[%s2016 + $0x140] sm:$0xff]
        %v2045 = vld [vmem:[%s2016 + $0x150] sm:$0xff]
        %v2046 = vld [vmem:[%s2016 + $0x158] sm:$0xff]
        %v2047 = vld [vmem:[%s2016 + $0x168] sm:$0xff]
        %v2048 = vld [vmem:[%s2016 + $0x170] sm:$0xff]
        %v2049 = vld [vmem:[#allocation2] sm:$0xff]
        %v2050 = vld [vmem:[#allocation2 + $0x8] sm:$0xff]
        %v2051 = vld [vmem:[#allocation2 + $0x10] sm:$0xff]
        %v2052 = vld [vmem:[#allocation2 + $0x18] sm:$0xff]
        %v2053 = vld [vmem:[#allocation2 + $0x20] sm:$0xff]
        %v2054 = vld [vmem:[#allocation2 + $0x28] sm:$0xff]
        %v2055 = vld [vmem:[#allocation2 + $0x30] sm:$0xff]
        %v2056 = vld [vmem:[#allocation2 + $0x38] sm:$0xff]
        %v2057 = vld [vmem:[#allocation2 + $0x40] sm:$0xff]
        %v2058 = vld [vmem:[#allocation2 + $0x48] sm:$0xff]
        %v2059 = vld [vmem:[#allocation2 + $0x50] sm:$0xff]
        %v2060 = vld [vmem:[#allocation2 + $0x58] sm:$0xff]
        %v2061 = vld [vmem:[#allocation2 + $0x60] sm:$0xff]
        %v2062 = vld [vmem:[#allocation2 + $0x68] sm:$0xff]
        %v2063 = vld [vmem:[#allocation2 + $0x70] sm:$0xff]
        %v2064 = vld [vmem:[#allocation2 + $0x78] sm:$0xff]
        %v2065 = vld [vmem:[#allocation2 + $0x80] sm:$0xff]
        %v2066 = vld [vmem:[#allocation2 + $0x88] sm:$0xff]
        %v2067 = vld [vmem:[#allocation2 + $0x90] sm:$0xff]
        %v2068 = vld [vmem:[#allocation2 + $0x98] sm:$0xff]
        %v2069 = vld [vmem:[#allocation2 + $0xa0] sm:$0xff]
        %v2070 = vld [vmem:[#allocation2 + $0xa8] sm:$0xff]
        %v2071 = vld [vmem:[#allocation2 + $0xb0] sm:$0xff]
        %v2072 = vld [vmem:[#allocation2 + $0xb8] sm:$0xff]
        %v2073 = vld [vmem:[#allocation2 + $0xc0] sm:$0xff]
        %v2074 = vld [vmem:[#allocation2 + $0xc8] sm:$0xff]
        %v2075 = vld [vmem:[#allocation2 + $0xd0] sm:$0xff]
        %v2076 = vld [vmem:[#allocation2 + $0xd8] sm:$0xff]
        %v2077 = vld [vmem:[#allocation2 + $0xe0] sm:$0xff]
        %v2078 = vld [vmem:[#allocation2 + $0xe8] sm:$0xff]
        %v2079 = vld [vmem:[#allocation2 + $0xf0] sm:$0xff]
        %v2080 = vld [vmem:[#allocation2 + $0xf8] sm:$0xff]
        %v2081 = vpack.c.bf16 %v2018, %v2017
        %v2082 = vpack.c.bf16 %v2020, %v2019
        %v2083 = vpack.c.bf16 %v2022, %v2021
        %v2084 = vpack.c.bf16 %v2024, %v2023
        %v2085 = vpack.c.bf16 %v2026, %v2025
        %v2086 = vpack.c.bf16 %v2028, %v2027
        %v2087 = vpack.c.bf16 %v2030, %v2029
        %v2088 = vpack.c.bf16 %v2032, %v2031
        %v2089 = vpack.c.bf16 %v2034, %v2033
        %v2090 = vpack.c.bf16 %v2036, %v2035
        %v2091 = vpack.c.bf16 %v2038, %v2037
        %v2092 = vpack.c.bf16 %v2040, %v2039
        %v2093 = vpack.c.bf16 %v2042, %v2041
        %v2094 = vpack.c.bf16 %v2044, %v2043
        %v2095 = vpack.c.bf16 %v2046, %v2045
        %v2096 = vpack.c.bf16 %v2048, %v2047
        %s2097 = scalar_lea.vmem %s1, 384
        %v2098 = vld [vmem:[%s2097] sm:$0xf]
        %v2099 = vld [vmem:[%s2097 + $0x4] sm:$0xf]
        %v2100 = vld [vmem:[%s2097 + $0x8] sm:$0xf]
        %v2101 = vld [vmem:[%s2097 + $0xc] sm:$0xf]
        %v2102 = vld [vmem:[%s2097 + $0x10] sm:$0xf]
        %v2103 = vld [vmem:[%s2097 + $0x14] sm:$0xf]
        %v2104 = vld [vmem:[%s2097 + $0x18] sm:$0xf]
        %v2105 = vld [vmem:[%s2097 + $0x1c] sm:$0xf]
        %v2106 = vld [vmem:[%s2097 + $0x20] sm:$0xf]
        %v2107 = vld [vmem:[%s2097 + $0x24] sm:$0xf]
        %v2108 = vld [vmem:[%s2097 + $0x28] sm:$0xf]
        %v2109 = vld [vmem:[%s2097 + $0x2c] sm:$0xf]
        %v2110 = vld [vmem:[%s2097 + $0x30] sm:$0xf]
        %v2111 = vld [vmem:[%s2097 + $0x34] sm:$0xf]
        %v2112 = vld [vmem:[%s2097 + $0x38] sm:$0xf]
        %v2113 = vld [vmem:[%s2097 + $0x3c] sm:$0xf]
        %v2130 = vunpack.c.l.b16 %v2098
        %v2131 = vunpack.c.l.b16 %v2099
        %v2132 = vunpack.c.l.b16 %v2100
        %v2133 = vunpack.c.l.b16 %v2101
        %v2134 = vunpack.c.l.b16 %v2102
        %v2135 = vunpack.c.l.b16 %v2103
        %v2136 = vunpack.c.l.b16 %v2104
        %v2137 = vunpack.c.l.b16 %v2105
        %v2138 = vunpack.c.l.b16 %v2106
        %v2139 = vunpack.c.l.b16 %v2107
        %v2140 = vunpack.c.l.b16 %v2108
        %v2141 = vunpack.c.l.b16 %v2109
        %v2142 = vunpack.c.l.b16 %v2110
        %v2143 = vunpack.c.l.b16 %v2111
        %v2144 = vunpack.c.l.b16 %v2112
        %v2145 = vunpack.c.l.b16 %v2113
        %v2146 = vpack.c.b16 %v2131, %v2130
        %v2147 = vpack.c.b16 %v2133, %v2132
        %v2148 = vpack.c.b16 %v2135, %v2134
        %v2149 = vpack.c.b16 %v2137, %v2136
        %v2150 = vpack.c.b16 %v2139, %v2138
        %v2151 = vpack.c.b16 %v2141, %v2140
        %v2152 = vpack.c.b16 %v2143, %v2142
        %v2153 = vpack.c.b16 %v2145, %v2144
        %2162 = vmatpush.bf16.msra.mxu0 %v2153
        %2163 = vmatpush.bf16.msra.mxu0 %v2152
        %2164 = vmatpush.bf16.msra.mxu0 %v2151
        %2165 = vmatpush.bf16.msra.mxu0 %v2150
        %2166 = vmatpush.bf16.msra.mxu0 %v2149
        %2167 = vmatpush.bf16.msra.mxu0 %v2148
        %2168 = vmatpush.bf16.msra.mxu0 %v2147
        %2169 = vmatpush.bf16.msra.mxu0 %v2146
        %2170 = vmatmul.bf16.gmra.mxu0 %v2081
        %v2171 = vpop.f32.mrf.mxu0
        %v2172 = vadd.f32 0.0, %v2171
        %v2173 = vpop.f32.mrf.mxu0
        %v2174 = vadd.f32 0.0, %v2173
        %2175 = vmatmul.bf16.gmra.mxu0 %v2082
        %v2176 = vpop.f32.mrf.mxu0
        %v2177 = vadd.f32 0.0, %v2176
        %v2178 = vpop.f32.mrf.mxu0
        %v2179 = vadd.f32 0.0, %v2178
        %2180 = vmatmul.bf16.gmra.mxu0 %v2083
        %v2181 = vpop.f32.mrf.mxu0
        %v2182 = vadd.f32 0.0, %v2181
        %v2183 = vpop.f32.mrf.mxu0
        %v2184 = vadd.f32 0.0, %v2183
        %2185 = vmatmul.bf16.gmra.mxu0 %v2084
        %v2186 = vpop.f32.mrf.mxu0
        %v2187 = vadd.f32 0.0, %v2186
        %v2188 = vpop.f32.mrf.mxu0
        %v2189 = vadd.f32 0.0, %v2188
        %2190 = vmatmul.bf16.gmra.mxu0 %v2085
        %v2191 = vpop.f32.mrf.mxu0
        %v2192 = vadd.f32 0.0, %v2191
        %v2193 = vpop.f32.mrf.mxu0
        %v2194 = vadd.f32 0.0, %v2193
        %2195 = vmatmul.bf16.gmra.mxu0 %v2086
        %v2196 = vpop.f32.mrf.mxu0
        %v2197 = vadd.f32 0.0, %v2196
        %v2198 = vpop.f32.mrf.mxu0
        %v2199 = vadd.f32 0.0, %v2198
        %2200 = vmatmul.bf16.gmra.mxu0 %v2087
        %v2201 = vpop.f32.mrf.mxu0
        %v2202 = vadd.f32 0.0, %v2201
        %v2203 = vpop.f32.mrf.mxu0
        %v2204 = vadd.f32 0.0, %v2203
        %2205 = vmatmul.bf16.gmra.mxu0 %v2088
        %v2206 = vpop.f32.mrf.mxu0
        %v2207 = vadd.f32 0.0, %v2206
        %v2208 = vpop.f32.mrf.mxu0
        %v2209 = vadd.f32 0.0, %v2208
        %2210 = vmatmul.bf16.gmra.mxu0 %v2089
        %v2211 = vpop.f32.mrf.mxu0
        %v2212 = vadd.f32 0.0, %v2211
        %v2213 = vpop.f32.mrf.mxu0
        %v2214 = vadd.f32 0.0, %v2213
        %2215 = vmatmul.bf16.gmra.mxu0 %v2090
        %v2216 = vpop.f32.mrf.mxu0
        %v2217 = vadd.f32 0.0, %v2216
        %v2218 = vpop.f32.mrf.mxu0
        %v2219 = vadd.f32 0.0, %v2218
        %2220 = vmatmul.bf16.gmra.mxu0 %v2091
        %v2221 = vpop.f32.mrf.mxu0
        %v2222 = vadd.f32 0.0, %v2221
        %v2223 = vpop.f32.mrf.mxu0
        %v2224 = vadd.f32 0.0, %v2223
        %2225 = vmatmul.bf16.gmra.mxu0 %v2092
        %v2226 = vpop.f32.mrf.mxu0
        %v2227 = vadd.f32 0.0, %v2226
        %v2228 = vpop.f32.mrf.mxu0
        %v2229 = vadd.f32 0.0, %v2228
        %2230 = vmatmul.bf16.gmra.mxu0 %v2093
        %v2231 = vpop.f32.mrf.mxu0
        %v2232 = vadd.f32 0.0, %v2231
        %v2233 = vpop.f32.mrf.mxu0
        %v2234 = vadd.f32 0.0, %v2233
        %2235 = vmatmul.bf16.gmra.mxu0 %v2094
        %v2236 = vpop.f32.mrf.mxu0
        %v2237 = vadd.f32 0.0, %v2236
        %v2238 = vpop.f32.mrf.mxu0
        %v2239 = vadd.f32 0.0, %v2238
        %2240 = vmatmul.bf16.gmra.mxu0 %v2095
        %v2241 = vpop.f32.mrf.mxu0
        %v2242 = vadd.f32 0.0, %v2241
        %v2243 = vpop.f32.mrf.mxu0
        %v2244 = vadd.f32 0.0, %v2243
        %2245 = vmatmul.bf16.gmra.mxu0 %v2096
        %v2246 = vpop.f32.mrf.mxu0
        %v2247 = vadd.f32 0.0, %v2246
        %v2248 = vpop.f32.mrf.mxu0
        %v2249 = vadd.f32 0.0, %v2248
        %2250 = vdwg.mxu0
        %v2251 = vadd.f32 %v2049, %v2172
        %v2252 = vadd.f32 %v2050, %v2174
        %v2253 = vadd.f32 %v2051, %v2177
        %v2254 = vadd.f32 %v2052, %v2179
        %v2255 = vadd.f32 %v2053, %v2182
        %v2256 = vadd.f32 %v2054, %v2184
        %v2257 = vadd.f32 %v2055, %v2187
        %v2258 = vadd.f32 %v2056, %v2189
        %v2259 = vadd.f32 %v2057, %v2192
        %v2260 = vadd.f32 %v2058, %v2194
        %v2261 = vadd.f32 %v2059, %v2197
        %v2262 = vadd.f32 %v2060, %v2199
        %v2263 = vadd.f32 %v2061, %v2202
        %v2264 = vadd.f32 %v2062, %v2204
        %v2265 = vadd.f32 %v2063, %v2207
        %v2266 = vadd.f32 %v2064, %v2209
        %v2267 = vadd.f32 %v2065, %v2212
        %v2268 = vadd.f32 %v2066, %v2214
        %v2269 = vadd.f32 %v2067, %v2217
        %v2270 = vadd.f32 %v2068, %v2219
        %v2271 = vadd.f32 %v2069, %v2222
        %v2272 = vadd.f32 %v2070, %v2224
        %v2273 = vadd.f32 %v2071, %v2227
        %v2274 = vadd.f32 %v2072, %v2229
        %v2275 = vadd.f32 %v2073, %v2232
        %v2276 = vadd.f32 %v2074, %v2234
        %v2277 = vadd.f32 %v2075, %v2237
        %v2278 = vadd.f32 %v2076, %v2239
        %v2279 = vadd.f32 %v2077, %v2242
        %v2280 = vadd.f32 %v2078, %v2244
        %v2281 = vadd.f32 %v2079, %v2247
        %v2282 = vadd.f32 %v2080, %v2249
        %2283 = vst [vmem:[#allocation2] sm:$0xff] %v2251
        %2284 = vst [vmem:[#allocation2 + $0x8] sm:$0xff] %v2252
        %2285 = vst [vmem:[#allocation2 + $0x10] sm:$0xff] %v2253
        %2286 = vst [vmem:[#allocation2 + $0x18] sm:$0xff] %v2254
        %2287 = vst [vmem:[#allocation2 + $0x20] sm:$0xff] %v2255
        %2288 = vst [vmem:[#allocation2 + $0x28] sm:$0xff] %v2256
        %2289 = vst [vmem:[#allocation2 + $0x30] sm:$0xff] %v2257
        %2290 = vst [vmem:[#allocation2 + $0x38] sm:$0xff] %v2258
        %2291 = vst [vmem:[#allocation2 + $0x40] sm:$0xff] %v2259
        %2292 = vst [vmem:[#allocation2 + $0x48] sm:$0xff] %v2260
        %2293 = vst [vmem:[#allocation2 + $0x50] sm:$0xff] %v2261
        %2294 = vst [vmem:[#allocation2 + $0x58] sm:$0xff] %v2262
        %2295 = vst [vmem:[#allocation2 + $0x60] sm:$0xff] %v2263
        %2296 = vst [vmem:[#allocation2 + $0x68] sm:$0xff] %v2264
        %2297 = vst [vmem:[#allocation2 + $0x70] sm:$0xff] %v2265
        %2298 = vst [vmem:[#allocation2 + $0x78] sm:$0xff] %v2266
        %2299 = vst [vmem:[#allocation2 + $0x80] sm:$0xff] %v2267
        %2300 = vst [vmem:[#allocation2 + $0x88] sm:$0xff] %v2268
        %2301 = vst [vmem:[#allocation2 + $0x90] sm:$0xff] %v2269
        %2302 = vst [vmem:[#allocation2 + $0x98] sm:$0xff] %v2270
        %2303 = vst [vmem:[#allocation2 + $0xa0] sm:$0xff] %v2271
        %2304 = vst [vmem:[#allocation2 + $0xa8] sm:$0xff] %v2272
        %2305 = vst [vmem:[#allocation2 + $0xb0] sm:$0xff] %v2273
        %2306 = vst [vmem:[#allocation2 + $0xb8] sm:$0xff] %v2274
        %2307 = vst [vmem:[#allocation2 + $0xc0] sm:$0xff] %v2275
        %2308 = vst [vmem:[#allocation2 + $0xc8] sm:$0xff] %v2276
        %2309 = vst [vmem:[#allocation2 + $0xd0] sm:$0xff] %v2277
        %2310 = vst [vmem:[#allocation2 + $0xd8] sm:$0xff] %v2278
        %2311 = vst [vmem:[#allocation2 + $0xe0] sm:$0xff] %v2279
        %2312 = vst [vmem:[#allocation2 + $0xe8] sm:$0xff] %v2280
        %2313 = vst [vmem:[#allocation2 + $0xf0] sm:$0xff] %v2281
        %2314 = vst [vmem:[#allocation2 + $0xf8] sm:$0xff] %v2282
        %v2315 = vld [vmem:[%s2016 + $0x1] sm:$0xff]
        %v2316 = vld [vmem:[%s2016 + $0x9] sm:$0xff]
        %v2317 = vld [vmem:[%s2016 + $0x19] sm:$0xff]
        %v2318 = vld [vmem:[%s2016 + $0x21] sm:$0xff]
        %v2319 = vld [vmem:[%s2016 + $0x31] sm:$0xff]
        %v2320 = vld [vmem:[%s2016 + $0x39] sm:$0xff]
        %v2321 = vld [vmem:[%s2016 + $0x49] sm:$0xff]
        %v2322 = vld [vmem:[%s2016 + $0x51] sm:$0xff]
        %v2323 = vld [vmem:[%s2016 + $0x61] sm:$0xff]
        %v2324 = vld [vmem:[%s2016 + $0x69] sm:$0xff]
        %v2325 = vld [vmem:[%s2016 + $0x79] sm:$0xff]
        %v2326 = vld [vmem:[%s2016 + $0x81] sm:$0xff]
        %v2327 = vld [vmem:[%s2016 + $0x91] sm:$0xff]
        %v2328 = vld [vmem:[%s2016 + $0x99] sm:$0xff]
        %v2329 = vld [vmem:[%s2016 + $0xa9] sm:$0xff]
        %v2330 = vld [vmem:[%s2016 + $0xb1] sm:$0xff]
        %v2331 = vld [vmem:[%s2016 + $0xc1] sm:$0xff]
        %v2332 = vld [vmem:[%s2016 + $0xc9] sm:$0xff]
        %v2333 = vld [vmem:[%s2016 + $0xd9] sm:$0xff]
        %v2334 = vld [vmem:[%s2016 + $0xe1] sm:$0xff]
        %v2335 = vld [vmem:[%s2016 + $0xf1] sm:$0xff]
        %v2336 = vld [vmem:[%s2016 + $0xf9] sm:$0xff]
        %v2337 = vld [vmem:[%s2016 + $0x109] sm:$0xff]
        %v2338 = vld [vmem:[%s2016 + $0x111] sm:$0xff]
        %v2339 = vld [vmem:[%s2016 + $0x121] sm:$0xff]
        %v2340 = vld [vmem:[%s2016 + $0x129] sm:$0xff]
        %v2341 = vld [vmem:[%s2016 + $0x139] sm:$0xff]
        %v2342 = vld [vmem:[%s2016 + $0x141] sm:$0xff]
        %v2343 = vld [vmem:[%s2016 + $0x151] sm:$0xff]
        %v2344 = vld [vmem:[%s2016 + $0x159] sm:$0xff]
        %v2345 = vld [vmem:[%s2016 + $0x169] sm:$0xff]
        %v2346 = vld [vmem:[%s2016 + $0x171] sm:$0xff]
        %v2347 = vld [vmem:[#allocation2] sm:$0xff]
        %v2348 = vld [vmem:[#allocation2 + $0x8] sm:$0xff]
        %v2349 = vld [vmem:[#allocation2 + $0x10] sm:$0xff]
        %v2350 = vld [vmem:[#allocation2 + $0x18] sm:$0xff]
        %v2351 = vld [vmem:[#allocation2 + $0x20] sm:$0xff]
        %v2352 = vld [vmem:[#allocation2 + $0x28] sm:$0xff]
        %v2353 = vld [vmem:[#allocation2 + $0x30] sm:$0xff]
        %v2354 = vld [vmem:[#allocation2 + $0x38] sm:$0xff]
        %v2355 = vld [vmem:[#allocation2 + $0x40] sm:$0xff]
        %v2356 = vld [vmem:[#allocation2 + $0x48] sm:$0xff]
        %v2357 = vld [vmem:[#allocation2 + $0x50] sm:$0xff]
        %v2358 = vld [vmem:[#allocation2 + $0x58] sm:$0xff]
        %v2359 = vld [vmem:[#allocation2 + $0x60] sm:$0xff]
        %v2360 = vld [vmem:[#allocation2 + $0x68] sm:$0xff]
        %v2361 = vld [vmem:[#allocation2 + $0x70] sm:$0xff]
        %v2362 = vld [vmem:[#allocation2 + $0x78] sm:$0xff]
        %v2363 = vld [vmem:[#allocation2 + $0x80] sm:$0xff]
        %v2364 = vld [vmem:[#allocation2 + $0x88] sm:$0xff]
        %v2365 = vld [vmem:[#allocation2 + $0x90] sm:$0xff]
        %v2366 = vld [vmem:[#allocation2 + $0x98] sm:$0xff]
        %v2367 = vld [vmem:[#allocation2 + $0xa0] sm:$0xff]
        %v2368 = vld [vmem:[#allocation2 + $0xa8] sm:$0xff]
        %v2369 = vld [vmem:[#allocation2 + $0xb0] sm:$0xff]
        %v2370 = vld [vmem:[#allocation2 + $0xb8] sm:$0xff]
        %v2371 = vld [vmem:[#allocation2 + $0xc0] sm:$0xff]
        %v2372 = vld [vmem:[#allocation2 + $0xc8] sm:$0xff]
        %v2373 = vld [vmem:[#allocation2 + $0xd0] sm:$0xff]
        %v2374 = vld [vmem:[#allocation2 + $0xd8] sm:$0xff]
        %v2375 = vld [vmem:[#allocation2 + $0xe0] sm:$0xff]
        %v2376 = vld [vmem:[#allocation2 + $0xe8] sm:$0xff]
        %v2377 = vld [vmem:[#allocation2 + $0xf0] sm:$0xff]
        %v2378 = vld [vmem:[#allocation2 + $0xf8] sm:$0xff]
        %v2379 = vpack.c.bf16 %v2316, %v2315
        %v2380 = vpack.c.bf16 %v2318, %v2317
        %v2381 = vpack.c.bf16 %v2320, %v2319
        %v2382 = vpack.c.bf16 %v2322, %v2321
        %v2383 = vpack.c.bf16 %v2324, %v2323
        %v2384 = vpack.c.bf16 %v2326, %v2325
        %v2385 = vpack.c.bf16 %v2328, %v2327
        %v2386 = vpack.c.bf16 %v2330, %v2329
        %v2387 = vpack.c.bf16 %v2332, %v2331
        %v2388 = vpack.c.bf16 %v2334, %v2333
        %v2389 = vpack.c.bf16 %v2336, %v2335
        %v2390 = vpack.c.bf16 %v2338, %v2337
        %v2391 = vpack.c.bf16 %v2340, %v2339
        %v2392 = vpack.c.bf16 %v2342, %v2341
        %v2393 = vpack.c.bf16 %v2344, %v2343
        %v2394 = vpack.c.bf16 %v2346, %v2345
        %s2395 = scalar_lea.vmem %s1, 448
        %v2396 = vld [vmem:[%s2395] sm:$0xf]
        %v2397 = vld [vmem:[%s2395 + $0x4] sm:$0xf]
        %v2398 = vld [vmem:[%s2395 + $0x8] sm:$0xf]
        %v2399 = vld [vmem:[%s2395 + $0xc] sm:$0xf]
        %v2400 = vld [vmem:[%s2395 + $0x10] sm:$0xf]
        %v2401 = vld [vmem:[%s2395 + $0x14] sm:$0xf]
        %v2402 = vld [vmem:[%s2395 + $0x18] sm:$0xf]
        %v2403 = vld [vmem:[%s2395 + $0x1c] sm:$0xf]
        %v2404 = vld [vmem:[%s2395 + $0x20] sm:$0xf]
        %v2405 = vld [vmem:[%s2395 + $0x24] sm:$0xf]
        %v2406 = vld [vmem:[%s2395 + $0x28] sm:$0xf]
        %v2407 = vld [vmem:[%s2395 + $0x2c] sm:$0xf]
        %v2408 = vld [vmem:[%s2395 + $0x30] sm:$0xf]
        %v2409 = vld [vmem:[%s2395 + $0x34] sm:$0xf]
        %v2410 = vld [vmem:[%s2395 + $0x38] sm:$0xf]
        %v2411 = vld [vmem:[%s2395 + $0x3c] sm:$0xf]
        %v2428 = vunpack.c.l.b16 %v2396
        %v2429 = vunpack.c.l.b16 %v2397
        %v2430 = vunpack.c.l.b16 %v2398
        %v2431 = vunpack.c.l.b16 %v2399
        %v2432 = vunpack.c.l.b16 %v2400
        %v2433 = vunpack.c.l.b16 %v2401
        %v2434 = vunpack.c.l.b16 %v2402
        %v2435 = vunpack.c.l.b16 %v2403
        %v2436 = vunpack.c.l.b16 %v2404
        %v2437 = vunpack.c.l.b16 %v2405
        %v2438 = vunpack.c.l.b16 %v2406
        %v2439 = vunpack.c.l.b16 %v2407
        %v2440 = vunpack.c.l.b16 %v2408
        %v2441 = vunpack.c.l.b16 %v2409
        %v2442 = vunpack.c.l.b16 %v2410
        %v2443 = vunpack.c.l.b16 %v2411
        %v2444 = vpack.c.b16 %v2429, %v2428
        %v2445 = vpack.c.b16 %v2431, %v2430
        %v2446 = vpack.c.b16 %v2433, %v2432
        %v2447 = vpack.c.b16 %v2435, %v2434
        %v2448 = vpack.c.b16 %v2437, %v2436
        %v2449 = vpack.c.b16 %v2439, %v2438
        %v2450 = vpack.c.b16 %v2441, %v2440
        %v2451 = vpack.c.b16 %v2443, %v2442
        %2460 = vmatpush.bf16.msra.mxu0 %v2451
        %2461 = vmatpush.bf16.msra.mxu0 %v2450
        %2462 = vmatpush.bf16.msra.mxu0 %v2449
        %2463 = vmatpush.bf16.msra.mxu0 %v2448
        %2464 = vmatpush.bf16.msra.mxu0 %v2447
        %2465 = vmatpush.bf16.msra.mxu0 %v2446
        %2466 = vmatpush.bf16.msra.mxu0 %v2445
        %2467 = vmatpush.bf16.msra.mxu0 %v2444
        %2468 = vmatmul.bf16.gmra.mxu0 %v2379
        %v2469 = vpop.f32.mrf.mxu0
        %v2470 = vadd.f32 0.0, %v2469
        %v2471 = vpop.f32.mrf.mxu0
        %v2472 = vadd.f32 0.0, %v2471
        %2473 = vmatmul.bf16.gmra.mxu0 %v2380
        %v2474 = vpop.f32.mrf.mxu0
        %v2475 = vadd.f32 0.0, %v2474
        %v2476 = vpop.f32.mrf.mxu0
        %v2477 = vadd.f32 0.0, %v2476
        %2478 = vmatmul.bf16.gmra.mxu0 %v2381
        %v2479 = vpop.f32.mrf.mxu0
        %v2480 = vadd.f32 0.0, %v2479
        %v2481 = vpop.f32.mrf.mxu0
        %v2482 = vadd.f32 0.0, %v2481
        %2483 = vmatmul.bf16.gmra.mxu0 %v2382
        %v2484 = vpop.f32.mrf.mxu0
        %v2485 = vadd.f32 0.0, %v2484
        %v2486 = vpop.f32.mrf.mxu0
        %v2487 = vadd.f32 0.0, %v2486
        %2488 = vmatmul.bf16.gmra.mxu0 %v2383
        %v2489 = vpop.f32.mrf.mxu0
        %v2490 = vadd.f32 0.0, %v2489
        %v2491 = vpop.f32.mrf.mxu0
        %v2492 = vadd.f32 0.0, %v2491
        %2493 = vmatmul.bf16.gmra.mxu0 %v2384
        %v2494 = vpop.f32.mrf.mxu0
        %v2495 = vadd.f32 0.0, %v2494
        %v2496 = vpop.f32.mrf.mxu0
        %v2497 = vadd.f32 0.0, %v2496
        %2498 = vmatmul.bf16.gmra.mxu0 %v2385
        %v2499 = vpop.f32.mrf.mxu0
        %v2500 = vadd.f32 0.0, %v2499
        %v2501 = vpop.f32.mrf.mxu0
        %v2502 = vadd.f32 0.0, %v2501
        %2503 = vmatmul.bf16.gmra.mxu0 %v2386
        %v2504 = vpop.f32.mrf.mxu0
        %v2505 = vadd.f32 0.0, %v2504
        %v2506 = vpop.f32.mrf.mxu0
        %v2507 = vadd.f32 0.0, %v2506
        %2508 = vmatmul.bf16.gmra.mxu0 %v2387
        %v2509 = vpop.f32.mrf.mxu0
        %v2510 = vadd.f32 0.0, %v2509
        %v2511 = vpop.f32.mrf.mxu0
        %v2512 = vadd.f32 0.0, %v2511
        %2513 = vmatmul.bf16.gmra.mxu0 %v2388
        %v2514 = vpop.f32.mrf.mxu0
        %v2515 = vadd.f32 0.0, %v2514
        %v2516 = vpop.f32.mrf.mxu0
        %v2517 = vadd.f32 0.0, %v2516
        %2518 = vmatmul.bf16.gmra.mxu0 %v2389
        %v2519 = vpop.f32.mrf.mxu0
        %v2520 = vadd.f32 0.0, %v2519
        %v2521 = vpop.f32.mrf.mxu0
        %v2522 = vadd.f32 0.0, %v2521
        %2523 = vmatmul.bf16.gmra.mxu0 %v2390
        %v2524 = vpop.f32.mrf.mxu0
        %v2525 = vadd.f32 0.0, %v2524
        %v2526 = vpop.f32.mrf.mxu0
        %v2527 = vadd.f32 0.0, %v2526
        %2528 = vmatmul.bf16.gmra.mxu0 %v2391
        %v2529 = vpop.f32.mrf.mxu0
        %v2530 = vadd.f32 0.0, %v2529
        %v2531 = vpop.f32.mrf.mxu0
        %v2532 = vadd.f32 0.0, %v2531
        %2533 = vmatmul.bf16.gmra.mxu0 %v2392
        %v2534 = vpop.f32.mrf.mxu0
        %v2535 = vadd.f32 0.0, %v2534
        %v2536 = vpop.f32.mrf.mxu0
        %v2537 = vadd.f32 0.0, %v2536
        %2538 = vmatmul.bf16.gmra.mxu0 %v2393
        %v2539 = vpop.f32.mrf.mxu0
        %v2540 = vadd.f32 0.0, %v2539
        %v2541 = vpop.f32.mrf.mxu0
        %v2542 = vadd.f32 0.0, %v2541
        %2543 = vmatmul.bf16.gmra.mxu0 %v2394
        %v2544 = vpop.f32.mrf.mxu0
        %v2545 = vadd.f32 0.0, %v2544
        %v2546 = vpop.f32.mrf.mxu0
        %v2547 = vadd.f32 0.0, %v2546
        %2548 = vdwg.mxu0
        %v2549 = vadd.f32 %v2347, %v2470
        %v2550 = vadd.f32 %v2348, %v2472
        %v2551 = vadd.f32 %v2349, %v2475
        %v2552 = vadd.f32 %v2350, %v2477
        %v2553 = vadd.f32 %v2351, %v2480
        %v2554 = vadd.f32 %v2352, %v2482
        %v2555 = vadd.f32 %v2353, %v2485
        %v2556 = vadd.f32 %v2354, %v2487
        %v2557 = vadd.f32 %v2355, %v2490
        %v2558 = vadd.f32 %v2356, %v2492
        %v2559 = vadd.f32 %v2357, %v2495
        %v2560 = vadd.f32 %v2358, %v2497
        %v2561 = vadd.f32 %v2359, %v2500
        %v2562 = vadd.f32 %v2360, %v2502
        %v2563 = vadd.f32 %v2361, %v2505
        %v2564 = vadd.f32 %v2362, %v2507
        %v2565 = vadd.f32 %v2363, %v2510
        %v2566 = vadd.f32 %v2364, %v2512
        %v2567 = vadd.f32 %v2365, %v2515
        %v2568 = vadd.f32 %v2366, %v2517
        %v2569 = vadd.f32 %v2367, %v2520
        %v2570 = vadd.f32 %v2368, %v2522
        %v2571 = vadd.f32 %v2369, %v2525
        %v2572 = vadd.f32 %v2370, %v2527
        %v2573 = vadd.f32 %v2371, %v2530
        %v2574 = vadd.f32 %v2372, %v2532
        %v2575 = vadd.f32 %v2373, %v2535
        %v2576 = vadd.f32 %v2374, %v2537
        %v2577 = vadd.f32 %v2375, %v2540
        %v2578 = vadd.f32 %v2376, %v2542
        %v2579 = vadd.f32 %v2377, %v2545
        %v2580 = vadd.f32 %v2378, %v2547
        %2581 = vst [vmem:[#allocation2] sm:$0xff] %v2549
        %2582 = vst [vmem:[#allocation2 + $0x8] sm:$0xff] %v2550
        %2583 = vst [vmem:[#allocation2 + $0x10] sm:$0xff] %v2551
        %2584 = vst [vmem:[#allocation2 + $0x18] sm:$0xff] %v2552
        %2585 = vst [vmem:[#allocation2 + $0x20] sm:$0xff] %v2553
        %2586 = vst [vmem:[#allocation2 + $0x28] sm:$0xff] %v2554
        %2587 = vst [vmem:[#allocation2 + $0x30] sm:$0xff] %v2555
        %2588 = vst [vmem:[#allocation2 + $0x38] sm:$0xff] %v2556
        %2589 = vst [vmem:[#allocation2 + $0x40] sm:$0xff] %v2557
        %2590 = vst [vmem:[#allocation2 + $0x48] sm:$0xff] %v2558
        %2591 = vst [vmem:[#allocation2 + $0x50] sm:$0xff] %v2559
        %2592 = vst [vmem:[#allocation2 + $0x58] sm:$0xff] %v2560
        %2593 = vst [vmem:[#allocation2 + $0x60] sm:$0xff] %v2561
        %2594 = vst [vmem:[#allocation2 + $0x68] sm:$0xff] %v2562
        %2595 = vst [vmem:[#allocation2 + $0x70] sm:$0xff] %v2563
        %2596 = vst [vmem:[#allocation2 + $0x78] sm:$0xff] %v2564
        %2597 = vst [vmem:[#allocation2 + $0x80] sm:$0xff] %v2565
        %2598 = vst [vmem:[#allocation2 + $0x88] sm:$0xff] %v2566
        %2599 = vst [vmem:[#allocation2 + $0x90] sm:$0xff] %v2567
        %2600 = vst [vmem:[#allocation2 + $0x98] sm:$0xff] %v2568
        %2601 = vst [vmem:[#allocation2 + $0xa0] sm:$0xff] %v2569
        %2602 = vst [vmem:[#allocation2 + $0xa8] sm:$0xff] %v2570
        %2603 = vst [vmem:[#allocation2 + $0xb0] sm:$0xff] %v2571
        %2604 = vst [vmem:[#allocation2 + $0xb8] sm:$0xff] %v2572
        %2605 = vst [vmem:[#allocation2 + $0xc0] sm:$0xff] %v2573
        %2606 = vst [vmem:[#allocation2 + $0xc8] sm:$0xff] %v2574
        %2607 = vst [vmem:[#allocation2 + $0xd0] sm:$0xff] %v2575
        %2608 = vst [vmem:[#allocation2 + $0xd8] sm:$0xff] %v2576
        %2609 = vst [vmem:[#allocation2 + $0xe0] sm:$0xff] %v2577
        %2610 = vst [vmem:[#allocation2 + $0xe8] sm:$0xff] %v2578
        %2611 = vst [vmem:[#allocation2 + $0xf0] sm:$0xff] %v2579
        %2612 = vst [vmem:[#allocation2 + $0xf8] sm:$0xff] %v2580
        %v2613 = vld [vmem:[%s2016 + $0x2] sm:$0xff]
        %v2614 = vld [vmem:[%s2016 + $0xa] sm:$0xff]
        %v2615 = vld [vmem:[%s2016 + $0x1a] sm:$0xff]
        %v2616 = vld [vmem:[%s2016 + $0x22] sm:$0xff]
        %v2617 = vld [vmem:[%s2016 + $0x32] sm:$0xff]
        %v2618 = vld [vmem:[%s2016 + $0x3a] sm:$0xff]
        %v2619 = vld [vmem:[%s2016 + $0x4a] sm:$0xff]
        %v2620 = vld [vmem:[%s2016 + $0x52] sm:$0xff]
        %v2621 = vld [vmem:[%s2016 + $0x62] sm:$0xff]
        %v2622 = vld [vmem:[%s2016 + $0x6a] sm:$0xff]
        %v2623 = vld [vmem:[%s2016 + $0x7a] sm:$0xff]
        %v2624 = vld [vmem:[%s2016 + $0x82] sm:$0xff]
        %v2625 = vld [vmem:[%s2016 + $0x92] sm:$0xff]
        %v2626 = vld [vmem:[%s2016 + $0x9a] sm:$0xff]
        %v2627 = vld [vmem:[%s2016 + $0xaa] sm:$0xff]
        %v2628 = vld [vmem:[%s2016 + $0xb2] sm:$0xff]
        %v2629 = vld [vmem:[%s2016 + $0xc2] sm:$0xff]
        %v2630 = vld [vmem:[%s2016 + $0xca] sm:$0xff]
        %v2631 = vld [vmem:[%s2016 + $0xda] sm:$0xff]
        %v2632 = vld [vmem:[%s2016 + $0xe2] sm:$0xff]
        %v2633 = vld [vmem:[%s2016 + $0xf2] sm:$0xff]
        %v2634 = vld [vmem:[%s2016 + $0xfa] sm:$0xff]
        %v2635 = vld [vmem:[%s2016 + $0x10a] sm:$0xff]
        %v2636 = vld [vmem:[%s2016 + $0x112] sm:$0xff]
        %v2637 = vld [vmem:[%s2016 + $0x122] sm:$0xff]
        %v2638 = vld [vmem:[%s2016 + $0x12a] sm:$0xff]
        %v2639 = vld [vmem:[%s2016 + $0x13a] sm:$0xff]
        %v2640 = vld [vmem:[%s2016 + $0x142] sm:$0xff]
        %v2641 = vld [vmem:[%s2016 + $0x152] sm:$0xff]
        %v2642 = vld [vmem:[%s2016 + $0x15a] sm:$0xff]
        %v2643 = vld [vmem:[%s2016 + $0x16a] sm:$0xff]
        %v2644 = vld [vmem:[%s2016 + $0x172] sm:$0xff]
        %v2645 = vld [vmem:[#allocation2] sm:$0xff]
        %v2646 = vld [vmem:[#allocation2 + $0x8] sm:$0xff]
        %v2647 = vld [vmem:[#allocation2 + $0x10] sm:$0xff]
        %v2648 = vld [vmem:[#allocation2 + $0x18] sm:$0xff]
        %v2649 = vld [vmem:[#allocation2 + $0x20] sm:$0xff]
        %v2650 = vld [vmem:[#allocation2 + $0x28] sm:$0xff]
        %v2651 = vld [vmem:[#allocation2 + $0x30] sm:$0xff]
        %v2652 = vld [vmem:[#allocation2 + $0x38] sm:$0xff]
        %v2653 = vld [vmem:[#allocation2 + $0x40] sm:$0xff]
        %v2654 = vld [vmem:[#allocation2 + $0x48] sm:$0xff]
        %v2655 = vld [vmem:[#allocation2 + $0x50] sm:$0xff]
        %v2656 = vld [vmem:[#allocation2 + $0x58] sm:$0xff]
        %v2657 = vld [vmem:[#allocation2 + $0x60] sm:$0xff]
        %v2658 = vld [vmem:[#allocation2 + $0x68] sm:$0xff]
        %v2659 = vld [vmem:[#allocation2 + $0x70] sm:$0xff]
        %v2660 = vld [vmem:[#allocation2 + $0x78] sm:$0xff]
        %v2661 = vld [vmem:[#allocation2 + $0x80] sm:$0xff]
        %v2662 = vld [vmem:[#allocation2 + $0x88] sm:$0xff]
        %v2663 = vld [vmem:[#allocation2 + $0x90] sm:$0xff]
        %v2664 = vld [vmem:[#allocation2 + $0x98] sm:$0xff]
        %v2665 = vld [vmem:[#allocation2 + $0xa0] sm:$0xff]
        %v2666 = vld [vmem:[#allocation2 + $0xa8] sm:$0xff]
        %v2667 = vld [vmem:[#allocation2 + $0xb0] sm:$0xff]
        %v2668 = vld [vmem:[#allocation2 + $0xb8] sm:$0xff]
        %v2669 = vld [vmem:[#allocation2 + $0xc0] sm:$0xff]
        %v2670 = vld [vmem:[#allocation2 + $0xc8] sm:$0xff]
        %v2671 = vld [vmem:[#allocation2 + $0xd0] sm:$0xff]
        %v2672 = vld [vmem:[#allocation2 + $0xd8] sm:$0xff]
        %v2673 = vld [vmem:[#allocation2 + $0xe0] sm:$0xff]
        %v2674 = vld [vmem:[#allocation2 + $0xe8] sm:$0xff]
        %v2675 = vld [vmem:[#allocation2 + $0xf0] sm:$0xff]
        %v2676 = vld [vmem:[#allocation2 + $0xf8] sm:$0xff]
        %v2677 = vpack.c.bf16 %v2614, %v2613
        %v2678 = vpack.c.bf16 %v2616, %v2615
        %v2679 = vpack.c.bf16 %v2618, %v2617
        %v2680 = vpack.c.bf16 %v2620, %v2619
        %v2681 = vpack.c.bf16 %v2622, %v2621
        %v2682 = vpack.c.bf16 %v2624, %v2623
        %v2683 = vpack.c.bf16 %v2626, %v2625
        %v2684 = vpack.c.bf16 %v2628, %v2627
        %v2685 = vpack.c.bf16 %v2630, %v2629
        %v2686 = vpack.c.bf16 %v2632, %v2631
        %v2687 = vpack.c.bf16 %v2634, %v2633
        %v2688 = vpack.c.bf16 %v2636, %v2635
        %v2689 = vpack.c.bf16 %v2638, %v2637
        %v2690 = vpack.c.bf16 %v2640, %v2639
        %v2691 = vpack.c.bf16 %v2642, %v2641
        %v2692 = vpack.c.bf16 %v2644, %v2643
        %s2693 = scalar_lea.vmem %s1, 512
        %v2694 = vld [vmem:[%s2693] sm:$0xf]
        %v2695 = vld [vmem:[%s2693 + $0x4] sm:$0xf]
        %v2696 = vld [vmem:[%s2693 + $0x8] sm:$0xf]
        %v2697 = vld [vmem:[%s2693 + $0xc] sm:$0xf]
        %v2698 = vld [vmem:[%s2693 + $0x10] sm:$0xf]
        %v2699 = vld [vmem:[%s2693 + $0x14] sm:$0xf]
        %v2700 = vld [vmem:[%s2693 + $0x18] sm:$0xf]
        %v2701 = vld [vmem:[%s2693 + $0x1c] sm:$0xf]
        %v2702 = vld [vmem:[%s2693 + $0x20] sm:$0xf]
        %v2703 = vld [vmem:[%s2693 + $0x24] sm:$0xf]
        %v2704 = vld [vmem:[%s2693 + $0x28] sm:$0xf]
        %v2705 = vld [vmem:[%s2693 + $0x2c] sm:$0xf]
        %v2706 = vld [vmem:[%s2693 + $0x30] sm:$0xf]
        %v2707 = vld [vmem:[%s2693 + $0x34] sm:$0xf]
        %v2708 = vld [vmem:[%s2693 + $0x38] sm:$0xf]
        %v2709 = vld [vmem:[%s2693 + $0x3c] sm:$0xf]
        %v2726 = vunpack.c.l.b16 %v2694
        %v2727 = vunpack.c.l.b16 %v2695
        %v2728 = vunpack.c.l.b16 %v2696
        %v2729 = vunpack.c.l.b16 %v2697
        %v2730 = vunpack.c.l.b16 %v2698
        %v2731 = vunpack.c.l.b16 %v2699
        %v2732 = vunpack.c.l.b16 %v2700
        %v2733 = vunpack.c.l.b16 %v2701
        %v2734 = vunpack.c.l.b16 %v2702
        %v2735 = vunpack.c.l.b16 %v2703
        %v2736 = vunpack.c.l.b16 %v2704
        %v2737 = vunpack.c.l.b16 %v2705
        %v2738 = vunpack.c.l.b16 %v2706
        %v2739 = vunpack.c.l.b16 %v2707
        %v2740 = vunpack.c.l.b16 %v2708
        %v2741 = vunpack.c.l.b16 %v2709
        %v2742 = vpack.c.b16 %v2727, %v2726
        %v2743 = vpack.c.b16 %v2729, %v2728
        %v2744 = vpack.c.b16 %v2731, %v2730
        %v2745 = vpack.c.b16 %v2733, %v2732
        %v2746 = vpack.c.b16 %v2735, %v2734
        %v2747 = vpack.c.b16 %v2737, %v2736
        %v2748 = vpack.c.b16 %v2739, %v2738
        %v2749 = vpack.c.b16 %v2741, %v2740
        %2758 = vmatpush.bf16.msra.mxu0 %v2749
        %2759 = vmatpush.bf16.msra.mxu0 %v2748
        %2760 = vmatpush.bf16.msra.mxu0 %v2747
        %2761 = vmatpush.bf16.msra.mxu0 %v2746
        %2762 = vmatpush.bf16.msra.mxu0 %v2745
        %2763 = vmatpush.bf16.msra.mxu0 %v2744
        %2764 = vmatpush.bf16.msra.mxu0 %v2743
        %2765 = vmatpush.bf16.msra.mxu0 %v2742
        %2766 = vmatmul.bf16.gmra.mxu0 %v2677
        %v2767 = vpop.f32.mrf.mxu0
        %v2768 = vadd.f32 0.0, %v2767
        %v2769 = vpop.f32.mrf.mxu0
        %v2770 = vadd.f32 0.0, %v2769
        %2771 = vmatmul.bf16.gmra.mxu0 %v2678
        %v2772 = vpop.f32.mrf.mxu0
        %v2773 = vadd.f32 0.0, %v2772
        %v2774 = vpop.f32.mrf.mxu0
        %v2775 = vadd.f32 0.0, %v2774
        %2776 = vmatmul.bf16.gmra.mxu0 %v2679
        %v2777 = vpop.f32.mrf.mxu0
        %v2778 = vadd.f32 0.0, %v2777
        %v2779 = vpop.f32.mrf.mxu0
        %v2780 = vadd.f32 0.0, %v2779
        %2781 = vmatmul.bf16.gmra.mxu0 %v2680
        %v2782 = vpop.f32.mrf.mxu0
        %v2783 = vadd.f32 0.0, %v2782
        %v2784 = vpop.f32.mrf.mxu0
        %v2785 = vadd.f32 0.0, %v2784
        %2786 = vmatmul.bf16.gmra.mxu0 %v2681
        %v2787 = vpop.f32.mrf.mxu0
        %v2788 = vadd.f32 0.0, %v2787
        %v2789 = vpop.f32.mrf.mxu0
        %v2790 = vadd.f32 0.0, %v2789
        %2791 = vmatmul.bf16.gmra.mxu0 %v2682
        %v2792 = vpop.f32.mrf.mxu0
        %v2793 = vadd.f32 0.0, %v2792
        %v2794 = vpop.f32.mrf.mxu0
        %v2795 = vadd.f32 0.0, %v2794
        %2796 = vmatmul.bf16.gmra.mxu0 %v2683
        %v2797 = vpop.f32.mrf.mxu0
        %v2798 = vadd.f32 0.0, %v2797
        %v2799 = vpop.f32.mrf.mxu0
        %v2800 = vadd.f32 0.0, %v2799
        %2801 = vmatmul.bf16.gmra.mxu0 %v2684
        %v2802 = vpop.f32.mrf.mxu0
        %v2803 = vadd.f32 0.0, %v2802
        %v2804 = vpop.f32.mrf.mxu0
        %v2805 = vadd.f32 0.0, %v2804
        %2806 = vmatmul.bf16.gmra.mxu0 %v2685
        %v2807 = vpop.f32.mrf.mxu0
        %v2808 = vadd.f32 0.0, %v2807
        %v2809 = vpop.f32.mrf.mxu0
        %v2810 = vadd.f32 0.0, %v2809
        %2811 = vmatmul.bf16.gmra.mxu0 %v2686
        %v2812 = vpop.f32.mrf.mxu0
        %v2813 = vadd.f32 0.0, %v2812
        %v2814 = vpop.f32.mrf.mxu0
        %v2815 = vadd.f32 0.0, %v2814
        %2816 = vmatmul.bf16.gmra.mxu0 %v2687
        %v2817 = vpop.f32.mrf.mxu0
        %v2818 = vadd.f32 0.0, %v2817
        %v2819 = vpop.f32.mrf.mxu0
        %v2820 = vadd.f32 0.0, %v2819
        %2821 = vmatmul.bf16.gmra.mxu0 %v2688
        %v2822 = vpop.f32.mrf.mxu0
        %v2823 = vadd.f32 0.0, %v2822
        %v2824 = vpop.f32.mrf.mxu0
        %v2825 = vadd.f32 0.0, %v2824
        %2826 = vmatmul.bf16.gmra.mxu0 %v2689
        %v2827 = vpop.f32.mrf.mxu0
        %v2828 = vadd.f32 0.0, %v2827
        %v2829 = vpop.f32.mrf.mxu0
        %v2830 = vadd.f32 0.0, %v2829
        %2831 = vmatmul.bf16.gmra.mxu0 %v2690
        %v2832 = vpop.f32.mrf.mxu0
        %v2833 = vadd.f32 0.0, %v2832
        %v2834 = vpop.f32.mrf.mxu0
        %v2835 = vadd.f32 0.0, %v2834
        %2836 = vmatmul.bf16.gmra.mxu0 %v2691
        %v2837 = vpop.f32.mrf.mxu0
        %v2838 = vadd.f32 0.0, %v2837
        %v2839 = vpop.f32.mrf.mxu0
        %v2840 = vadd.f32 0.0, %v2839
        %2841 = vmatmul.bf16.gmra.mxu0 %v2692
        %v2842 = vpop.f32.mrf.mxu0
        %v2843 = vadd.f32 0.0, %v2842
        %v2844 = vpop.f32.mrf.mxu0
        %v2845 = vadd.f32 0.0, %v2844
        %2846 = vdwg.mxu0
        %v2847 = vadd.f32 %v2645, %v2768
        %v2848 = vadd.f32 %v2646, %v2770
        %v2849 = vadd.f32 %v2647, %v2773
        %v2850 = vadd.f32 %v2648, %v2775
        %v2851 = vadd.f32 %v2649, %v2778
        %v2852 = vadd.f32 %v2650, %v2780
        %v2853 = vadd.f32 %v2651, %v2783
        %v2854 = vadd.f32 %v2652, %v2785
        %v2855 = vadd.f32 %v2653, %v2788
        %v2856 = vadd.f32 %v2654, %v2790
        %v2857 = vadd.f32 %v2655, %v2793
        %v2858 = vadd.f32 %v2656, %v2795
        %v2859 = vadd.f32 %v2657, %v2798
        %v2860 = vadd.f32 %v2658, %v2800
        %v2861 = vadd.f32 %v2659, %v2803
        %v2862 = vadd.f32 %v2660, %v2805
        %v2863 = vadd.f32 %v2661, %v2808
        %v2864 = vadd.f32 %v2662, %v2810
        %v2865 = vadd.f32 %v2663, %v2813
        %v2866 = vadd.f32 %v2664, %v2815
        %v2867 = vadd.f32 %v2665, %v2818
        %v2868 = vadd.f32 %v2666, %v2820
        %v2869 = vadd.f32 %v2667, %v2823
        %v2870 = vadd.f32 %v2668, %v2825
        %v2871 = vadd.f32 %v2669, %v2828
        %v2872 = vadd.f32 %v2670, %v2830
        %v2873 = vadd.f32 %v2671, %v2833
        %v2874 = vadd.f32 %v2672, %v2835
        %v2875 = vadd.f32 %v2673, %v2838
        %v2876 = vadd.f32 %v2674, %v2840
        %v2877 = vadd.f32 %v2675, %v2843
        %v2878 = vadd.f32 %v2676, %v2845
        %2879 = vst [vmem:[#allocation2] sm:$0xff] %v2847
        %2880 = vst [vmem:[#allocation2 + $0x8] sm:$0xff] %v2848
        %2881 = vst [vmem:[#allocation2 + $0x10] sm:$0xff] %v2849
        %2882 = vst [vmem:[#allocation2 + $0x18] sm:$0xff] %v2850
        %2883 = vst [vmem:[#allocation2 + $0x20] sm:$0xff] %v2851
        %2884 = vst [vmem:[#allocation2 + $0x28] sm:$0xff] %v2852
        %2885 = vst [vmem:[#allocation2 + $0x30] sm:$0xff] %v2853
        %2886 = vst [vmem:[#allocation2 + $0x38] sm:$0xff] %v2854
        %2887 = vst [vmem:[#allocation2 + $0x40] sm:$0xff] %v2855
        %2888 = vst [vmem:[#allocation2 + $0x48] sm:$0xff] %v2856
        %2889 = vst [vmem:[#allocation2 + $0x50] sm:$0xff] %v2857
        %2890 = vst [vmem:[#allocation2 + $0x58] sm:$0xff] %v2858
        %2891 = vst [vmem:[#allocation2 + $0x60] sm:$0xff] %v2859
        %2892 = vst [vmem:[#allocation2 + $0x68] sm:$0xff] %v2860
        %2893 = vst [vmem:[#allocation2 + $0x70] sm:$0xff] %v2861
        %2894 = vst [vmem:[#allocation2 + $0x78] sm:$0xff] %v2862
        %2895 = vst [vmem:[#allocation2 + $0x80] sm:$0xff] %v2863
        %2896 = vst [vmem:[#allocation2 + $0x88] sm:$0xff] %v2864
        %2897 = vst [vmem:[#allocation2 + $0x90] sm:$0xff] %v2865
        %2898 = vst [vmem:[#allocation2 + $0x98] sm:$0xff] %v2866
        %2899 = vst [vmem:[#allocation2 + $0xa0] sm:$0xff] %v2867
        %2900 = vst [vmem:[#allocation2 + $0xa8] sm:$0xff] %v2868
        %2901 = vst [vmem:[#allocation2 + $0xb0] sm:$0xff] %v2869
        %2902 = vst [vmem:[#allocation2 + $0xb8] sm:$0xff] %v2870
        %2903 = vst [vmem:[#allocation2 + $0xc0] sm:$0xff] %v2871
        %2904 = vst [vmem:[#allocation2 + $0xc8] sm:$0xff] %v2872
        %2905 = vst [vmem:[#allocation2 + $0xd0] sm:$0xff] %v2873
        %2906 = vst [vmem:[#allocation2 + $0xd8] sm:$0xff] %v2874
        %2907 = vst [vmem:[#allocation2 + $0xe0] sm:$0xff] %v2875
        %2908 = vst [vmem:[#allocation2 + $0xe8] sm:$0xff] %v2876
        %2909 = vst [vmem:[#allocation2 + $0xf0] sm:$0xff] %v2877
        %2910 = vst [vmem:[#allocation2 + $0xf8] sm:$0xff] %v2878
        %v2911 = vld [vmem:[#allocation2] sm:$0xff]
        %v2912 = vld [vmem:[#allocation2 + $0x8] sm:$0xff]
        %v2913 = vld [vmem:[#allocation2 + $0x10] sm:$0xff]
        %v2914 = vld [vmem:[#allocation2 + $0x18] sm:$0xff]
        %v2915 = vld [vmem:[#allocation2 + $0x20] sm:$0xff]
        %v2916 = vld [vmem:[#allocation2 + $0x28] sm:$0xff]
        %v2917 = vld [vmem:[#allocation2 + $0x30] sm:$0xff]
        %v2918 = vld [vmem:[#allocation2 + $0x38] sm:$0xff]
        %v2919 = vld [vmem:[#allocation2 + $0x40] sm:$0xff]
        %v2920 = vld [vmem:[#allocation2 + $0x48] sm:$0xff]
        %v2921 = vld [vmem:[#allocation2 + $0x50] sm:$0xff]
        %v2922 = vld [vmem:[#allocation2 + $0x58] sm:$0xff]
        %v2923 = vld [vmem:[#allocation2 + $0x60] sm:$0xff]
        %v2924 = vld [vmem:[#allocation2 + $0x68] sm:$0xff]
        %v2925 = vld [vmem:[#allocation2 + $0x70] sm:$0xff]
        %v2926 = vld [vmem:[#allocation2 + $0x78] sm:$0xff]
        %v2927 = vld [vmem:[#allocation2 + $0x80] sm:$0xff]
        %v2928 = vld [vmem:[#allocation2 + $0x88] sm:$0xff]
        %v2929 = vld [vmem:[#allocation2 + $0x90] sm:$0xff]
        %v2930 = vld [vmem:[#allocation2 + $0x98] sm:$0xff]
        %v2931 = vld [vmem:[#allocation2 + $0xa0] sm:$0xff]
        %v2932 = vld [vmem:[#allocation2 + $0xa8] sm:$0xff]
        %v2933 = vld [vmem:[#allocation2 + $0xb0] sm:$0xff]
        %v2934 = vld [vmem:[#allocation2 + $0xb8] sm:$0xff]
        %v2935 = vld [vmem:[#allocation2 + $0xc0] sm:$0xff]
        %v2936 = vld [vmem:[#allocation2 + $0xc8] sm:$0xff]
        %v2937 = vld [vmem:[#allocation2 + $0xd0] sm:$0xff]
        %v2938 = vld [vmem:[#allocation2 + $0xd8] sm:$0xff]
        %v2939 = vld [vmem:[#allocation2 + $0xe0] sm:$0xff]
        %v2940 = vld [vmem:[#allocation2 + $0xe8] sm:$0xff]
        %v2941 = vld [vmem:[#allocation2 + $0xf0] sm:$0xff]
        %v2942 = vld [vmem:[#allocation2 + $0xf8] sm:$0xff]
        %v2943 = vld [vmem:[%s2] sm:$0x1]
        %v2945 = vperm.slane %v2943, 0
        %v2947 = vmul.f32 %v2911, %v2945
        %v2948 = vmul.f32 %v2912, %v2945
        %v2949 = vmul.f32 %v2913, %v2945
        %v2950 = vmul.f32 %v2914, %v2945
        %v2951 = vmul.f32 %v2915, %v2945
        %v2952 = vmul.f32 %v2916, %v2945
        %v2953 = vmul.f32 %v2917, %v2945
        %v2954 = vmul.f32 %v2918, %v2945
        %v2955 = vmul.f32 %v2919, %v2945
        %v2956 = vmul.f32 %v2920, %v2945
        %v2957 = vmul.f32 %v2921, %v2945
        %v2958 = vmul.f32 %v2922, %v2945
        %v2959 = vmul.f32 %v2923, %v2945
        %v2960 = vmul.f32 %v2924, %v2945
        %v2961 = vmul.f32 %v2925, %v2945
        %v2962 = vmul.f32 %v2926, %v2945
        %v2963 = vmul.f32 %v2927, %v2945
        %v2964 = vmul.f32 %v2928, %v2945
        %v2965 = vmul.f32 %v2929, %v2945
        %v2966 = vmul.f32 %v2930, %v2945
        %v2967 = vmul.f32 %v2931, %v2945
        %v2968 = vmul.f32 %v2932, %v2945
        %v2969 = vmul.f32 %v2933, %v2945
        %v2970 = vmul.f32 %v2934, %v2945
        %v2971 = vmul.f32 %v2935, %v2945
        %v2972 = vmul.f32 %v2936, %v2945
        %v2973 = vmul.f32 %v2937, %v2945
        %v2974 = vmul.f32 %v2938, %v2945
        %v2975 = vmul.f32 %v2939, %v2945
        %v2976 = vmul.f32 %v2940, %v2945
        %v2977 = vmul.f32 %v2941, %v2945
        %v2978 = vmul.f32 %v2942, %v2945
        %v2979 = vld [vmem:[%s3] sm:$0x1]
        %v2981 = vperm.slane %v2979, 0
        %v2983 = vadd.f32 %v2947, %v2981
        %v2984 = vadd.f32 %v2948, %v2981
        %v2985 = vadd.f32 %v2949, %v2981
        %v2986 = vadd.f32 %v2950, %v2981
        %v2987 = vadd.f32 %v2951, %v2981
        %v2988 = vadd.f32 %v2952, %v2981
        %v2989 = vadd.f32 %v2953, %v2981
        %v2990 = vadd.f32 %v2954, %v2981
        %v2991 = vadd.f32 %v2955, %v2981
        %v2992 = vadd.f32 %v2956, %v2981
        %v2993 = vadd.f32 %v2957, %v2981
        %v2994 = vadd.f32 %v2958, %v2981
        %v2995 = vadd.f32 %v2959, %v2981
        %v2996 = vadd.f32 %v2960, %v2981
        %v2997 = vadd.f32 %v2961, %v2981
        %v2998 = vadd.f32 %v2962, %v2981
        %v2999 = vadd.f32 %v2963, %v2981
        %v3000 = vadd.f32 %v2964, %v2981
        %v3001 = vadd.f32 %v2965, %v2981
        %v3002 = vadd.f32 %v2966, %v2981
        %v3003 = vadd.f32 %v2967, %v2981
        %v3004 = vadd.f32 %v2968, %v2981
        %v3005 = vadd.f32 %v2969, %v2981
        %v3006 = vadd.f32 %v2970, %v2981
        %v3007 = vadd.f32 %v2971, %v2981
        %v3008 = vadd.f32 %v2972, %v2981
        %v3009 = vadd.f32 %v2973, %v2981
        %v3010 = vadd.f32 %v2974, %v2981
        %v3011 = vadd.f32 %v2975, %v2981
        %v3012 = vadd.f32 %v2976, %v2981
        %v3013 = vadd.f32 %v2977, %v2981
        %v3014 = vadd.f32 %v2978, %v2981
        %vm3015 = vcmp.ge.f32.partialorder %v2983, 0.0
        %vm3016 = vcmp.ge.f32.partialorder %v2984, 0.0
        %vm3017 = vcmp.ge.f32.partialorder %v2985, 0.0
        %vm3018 = vcmp.ge.f32.partialorder %v2986, 0.0
        %vm3019 = vcmp.ge.f32.partialorder %v2987, 0.0
        %vm3020 = vcmp.ge.f32.partialorder %v2988, 0.0
        %vm3021 = vcmp.ge.f32.partialorder %v2989, 0.0
        %vm3022 = vcmp.ge.f32.partialorder %v2990, 0.0
        %vm3023 = vcmp.ge.f32.partialorder %v2991, 0.0
        %vm3024 = vcmp.ge.f32.partialorder %v2992, 0.0
        %vm3025 = vcmp.ge.f32.partialorder %v2993, 0.0
        %vm3026 = vcmp.ge.f32.partialorder %v2994, 0.0
        %vm3027 = vcmp.ge.f32.partialorder %v2995, 0.0
        %vm3028 = vcmp.ge.f32.partialorder %v2996, 0.0
        %vm3029 = vcmp.ge.f32.partialorder %v2997, 0.0
        %vm3030 = vcmp.ge.f32.partialorder %v2998, 0.0
        %vm3031 = vcmp.ge.f32.partialorder %v2999, 0.0
        %vm3032 = vcmp.ge.f32.partialorder %v3000, 0.0
        %vm3033 = vcmp.ge.f32.partialorder %v3001, 0.0
        %vm3034 = vcmp.ge.f32.partialorder %v3002, 0.0
        %vm3035 = vcmp.ge.f32.partialorder %v3003, 0.0
        %vm3036 = vcmp.ge.f32.partialorder %v3004, 0.0
        %vm3037 = vcmp.ge.f32.partialorder %v3005, 0.0
        %vm3038 = vcmp.ge.f32.partialorder %v3006, 0.0
        %vm3039 = vcmp.ge.f32.partialorder %v3007, 0.0
        %vm3040 = vcmp.ge.f32.partialorder %v3008, 0.0
        %vm3041 = vcmp.ge.f32.partialorder %v3009, 0.0
        %vm3042 = vcmp.ge.f32.partialorder %v3010, 0.0
        %vm3043 = vcmp.ge.f32.partialorder %v3011, 0.0
        %vm3044 = vcmp.ge.f32.partialorder %v3012, 0.0
        %vm3045 = vcmp.ge.f32.partialorder %v3013, 0.0
        %vm3046 = vcmp.ge.f32.partialorder %v3014, 0.0
        %v3047 = vmul.f32 %v2983, 0.2
        %v3048 = vmul.f32 %v2984, 0.2
        %v3049 = vmul.f32 %v2985, 0.2
        %v3050 = vmul.f32 %v2986, 0.2
        %v3051 = vmul.f32 %v2987, 0.2
        %v3052 = vmul.f32 %v2988, 0.2
        %v3053 = vmul.f32 %v2989, 0.2
        %v3054 = vmul.f32 %v2990, 0.2
        %v3055 = vmul.f32 %v2991, 0.2
        %v3056 = vmul.f32 %v2992, 0.2
        %v3057 = vmul.f32 %v2993, 0.2
        %v3058 = vmul.f32 %v2994, 0.2
        %v3059 = vmul.f32 %v2995, 0.2
        %v3060 = vmul.f32 %v2996, 0.2
        %v3061 = vmul.f32 %v2997, 0.2
        %v3062 = vmul.f32 %v2998, 0.2
        %v3063 = vmul.f32 %v2999, 0.2
        %v3064 = vmul.f32 %v3000, 0.2
        %v3065 = vmul.f32 %v3001, 0.2
        %v3066 = vmul.f32 %v3002, 0.2
        %v3067 = vmul.f32 %v3003, 0.2
        %v3068 = vmul.f32 %v3004, 0.2
        %v3069 = vmul.f32 %v3005, 0.2
        %v3070 = vmul.f32 %v3006, 0.2
        %v3071 = vmul.f32 %v3007, 0.2
        %v3072 = vmul.f32 %v3008, 0.2
        %v3073 = vmul.f32 %v3009, 0.2
        %v3074 = vmul.f32 %v3010, 0.2
        %v3075 = vmul.f32 %v3011, 0.2
        %v3076 = vmul.f32 %v3012, 0.2
        %v3077 = vmul.f32 %v3013, 0.2
        %v3078 = vmul.f32 %v3014, 0.2
        %v3079 = vsel %vm3015, %v2983, %v3047
        %v3080 = vsel %vm3016, %v2984, %v3048
        %v3081 = vsel %vm3017, %v2985, %v3049
        %v3082 = vsel %vm3018, %v2986, %v3050
        %v3083 = vsel %vm3019, %v2987, %v3051
        %v3084 = vsel %vm3020, %v2988, %v3052
        %v3085 = vsel %vm3021, %v2989, %v3053
        %v3086 = vsel %vm3022, %v2990, %v3054
        %v3087 = vsel %vm3023, %v2991, %v3055
        %v3088 = vsel %vm3024, %v2992, %v3056
        %v3089 = vsel %vm3025, %v2993, %v3057
        %v3090 = vsel %vm3026, %v2994, %v3058
        %v3091 = vsel %vm3027, %v2995, %v3059
        %v3092 = vsel %vm3028, %v2996, %v3060
        %v3093 = vsel %vm3029, %v2997, %v3061
        %v3094 = vsel %vm3030, %v2998, %v3062
        %v3095 = vsel %vm3031, %v2999, %v3063
        %v3096 = vsel %vm3032, %v3000, %v3064
        %v3097 = vsel %vm3033, %v3001, %v3065
        %v3098 = vsel %vm3034, %v3002, %v3066
        %v3099 = vsel %vm3035, %v3003, %v3067
        %v3100 = vsel %vm3036, %v3004, %v3068
        %v3101 = vsel %vm3037, %v3005, %v3069
        %v3102 = vsel %vm3038, %v3006, %v3070
        %v3103 = vsel %vm3039, %v3007, %v3071
        %v3104 = vsel %vm3040, %v3008, %v3072
        %v3105 = vsel %vm3041, %v3009, %v3073
        %v3106 = vsel %vm3042, %v3010, %v3074
        %v3107 = vsel %vm3043, %v3011, %v3075
        %v3108 = vsel %vm3044, %v3012, %v3076
        %v3109 = vsel %vm3045, %v3013, %v3077
        %v3110 = vsel %vm3046, %v3014, %v3078
        %v3111 = vld [vmem:[%s1121 + $0x1] sm:$0xff]
        %v3112 = vld [vmem:[%s1121 + $0x9] sm:$0xff]
        %v3113 = vld [vmem:[%s1121 + $0x19] sm:$0xff]
        %v3114 = vld [vmem:[%s1121 + $0x21] sm:$0xff]
        %v3115 = vld [vmem:[%s1121 + $0x31] sm:$0xff]
        %v3116 = vld [vmem:[%s1121 + $0x39] sm:$0xff]
        %v3117 = vld [vmem:[%s1121 + $0x49] sm:$0xff]
        %v3118 = vld [vmem:[%s1121 + $0x51] sm:$0xff]
        %v3119 = vld [vmem:[%s1121 + $0x61] sm:$0xff]
        %v3120 = vld [vmem:[%s1121 + $0x69] sm:$0xff]
        %v3121 = vld [vmem:[%s1121 + $0x79] sm:$0xff]
        %v3122 = vld [vmem:[%s1121 + $0x81] sm:$0xff]
        %v3123 = vld [vmem:[%s1121 + $0x91] sm:$0xff]
        %v3124 = vld [vmem:[%s1121 + $0x99] sm:$0xff]
        %v3125 = vld [vmem:[%s1121 + $0xa9] sm:$0xff]
        %v3126 = vld [vmem:[%s1121 + $0xb1] sm:$0xff]
        %v3127 = vld [vmem:[%s1121 + $0xc1] sm:$0xff]
        %v3128 = vld [vmem:[%s1121 + $0xc9] sm:$0xff]
        %v3129 = vld [vmem:[%s1121 + $0xd9] sm:$0xff]
        %v3130 = vld [vmem:[%s1121 + $0xe1] sm:$0xff]
        %v3131 = vld [vmem:[%s1121 + $0xf1] sm:$0xff]
        %v3132 = vld [vmem:[%s1121 + $0xf9] sm:$0xff]
        %v3133 = vld [vmem:[%s1121 + $0x109] sm:$0xff]
        %v3134 = vld [vmem:[%s1121 + $0x111] sm:$0xff]
        %v3135 = vld [vmem:[%s1121 + $0x121] sm:$0xff]
        %v3136 = vld [vmem:[%s1121 + $0x129] sm:$0xff]
        %v3137 = vld [vmem:[%s1121 + $0x139] sm:$0xff]
        %v3138 = vld [vmem:[%s1121 + $0x141] sm:$0xff]
        %v3139 = vld [vmem:[%s1121 + $0x151] sm:$0xff]
        %v3140 = vld [vmem:[%s1121 + $0x159] sm:$0xff]
        %v3141 = vld [vmem:[%s1121 + $0x169] sm:$0xff]
        %v3142 = vld [vmem:[%s1121 + $0x171] sm:$0xff]
        %v3143 = vadd.f32 %v3079, %v3111
        %v3144 = vadd.f32 %v3080, %v3112
        %v3145 = vadd.f32 %v3081, %v3113
        %v3146 = vadd.f32 %v3082, %v3114
        %v3147 = vadd.f32 %v3083, %v3115
        %v3148 = vadd.f32 %v3084, %v3116
        %v3149 = vadd.f32 %v3085, %v3117
        %v3150 = vadd.f32 %v3086, %v3118
        %v3151 = vadd.f32 %v3087, %v3119
        %v3152 = vadd.f32 %v3088, %v3120
        %v3153 = vadd.f32 %v3089, %v3121
        %v3154 = vadd.f32 %v3090, %v3122
        %v3155 = vadd.f32 %v3091, %v3123
        %v3156 = vadd.f32 %v3092, %v3124
        %v3157 = vadd.f32 %v3093, %v3125
        %v3158 = vadd.f32 %v3094, %v3126
        %v3159 = vadd.f32 %v3095, %v3127
        %v3160 = vadd.f32 %v3096, %v3128
        %v3161 = vadd.f32 %v3097, %v3129
        %v3162 = vadd.f32 %v3098, %v3130
        %v3163 = vadd.f32 %v3099, %v3131
        %v3164 = vadd.f32 %v3100, %v3132
        %v3165 = vadd.f32 %v3101, %v3133
        %v3166 = vadd.f32 %v3102, %v3134
        %v3167 = vadd.f32 %v3103, %v3135
        %v3168 = vadd.f32 %v3104, %v3136
        %v3169 = vadd.f32 %v3105, %v3137
        %v3170 = vadd.f32 %v3106, %v3138
        %v3171 = vadd.f32 %v3107, %v3139
        %v3172 = vadd.f32 %v3108, %v3140
        %v3173 = vadd.f32 %v3109, %v3141
        %v3174 = vadd.f32 %v3110, %v3142
        %3175 = vst [vmem:[%s190] sm:$0xff] %v3143
        %3176 = vst [vmem:[%s190 + $0x8] sm:$0xff] %v3144
        %3177 = vst [vmem:[%s190 + $0x10] sm:$0xff] %v3145
        %3178 = vst [vmem:[%s190 + $0x18] sm:$0xff] %v3146
        %3179 = vst [vmem:[%s190 + $0x20] sm:$0xff] %v3147
        %3180 = vst [vmem:[%s190 + $0x28] sm:$0xff] %v3148
        %3181 = vst [vmem:[%s190 + $0x30] sm:$0xff] %v3149
        %3182 = vst [vmem:[%s190 + $0x38] sm:$0xff] %v3150
        %3183 = vst [vmem:[%s190 + $0x40] sm:$0xff] %v3151
        %3184 = vst [vmem:[%s190 + $0x48] sm:$0xff] %v3152
        %3185 = vst [vmem:[%s190 + $0x50] sm:$0xff] %v3153
        %3186 = vst [vmem:[%s190 + $0x58] sm:$0xff] %v3154
        %3187 = vst [vmem:[%s190 + $0x60] sm:$0xff] %v3155
        %3188 = vst [vmem:[%s190 + $0x68] sm:$0xff] %v3156
        %3189 = vst [vmem:[%s190 + $0x70] sm:$0xff] %v3157
        %3190 = vst [vmem:[%s190 + $0x78] sm:$0xff] %v3158
        %3191 = vst [vmem:[%s190 + $0x80] sm:$0xff] %v3159
        %3192 = vst [vmem:[%s190 + $0x88] sm:$0xff] %v3160
        %3193 = vst [vmem:[%s190 + $0x90] sm:$0xff] %v3161
        %3194 = vst [vmem:[%s190 + $0x98] sm:$0xff] %v3162
        %3195 = vst [vmem:[%s190 + $0xa0] sm:$0xff] %v3163
        %3196 = vst [vmem:[%s190 + $0xa8] sm:$0xff] %v3164
        %3197 = vst [vmem:[%s190 + $0xb0] sm:$0xff] %v3165
        %3198 = vst [vmem:[%s190 + $0xb8] sm:$0xff] %v3166
        %3199 = vst [vmem:[%s190 + $0xc0] sm:$0xff] %v3167
        %3200 = vst [vmem:[%s190 + $0xc8] sm:$0xff] %v3168
        %3201 = vst [vmem:[%s190 + $0xd0] sm:$0xff] %v3169
        %3202 = vst [vmem:[%s190 + $0xd8] sm:$0xff] %v3170
        %3203 = vst [vmem:[%s190 + $0xe0] sm:$0xff] %v3171
        %3204 = vst [vmem:[%s190 + $0xe8] sm:$0xff] %v3172
        %3205 = vst [vmem:[%s190 + $0xf0] sm:$0xff] %v3173
        %3206 = vst [vmem:[%s190 + $0xf8] sm:$0xff] %v3174
        %s3207 = sand.u32 %s115, 1
        %s3208 = scalar_lea.sflag [#allocation4], %s3207
        %s3209 = sand.u32 %s115, 1
        %s3210 = smul.addr %s3209, 256
        %s3211 = scalar_lea.vmem [#allocation3], %s3210
        // Predicated region
        $region37: #{_lambda_.1} parent=35 // pred_check
          %p3212 = pneg %p125
        $region38: #{_lambda_.1} parent=35 // pred_check_branch
          %3214 = sbr.rel (%p3212) target = $region40
        $region39: #{_lambda_.1} parent=35 // pred_region
          %3216 = vsyncadd %s3208, 0
          %s3217 = smul.addr %s18, 32
          %s3218 = smul.addr %s3217, 8
          %s3219 = scalar_lea.hbm %s4, %s3218
          %s3220 = sshll.u32 %s3211, 4
          %s3221 = int_to_ptr.vmem [resolvable:$true] %s3220
          %s3222 = sshll.u32 %s3219, 4
          %s3223 = int_to_ptr.hbm [resolvable:$true] %s3222
          %3228 = dma.vmem_to_hbm [thread:$0]  %s3221, 4096, %s3223, %s3208, 128, 128, 8
        $region40: #{_lambda_.1} parent=35 // pred_fallthru
          _
      $region36: #{_lambda_.1} parent=5 // pred_fallthru
        _
      %p3229 = scmp.le.s32.totalorder 2, %s13
      // Predicated region
      $region41: #{_lambda_.1} parent=5 // pred_check
        %p3230 = pneg %p3229
      $region42: #{_lambda_.1} parent=5 // pred_check_branch
        %3232 = sbr.rel (%p3230) target = $region44
      $region43: #{_lambda_.1} parent=5 // pred_region
        %s3233 = ssub.s32 %s13, 2
        // Predicated region
        $region45: #{_lambda_.1} parent=43 // pred_check
          %p3234 = pneg %p131
        $region46: #{_lambda_.1} parent=43 // pred_check_branch
          %3236 = sbr.rel (%p3234) target = $region48
        $region47: #{_lambda_.1} parent=43 // pred_region
          %s3237 = sand.u32 %s116, 1
          %s3238 = scalar_lea.sflag [#allocation4], %s3237
          %s3239 = sand.u32 %s116, 1
          %s3240 = smul.addr %s3239, 256
          %s3241 = scalar_lea.vmem [#allocation3], %s3240
          %3243 = dma.done %s3238, 4096
        $region48: #{_lambda_.1} parent=43 // pred_fallthru
          _
      $region44: #{_lambda_.1} parent=5 // pred_fallthru
        _
    $region6: #{_lambda_.1} parent=1 // loop_footer
      %s17 = sadd.s32 1, %s13
    $region7: #{_lambda_.1} parent=1 // loop_footer_branch
      %12 = sbr.rel target = $region3
    $region8: #{_lambda_.1} parent=1 // loop_exit
      _
    %3244 = vsyncpa [#allocation4], 1
    %s3245 = scalar_lea.sflag [#allocation4], 1
    %3246 = vsyncpa %s3245, 1

</llo_original>
